<compile_context>
chip_gen: v6e
topology: v6e:2x2x1
jax: 0.10.0
libtpu: 0.0.40
codegen_flags: <defaults>
</compile_context>

<pallas_src>
import functools

import jax
import jax.numpy as jnp
from jax import lax
from jax.experimental import pallas as pl
from jax.experimental.pallas import tpu as pltpu

N_RESBLOCKS = 16
N_FEATS = 64
N_LAYERS = 2 * N_RESBLOCKS + 3     # head + 32 block convs + body_tail + tail = 35
OUT_LANES = 8                      # compact tail output (channel 0 + 7 zero lanes)


def _round_up(v, m):
    return (v + m - 1) // m * m


def _edsr_kernel(x_ref, w_ref, b_ref, mask_ref, o_ref,
                 cur_ref, r_ref, h_ref, *, R, Wp, n_layers):
    """Grid = (batch,).  The whole 35-layer chain runs in-kernel.

    x_ref    : (1, R, C)        f32   spatially + channel padded input image
    w_ref    : (L, 9C, C)       bf16  all layers' 3x3 taps, k-major / cin-minor
    b_ref    : (L, 1, C)        f32   all layers' biases
    mask_ref : (R, 1)           f32   1.0 on interior rows, 0.0 on the halo
    o_ref    : (1, R, OUT)      f32   tail activation (lane 0 = real output)
    cur_ref  : (R, C) f32   current layer input/output stream       (scratch)
    r_ref    : (R, C) f32   ResBlock residual stream                 (scratch)
    h_ref    : (R, C) f32   head output for the global skip          (scratch)
    """
    # Bring the (already zero-padded) input image into the persistent VMEM
    # activation buffer once; its zero halo rows make "same" padding implicit.
    cur_ref[...] = x_ref[0]

    # Flat-layout row shifts of the 9 taps of a 3x3 conv (ky-major, kx-minor).
    shifts = tuple((ky - 1) * Wp + (kx - 1) for ky in range(3) for kx in range(3))

    def layer(l, carry):
        xcur = cur_ref[...]                                       # (R, C) f32

        # im2col: 9 XLU row-rolls; wrapped rows only ever land on halo rows,
        # which the mask multiply forces back to zero every layer.
        patches = [xcur if s == 0 else pltpu.roll(xcur, (-s) % R, 0)
                   for s in shifts]
        # Hierarchical lane concat: 64+64 -> 128, then 128-aligned pieces.
        pairs = [jnp.concatenate(patches[i:i + 2], axis=1)
                 for i in range(0, 8, 2)]                          # 4 x (R, 128)
        col = jnp.concatenate(pairs + [patches[8]], axis=1)       # (R, 9C) f32
        col = col.astype(jnp.bfloat16)                             # one cast/layer

        # One K-fused MXU matmul per layer; f32 accumulation.
        acc = jnp.dot(col, w_ref[l], preferred_element_type=jnp.float32)
        # f32 epilogue: bias + interior mask (halo rows forced to exactly 0).
        z = (acc + b_ref[l]) * mask_ref[...]                       # (R, C) f32

        is_head = l == 0
        is_tail = l == n_layers - 1
        is_body_tail = l == n_layers - 2
        in_blocks = jnp.logical_and(l >= 1, l <= n_layers - 3)
        is_conv1 = jnp.logical_and(in_blocks, (l - 1) % 2 == 0)    # conv + ReLU
        is_conv2 = jnp.logical_and(in_blocks, (l - 1) % 2 == 1)    # conv + skip

        @pl.when(is_head)
        def _():                      # head: start residual + global-skip streams
            h_ref[...] = z
            r_ref[...] = z
            cur_ref[...] = z

        @pl.when(is_conv1)
        def _():                      # first conv of a ResBlock
            cur_ref[...] = jnp.maximum(z, 0.0)

        @pl.when(is_conv2)
        def _():                      # second conv of a ResBlock + skip add
            # Note: the duplicate store (r and cur get the same data) is kept
            # on purpose -- a conditional single-buffer read would cost a full
            # extra load + select per layer, which is more traffic overall.
            nr = r_ref[...] + z
            r_ref[...] = nr
            cur_ref[...] = nr

        @pl.when(is_body_tail)
        def _():                      # body tail conv + global skip
            cur_ref[...] = h_ref[...] + z

        @pl.when(is_tail)
        def _():                      # tail conv -> compact 8-lane output
            o_ref[0] = z[:, :o_ref.shape[2]]

        return carry

    lax.fori_loop(0, n_layers, layer, 0)


def edsr_forward(x_nchw, params):
    """EDSR forward.  x_nchw: (N, 3, H, W) f32 -> (N, 1, H, W) f32."""
    N, Cin, H, W = x_nchw.shape
    C = N_FEATS
    Hp = H + 2
    Wp = _round_up(W + 2, 8)          # width padded so row tiles stay aligned
    assert Wp >= W + 2                # required for the roll-wraparound safety
    R = Hp * Wp

    # ---- pack all 35 conv layers into (L, 9*C, C) bf16 / (L, 1, C) f32.
    # Flattening order of 576 is (ky, kx, cin) -> must match the kernel's
    # im2col lane order (tap-major, cin-minor).
    w_list, b_list = [], []
    wh, bh = params["head"]                                    # (3,3,3,64)
    w_list.append(jnp.pad(wh, ((0, 0), (0, 0), (0, C - wh.shape[2]), (0, 0))))
    b_list.append(bh)
    for (w1, b1, w2, b2) in params["body"]:
        w_list += [w1, w2]
        b_list += [b1, b2]
    wbt, bbt = params["body_tail"]
    w_list.append(wbt)
    b_list.append(bbt)
    wt, bt = params["tail"]                                    # (3,3,64,1)
    w_list.append(jnp.pad(wt, ((0, 0), (0, 0), (0, 0), (0, C - wt.shape[3]))))
    b_list.append(jnp.pad(bt, ((0, C - bt.shape[0]),)))
    assert len(w_list) == N_LAYERS
    w_stack = jnp.stack(w_list).reshape(N_LAYERS, 9 * C, C).astype(jnp.bfloat16)
    b_stack = jnp.stack(b_list).astype(jnp.float32).reshape(N_LAYERS, 1, C)

    # ---- input: NCHW -> zero-padded, channel-padded, flattened (N, R, C) f32
    x = jnp.transpose(x_nchw, (0, 2, 3, 1))
    x = jnp.pad(x, ((0, 0), (1, Hp - H - 1), (1, Wp - W - 1), (0, C - Cin)))
    x = x.reshape(N, R, C).astype(jnp.float32)

    # interior mask (1 on real pixels, 0 on the halo / width pad)
    mask = (jnp.zeros((Hp, Wp), jnp.float32)
            .at[1:H + 1, 1:W + 1].set(1.0).reshape(R, 1))

    # ---- VMEM budget: computed from real buffers, capped below capacity.
    w_bytes = N_LAYERS * 9 * C * C * 2
    b_bytes = N_LAYERS * 1 * C * 4
    x_blk = R * C * 4
    o_blk = R * OUT_LANES * 4
    scratch_bytes = 3 * R * C * 4
    im2col_tmp = R * 9 * C * 4                    # f32 col + bf16 copy + spills
    budget = (2 * (w_bytes + b_bytes + x_blk + o_blk)
              + scratch_bytes + 3 * im2col_tmp + (4 << 20))
    try:
        cap = int(getattr(pltpu.get_tpu_info(), "vmem_capacity_bytes", 64 << 20))
    except Exception:
        cap = 64 << 20
    vmem_limit = int(min(max(budget, 16 << 20), (cap * 3) // 4))

    kernel = functools.partial(_edsr_kernel, R=R, Wp=Wp, n_layers=N_LAYERS)
    out_flat = pl.pallas_call(
        kernel,
        out_shape=jax.ShapeDtypeStruct((N, R, OUT_LANES), jnp.float32),
        grid=(N,),
        in_specs=[
            pl.BlockSpec((1, R, C), lambda n: (n, 0, 0)),                # image
            pl.BlockSpec((N_LAYERS, 9 * C, C), lambda n: (0, 0, 0)),     # weights (VMEM resident)
            pl.BlockSpec((N_LAYERS, 1, C), lambda n: (0, 0, 0)),         # biases  (VMEM resident)
            pl.BlockSpec((R, 1), lambda n: (0, 0)),                      # halo mask
        ],
        out_specs=pl.BlockSpec((1, R, OUT_LANES), lambda n: (n, 0, 0)),
        scratch_shapes=[pltpu.VMEM((R, C), jnp.float32)] * 3,            # cur, r, h
        compiler_params=pltpu.CompilerParams(
            dimension_semantics=("parallel",),
            vmem_limit_bytes=vmem_limit),
    )(x, w_stack, b_stack, mask)

    # lane 0 of the interior pixels is the tail conv output
    out = out_flat.reshape(N, Hp, Wp, OUT_LANES)[:, 1:H + 1, 1:W + 1, 0]
    return out[:, None, :, :]                                            # (N,1,H,W)


def init_params(key):
    """Deterministic synthetic weights (HWIO), matching the module's shapes."""
    def conv_init(k, cin, cout):
        kw, kb = jax.random.split(k)
        w = jax.random.normal(kw, (3, 3, cin, cout), jnp.float32) \
            * (0.05 / (cin ** 0.5))
        b = jax.random.normal(kb, (cout,), jnp.float32) * 0.01
        return w, b

    keys = jax.random.split(key, 1 + 2 * N_RESBLOCKS + 1 + 1)
    ki = iter(range(len(keys)))
    params = {}
    params["head"] = conv_init(keys[next(ki)], 3, N_FEATS)
    body = []
    for _ in range(N_RESBLOCKS):
        w1, b1 = conv_init(keys[next(ki)], N_FEATS, N_FEATS)
        w2, b2 = conv_init(keys[next(ki)], N_FEATS, N_FEATS)
        body.append((w1, b1, w2, b2))
    params["body"] = body
    params["body_tail"] = conv_init(keys[next(ki)], N_FEATS, N_FEATS)
    params["tail"] = conv_init(keys[next(ki)], N_FEATS, 1)
    return params


def edsr_reference(x_nchw, params):
    """Pure-JAX reference (f32) of the same EDSR forward, for validation."""
    def conv(t, w, b):
        return lax.conv_general_dilated(
            t, w, (1, 1), ((1, 1), (1, 1)),
            dimension_numbers=("NHWC", "HWIO", "NHWC"),
            precision=lax.Precision.HIGHEST) + b

    x = jnp.transpose(x_nchw, (0, 2, 3, 1))
    h = conv(x, *params["head"])
    r = h
    for (w1, b1, w2, b2) in params["body"]:
        t = jax.nn.relu(conv(r, w1, b1))
        t = conv(t, w2, b2)
        r = r + t
    r = conv(r, *params["body_tail"]) + h
    out = conv(r, *params["tail"])
    return jnp.transpose(out, (0, 3, 1, 2))


if __name__ == "__main__":
    key = jax.random.PRNGKey(0)
    kx, kp = jax.random.split(key)

    # Small shapes consistent with the module: 3-channel NCHW input.
    x = jax.random.normal(kx, (2, 3, 16, 16), jnp.float32)
    params = init_params(kp)

    fwd = jax.jit(edsr_forward)
    y = fwd(x, params)
    jax.block_until_ready(y)

    assert y.shape == (2, 1, 16, 16), y.shape
    assert y.dtype == jnp.float32
    assert bool(jnp.all(jnp.isfinite(y)))

    # Validate against a pure-JAX f32 reference (bf16 matmul inputs in the
    # kernel -> loose-but-meaningful tolerance).
    y_ref = edsr_reference(x, params)
    err = float(jnp.max(jnp.abs(y - y_ref)))
    assert err < 2e-2, err

    print("KERNEL_OK")
</pallas_src>

<mosaic_0001>
module attributes {stable_mosaic.version = 11 : i64} {
  func.func @_edsr_kernel(%arg0: i32, %arg1: memref<1x432x64xf32, #tpu.memory_space<vmem>>, %arg2: memref<35x576x64xbf16, #tpu.memory_space<vmem>>, %arg3: memref<35x1x64xf32, #tpu.memory_space<vmem>>, %arg4: memref<432x1xf32, #tpu.memory_space<vmem>>, %arg5: memref<1x432x8xf32, #tpu.memory_space<vmem>>, %arg6: memref<432x64xf32, #tpu.memory_space<vmem>>, %arg7: memref<432x64xf32, #tpu.memory_space<vmem>>, %arg8: memref<432x64xf32, #tpu.memory_space<vmem>>) attributes {dimension_semantics = [#tpu.dimension_semantics<parallel>], iteration_bounds = array<i64: 2>, scalar_prefetch = 0 : i64, scratch_operands = 3 : i64, tpu.core_type = #tpu.core_type<tc>, window_params = [{transform_indices = @transform_0, window_bounds = array<i64: 1, 432, 64>}, {pipeline_mode = #tpu.pipeline_mode<synchronous>, transform_indices = @transform_1, window_bounds = array<i64: 35, 576, 64>}, {pipeline_mode = #tpu.pipeline_mode<synchronous>, transform_indices = @transform_2, window_bounds = array<i64: 35, 1, 64>}, {pipeline_mode = #tpu.pipeline_mode<synchronous>, transform_indices = @transform_3, window_bounds = array<i64: 432, 1>}, {transform_indices = @transform_4, window_bounds = array<i64: 1, 432, 8>}]} {
    %c0 = arith.constant 0 : index
    %c0_0 = arith.constant 0 : index
    %c0_1 = arith.constant 0 : index
    %0 = vector.load %arg1[%c0, %c0_0, %c0_1] : memref<1x432x64xf32, #tpu.memory_space<vmem>>, vector<1x432x64xf32>
    %1 = vector.shape_cast %0 : vector<1x432x64xf32> to vector<432x64xf32>
    %c0_2 = arith.constant 0 : index
    %c0_3 = arith.constant 0 : index
    %2 = vector.load %arg6[%c0_2, %c0_3] : memref<432x64xf32, #tpu.memory_space<vmem>>, vector<432x64xf32>
    tpu.vector_store %arg6[%c0_2, %c0_3], %1 {strides = array<i32>} : memref<432x64xf32, #tpu.memory_space<vmem>>, vector<432x64xf32>,
    %c0_i32 = arith.constant 0 : i32
    %c35_i32 = arith.constant 35 : i32
    %3 = arith.addi %c0_i32, %c35_i32 : i32
    %c1_i32 = arith.constant 1 : i32
    scf.for %arg9 = %c0_i32 to %3 step %c1_i32  : i32 {
      %c0_5 = arith.constant 0 : index
      %c0_6 = arith.constant 0 : index
      %4 = vector.load %arg6[%c0_5, %c0_6] : memref<432x64xf32, #tpu.memory_space<vmem>>, vector<432x64xf32>
      %c25_i32 = arith.constant 25 : i32
      %5 = tpu.dynamic_rotate %4 by %c25_i32 dim 0 : vector<432x64xf32>, i32 -> vector<432x64xf32>
      %c24_i32 = arith.constant 24 : i32
      %6 = tpu.dynamic_rotate %4 by %c24_i32 dim 0 : vector<432x64xf32>, i32 -> vector<432x64xf32>
      %c23_i32 = arith.constant 23 : i32
      %7 = tpu.dynamic_rotate %4 by %c23_i32 dim 0 : vector<432x64xf32>, i32 -> vector<432x64xf32>
      %c1_i32_7 = arith.constant 1 : i32
      %8 = tpu.dynamic_rotate %4 by %c1_i32_7 dim 0 : vector<432x64xf32>, i32 -> vector<432x64xf32>
      %c431_i32 = arith.constant 431 : i32
      %9 = tpu.dynamic_rotate %4 by %c431_i32 dim 0 : vector<432x64xf32>, i32 -> vector<432x64xf32>
      %c409_i32 = arith.constant 409 : i32
      %10 = tpu.dynamic_rotate %4 by %c409_i32 dim 0 : vector<432x64xf32>, i32 -> vector<432x64xf32>
      %c408_i32 = arith.constant 408 : i32
      %11 = tpu.dynamic_rotate %4 by %c408_i32 dim 0 : vector<432x64xf32>, i32 -> vector<432x64xf32>
      %c407_i32 = arith.constant 407 : i32
      %12 = tpu.dynamic_rotate %4 by %c407_i32 dim 0 : vector<432x64xf32>, i32 -> vector<432x64xf32>
      %13 = tpu.concatenate %5, %6 in 1 : vector<432x64xf32>, vector<432x64xf32> -> vector<432x128xf32>
      %14 = tpu.concatenate %7, %8 in 1 : vector<432x64xf32>, vector<432x64xf32> -> vector<432x128xf32>
      %15 = tpu.concatenate %4, %9 in 1 : vector<432x64xf32>, vector<432x64xf32> -> vector<432x128xf32>
      %16 = tpu.concatenate %10, %11 in 1 : vector<432x64xf32>, vector<432x64xf32> -> vector<432x128xf32>
      %17 = tpu.concatenate %13, %14, %15, %16, %12 in 1 : vector<432x128xf32>, vector<432x128xf32>, vector<432x128xf32>, vector<432x128xf32>, vector<432x64xf32> -> vector<432x576xf32>
      %18 = arith.truncf %17 : vector<432x576xf32> to vector<432x576xbf16>
      %19 = arith.index_cast %arg9 : i32 to index
      %c0_8 = arith.constant 0 : index
      %c0_9 = arith.constant 0 : index
      %20 = vector.load %arg2[%19, %c0_8, %c0_9] : memref<35x576x64xbf16, #tpu.memory_space<vmem>>, vector<1x576x64xbf16>
      %21 = vector.shape_cast %20 : vector<1x576x64xbf16> to vector<576x64xbf16>
      %cst = arith.constant dense<0.000000e+00> : vector<432x64xf32>
      %22 = tpu.matmul %18, %21, %cst {dimension_numbers = #tpu.dot_dimension_numbers<[1], [0], [0], [1], [0, 0, 1, 1], [], []>} : vector<432x576xbf16>, vector<576x64xbf16>, vector<432x64xf32> -> vector<432x64xf32>
      %23 = arith.index_cast %arg9 : i32 to index
      %c0_10 = arith.constant 0 : index
      %c0_11 = arith.constant 0 : index
      %24 = vector.load %arg3[%23, %c0_10, %c0_11] : memref<35x1x64xf32, #tpu.memory_space<vmem>>, vector<1x1x64xf32>
      %25 = vector.shape_cast %24 : vector<1x1x64xf32> to vector<1x64xf32>
      %26 = vector.broadcast %25 : vector<1x64xf32> to vector<432x64xf32>
      %27 = arith.addf %22, %26 : vector<432x64xf32>
      %c0_12 = arith.constant 0 : index
      %c0_13 = arith.constant 0 : index
      %28 = vector.load %arg4[%c0_12, %c0_13] : memref<432x1xf32, #tpu.memory_space<vmem>>, vector<432x1xf32>
      %29 = vector.broadcast %28 : vector<432x1xf32> to vector<432x64xf32>
      %30 = arith.mulf %27, %29 : vector<432x64xf32>
      %c0_i32_14 = arith.constant 0 : i32
      %31 = arith.cmpi eq, %arg9, %c0_i32_14 : i32
      %c34_i32 = arith.constant 34 : i32
      %32 = arith.cmpi eq, %arg9, %c34_i32 : i32
      %c33_i32 = arith.constant 33 : i32
      %33 = arith.cmpi eq, %arg9, %c33_i32 : i32
      %c1_i32_15 = arith.constant 1 : i32
      %34 = arith.cmpi sge, %arg9, %c1_i32_15 : i32
      %c32_i32 = arith.constant 32 : i32
      %35 = arith.cmpi sle, %arg9, %c32_i32 : i32
      %36 = arith.andi %34, %35 : i1
      %c1_i32_16 = arith.constant 1 : i32
      %37 = arith.subi %arg9, %c1_i32_16 : i32
      %c2_i32 = arith.constant 2 : i32
      %c0_i32_17 = arith.constant 0 : i32
      %38 = arith.cmpi eq, %c2_i32, %c0_i32_17 : i32
      %c1_i32_18 = arith.constant 1 : i32
      %39 = arith.select %38, %c1_i32_18, %c2_i32 : i32
      %40 = arith.remsi %37, %39 : i32
      %c0_i32_19 = arith.constant 0 : i32
      %41 = arith.cmpi ne, %40, %c0_i32_19 : i32
      %c0_i32_20 = arith.constant 0 : i32
      %42 = arith.cmpi slt, %40, %c0_i32_20 : i32
      %c0_i32_21 = arith.constant 0 : i32
      %43 = arith.cmpi slt, %39, %c0_i32_21 : i32
      %44 = arith.xori %42, %43 : i1
      %45 = arith.andi %44, %41 : i1
      %46 = arith.addi %40, %39 : i32
      %47 = arith.select %45, %46, %40 : i32
      %c0_i32_22 = arith.constant 0 : i32
      %48 = arith.cmpi eq, %47, %c0_i32_22 : i32
      %49 = arith.andi %36, %48 : i1
      %c1_i32_23 = arith.constant 1 : i32
      %50 = arith.subi %arg9, %c1_i32_23 : i32
      %c2_i32_24 = arith.constant 2 : i32
      %c0_i32_25 = arith.constant 0 : i32
      %51 = arith.cmpi eq, %c2_i32_24, %c0_i32_25 : i32
      %c1_i32_26 = arith.constant 1 : i32
      %52 = arith.select %51, %c1_i32_26, %c2_i32_24 : i32
      %53 = arith.remsi %50, %52 : i32
      %c0_i32_27 = arith.constant 0 : i32
      %54 = arith.cmpi ne, %53, %c0_i32_27 : i32
      %c0_i32_28 = arith.constant 0 : i32
      %55 = arith.cmpi slt, %53, %c0_i32_28 : i32
      %c0_i32_29 = arith.constant 0 : i32
      %56 = arith.cmpi slt, %52, %c0_i32_29 : i32
      %57 = arith.xori %55, %56 : i1
      %58 = arith.andi %57, %54 : i1
      %59 = arith.addi %53, %52 : i32
      %60 = arith.select %58, %59, %53 : i32
      %c1_i32_30 = arith.constant 1 : i32
      %61 = arith.cmpi eq, %60, %c1_i32_30 : i32
      %62 = arith.andi %36, %61 : i1
      %63 = arith.extui %31 : i1 to i32
      %c0_i32_31 = arith.constant 0 : i32
      %64 = arith.cmpi ne, %63, %c0_i32_31 : i32
      scf.if %64 {
        %c0_36 = arith.constant 0 : index
        %c0_37 = arith.constant 0 : index
        %73 = vector.load %arg8[%c0_36, %c0_37] : memref<432x64xf32, #tpu.memory_space<vmem>>, vector<432x64xf32>
        tpu.vector_store %arg8[%c0_36, %c0_37], %30 {strides = array<i32>} : memref<432x64xf32, #tpu.memory_space<vmem>>, vector<432x64xf32>,
        %c0_38 = arith.constant 0 : index
        %c0_39 = arith.constant 0 : index
        %74 = vector.load %arg7[%c0_38, %c0_39] : memref<432x64xf32, #tpu.memory_space<vmem>>, vector<432x64xf32>
        tpu.vector_store %arg7[%c0_38, %c0_39], %30 {strides = array<i32>} : memref<432x64xf32, #tpu.memory_space<vmem>>, vector<432x64xf32>,
        %c0_40 = arith.constant 0 : index
        %c0_41 = arith.constant 0 : index
        %75 = vector.load %arg6[%c0_40, %c0_41] : memref<432x64xf32, #tpu.memory_space<vmem>>, vector<432x64xf32>
        tpu.vector_store %arg6[%c0_40, %c0_41], %30 {strides = array<i32>} : memref<432x64xf32, #tpu.memory_space<vmem>>, vector<432x64xf32>,
      } else {
      }
      %65 = arith.extui %49 : i1 to i32
      %c0_i32_32 = arith.constant 0 : i32
      %66 = arith.cmpi ne, %65, %c0_i32_32 : i32
      scf.if %66 {
        %cst_36 = arith.constant 0.000000e+00 : f32
        %73 = vector.broadcast %cst_36 : f32 to vector<432x64xf32>
        %74 = arith.maximumf %30, %73 : vector<432x64xf32>
        %c0_37 = arith.constant 0 : index
        %c0_38 = arith.constant 0 : index
        %75 = vector.load %arg6[%c0_37, %c0_38] : memref<432x64xf32, #tpu.memory_space<vmem>>, vector<432x64xf32>
        tpu.vector_store %arg6[%c0_37, %c0_38], %74 {strides = array<i32>} : memref<432x64xf32, #tpu.memory_space<vmem>>, vector<432x64xf32>,
      } else {
      }
      %67 = arith.extui %62 : i1 to i32
      %c0_i32_33 = arith.constant 0 : i32
      %68 = arith.cmpi ne, %67, %c0_i32_33 : i32
      scf.if %68 {
        %c0_36 = arith.constant 0 : index
        %c0_37 = arith.constant 0 : index
        %73 = vector.load %arg7[%c0_36, %c0_37] : memref<432x64xf32, #tpu.memory_space<vmem>>, vector<432x64xf32>
        %74 = arith.addf %73, %30 : vector<432x64xf32>
        %c0_38 = arith.constant 0 : index
        %c0_39 = arith.constant 0 : index
        %75 = vector.load %arg7[%c0_38, %c0_39] : memref<432x64xf32, #tpu.memory_space<vmem>>, vector<432x64xf32>
        tpu.vector_store %arg7[%c0_38, %c0_39], %74 {strides = array<i32>} : memref<432x64xf32, #tpu.memory_space<vmem>>, vector<432x64xf32>,
        %c0_40 = arith.constant 0 : index
        %c0_41 = arith.constant 0 : index
        %76 = vector.load %arg6[%c0_40, %c0_41] : memref<432x64xf32, #tpu.memory_space<vmem>>, vector<432x64xf32>
        tpu.vector_store %arg6[%c0_40, %c0_41], %74 {strides = array<i32>} : memref<432x64xf32, #tpu.memory_space<vmem>>, vector<432x64xf32>,
      } else {
      }
      %69 = arith.extui %33 : i1 to i32
      %c0_i32_34 = arith.constant 0 : i32
      %70 = arith.cmpi ne, %69, %c0_i32_34 : i32
      scf.if %70 {
        %c0_36 = arith.constant 0 : index
        %c0_37 = arith.constant 0 : index
        %73 = vector.load %arg8[%c0_36, %c0_37] : memref<432x64xf32, #tpu.memory_space<vmem>>, vector<432x64xf32>
        %74 = arith.addf %73, %30 : vector<432x64xf32>
        %c0_38 = arith.constant 0 : index
        %c0_39 = arith.constant 0 : index
        %75 = vector.load %arg6[%c0_38, %c0_39] : memref<432x64xf32, #tpu.memory_space<vmem>>, vector<432x64xf32>
        tpu.vector_store %arg6[%c0_38, %c0_39], %74 {strides = array<i32>} : memref<432x64xf32, #tpu.memory_space<vmem>>, vector<432x64xf32>,
      } else {
      }
      %71 = arith.extui %32 : i1 to i32
      %c0_i32_35 = arith.constant 0 : i32
      %72 = arith.cmpi ne, %71, %c0_i32_35 : i32
      scf.if %72 {
        %73 = vector.extract_strided_slice %30 {offsets = [0, 0], sizes = [432, 8], strides = [1, 1]} : vector<432x64xf32> to vector<432x8xf32>
        %c0_36 = arith.constant 0 : index
        %c0_37 = arith.constant 0 : index
        %c0_38 = arith.constant 0 : index
        %74 = vector.load %arg5[%c0_36, %c0_37, %c0_38] : memref<1x432x8xf32, #tpu.memory_space<vmem>>, vector<1x432x8xf32>
        %75 = vector.shape_cast %74 : vector<1x432x8xf32> to vector<432x8xf32>
        %76 = vector.shape_cast %73 : vector<432x8xf32> to vector<1x432x8xf32>
        tpu.vector_store %arg5[%c0_36, %c0_37, %c0_38], %76 {strides = array<i32>} : memref<1x432x8xf32, #tpu.memory_space<vmem>>, vector<1x432x8xf32>,
      } else {
      }
    }
    %c35_i32_4 = arith.constant 35 : i32
    return
  }
  func.func @transform_0(%arg0: i32) -> (i32, i32, i32) {
    %c0_i32 = arith.constant 0 : i32
    %c0_i32_0 = arith.constant 0 : i32
    %c0_i32_1 = arith.constant 0 : i32
    return %arg0, %c0_i32, %c0_i32_0 : i32, i32, i32
  }
  func.func @transform_1(%arg0: i32) -> (i32, i32, i32) {
    %c0_i32 = arith.constant 0 : i32
    %c0_i32_0 = arith.constant 0 : i32
    %c0_i32_1 = arith.constant 0 : i32
    %c0_i32_2 = arith.constant 0 : i32
    return %c0_i32, %c0_i32_0, %c0_i32_1 : i32, i32, i32
  }
  func.func @transform_2(%arg0: i32) -> (i32, i32, i32) {
    %c0_i32 = arith.constant 0 : i32
    %c0_i32_0 = arith.constant 0 : i32
    %c0_i32_1 = arith.constant 0 : i32
    %c0_i32_2 = arith.constant 0 : i32
    return %c0_i32, %c0_i32_0, %c0_i32_1 : i32, i32, i32
  }
  func.func @transform_3(%arg0: i32) -> (i32, i32) {
    %c0_i32 = arith.constant 0 : i32
    %c0_i32_0 = arith.constant 0 : i32
    %c0_i32_1 = arith.constant 0 : i32
    return %c0_i32, %c0_i32_0 : i32, i32
  }
  func.func @transform_4(%arg0: i32) -> (i32, i32, i32) {
    %c0_i32 = arith.constant 0 : i32
    %c0_i32_0 = arith.constant 0 : i32
    %c0_i32_1 = arith.constant 0 : i32
    return %arg0, %c0_i32, %c0_i32_0 : i32, i32, i32
  }
}

</mosaic_0001>

<llo_original>
// kernel: edsr_forward.1
$region0: #{edsr_forward.1}
  #allocation0 [shape = 'u32[]', space=smem, size = 0x4, offset = 0x4, fixed_abs, tag = 'smem constant byte address 0x4 - core index']
  #allocation1 [shape = 'u32[144,128]{1,0:T(1,128)}', space=vmem, size = 0x12000, scoped, tag = 'internal scratch']
  #allocation2 [shape = 'f32[432,64]{1,0:T(8,128)}', space=vmem, size = 0x36000, scoped, tag = 'scratch operand']
  #allocation3 [shape = 'f32[432,64]{1,0:T(8,128)}', space=vmem, size = 0x36000, scoped, tag = 'scratch operand']
  #allocation4 [shape = 'f32[432,64]{1,0:T(8,128)}', space=vmem, size = 0x36000, scoped, tag = 'scratch operand']
  %s0 = inlined_call_operand.vmem [shape: f32[2,432,64], index: 0, kind: input, shape index: {}]
  %s1 = inlined_call_operand.vmem [shape: bf16[35,576,64], index: 1, kind: input, shape index: {}]
  %s2 = inlined_call_operand.vmem [shape: f32[35,1,64], index: 2, kind: input, shape index: {}]
  %s3 = inlined_call_operand.vmem [shape: f32[432,1], index: 3, kind: input, shape index: {}]
  %s4 = inlined_call_operand.vmem [shape: f32[2,432,8], index: 4, kind: output, shape index: {}]
  %s5 = sld [smem:[#allocation0]]
  $region76: #{edsr_forward.1} parent=0
    _
  %s7 = ssub.s32 1, %s5
  %s8 = scalar_select 0, %s7, %s5
  loop: start=0, step=1, limit=4
  $region2: #{edsr_forward.1} parent=0 // loop_pre_header
    _
  $region3: #{edsr_forward.1} parent=0 // loop_header
    %s10 = sphi 0, %s14
    %p11 = scmp.ge.s32.totalorder %s10, 4
    %s20 = sphi 0, %s22
    %s23 = sphi 0, %s20
    %s24 = sphi 0, %s23
    %s40 = sphi 0, %s24
    %s44 = sphi 0, %s44
    %s46 = sphi 0, %s44
    %s47 = sphi 0, %s46
    %s61 = sphi 0, %s47
    %s65 = sphi 0, %s65
    %s67 = sphi 0, %s65
    %s68 = sphi 0, %s67
    %s82 = sphi 0, %s68
    %s86 = sphi 0, %s86
    %s88 = sphi 0, %s86
    %s89 = sphi 0, %s88
    %s103 = sphi 0, %s89
    %s109 = sphi 0, %s111
    %s112 = sphi 0, %s109
    %s113 = sphi 0, %s112
    %s129 = sphi 0, %s113
  $region4: #{edsr_forward.1} parent=0 // loop_header_branch
    %13 = sbr.rel (%p11) target = $region8
  $region5: #{edsr_forward.1} parent=0 // loop_body
    %s15 = ssub.s32 %s10, 1
    %s16 = ssub.s32 %s10, 2
    %s17 = sadd.s32 %s10, 1
    %s18 = ssub.s32 %s10, %s17
    %p19 = scmp.eq.s32.totalorder %s18, 0
    %s21 = sadd.s32 %s20, 1
    %s22 = scalar_select %p19, %s20, %s21
    %p25 = pneg %p19
    %p26 = scmp.eq.s32.totalorder %s10, 1
    %p27 = por %p25, %p26
    %p28 = scmp.ne.s32.totalorder %s20, %s23
    %p29 = scmp.eq.s32.totalorder %s10, 0
    %p30 = por %p28, %p29
    %p31 = scmp.ne.s32.totalorder %s20, %s23
    %p32 = scmp.eq.s32.totalorder %s15, 1
    %p33 = por %p31, %p32
    %p34 = scmp.ne.s32.totalorder %s23, %s24
    %p35 = scmp.eq.s32.totalorder %s15, 0
    %p36 = por %p34, %p35
    %p37 = scmp.ne.s32.totalorder %s23, %s24
    %p38 = scmp.eq.s32.totalorder %s16, 1
    %p39 = por %p37, %p38
    %p41 = scmp.ne.s32.totalorder %s24, %s40
    %p42 = scmp.eq.s32.totalorder %s16, 0
    %p43 = por %p41, %p42
    %s45 = sadd.s32 %s44, 1
    %p48 = scmp.eq.s32.totalorder %s10, 1
    %p49 = scmp.ne.s32.totalorder %s44, %s46
    %p50 = scmp.eq.s32.totalorder %s10, 0
    %p51 = por %p49, %p50
    %p52 = scmp.ne.s32.totalorder %s44, %s46
    %p53 = scmp.eq.s32.totalorder %s15, 1
    %p54 = por %p52, %p53
    %p55 = scmp.ne.s32.totalorder %s46, %s47
    %p56 = scmp.eq.s32.totalorder %s15, 0
    %p57 = por %p55, %p56
    %p58 = scmp.ne.s32.totalorder %s46, %s47
    %p59 = scmp.eq.s32.totalorder %s16, 1
    %p60 = por %p58, %p59
    %p62 = scmp.ne.s32.totalorder %s47, %s61
    %p63 = scmp.eq.s32.totalorder %s16, 0
    %p64 = por %p62, %p63
    %s66 = sadd.s32 %s65, 1
    %p69 = scmp.eq.s32.totalorder %s10, 1
    %p70 = scmp.ne.s32.totalorder %s65, %s67
    %p71 = scmp.eq.s32.totalorder %s10, 0
    %p72 = por %p70, %p71
    %p73 = scmp.ne.s32.totalorder %s65, %s67
    %p74 = scmp.eq.s32.totalorder %s15, 1
    %p75 = por %p73, %p74
    %p76 = scmp.ne.s32.totalorder %s67, %s68
    %p77 = scmp.eq.s32.totalorder %s15, 0
    %p78 = por %p76, %p77
    %p79 = scmp.ne.s32.totalorder %s67, %s68
    %p80 = scmp.eq.s32.totalorder %s16, 1
    %p81 = por %p79, %p80
    %p83 = scmp.ne.s32.totalorder %s68, %s82
    %p84 = scmp.eq.s32.totalorder %s16, 0
    %p85 = por %p83, %p84
    %s87 = sadd.s32 %s86, 1
    %p90 = scmp.eq.s32.totalorder %s10, 1
    %p91 = scmp.ne.s32.totalorder %s86, %s88
    %p92 = scmp.eq.s32.totalorder %s10, 0
    %p93 = por %p91, %p92
    %p94 = scmp.ne.s32.totalorder %s86, %s88
    %p95 = scmp.eq.s32.totalorder %s15, 1
    %p96 = por %p94, %p95
    %p97 = scmp.ne.s32.totalorder %s88, %s89
    %p98 = scmp.eq.s32.totalorder %s15, 0
    %p99 = por %p97, %p98
    %p100 = scmp.ne.s32.totalorder %s88, %s89
    %p101 = scmp.eq.s32.totalorder %s16, 1
    %p102 = por %p100, %p101
    %p104 = scmp.ne.s32.totalorder %s89, %s103
    %p105 = scmp.eq.s32.totalorder %s16, 0
    %p106 = por %p104, %p105
    %s107 = ssub.s32 %s10, %s17
    %p108 = scmp.eq.s32.totalorder %s107, 0
    %s110 = sadd.s32 %s109, 1
    %s111 = scalar_select %p108, %s109, %s110
    %p114 = pneg %p108
    %p115 = scmp.eq.s32.totalorder %s10, 1
    %p116 = por %p114, %p115
    %p117 = scmp.ne.s32.totalorder %s109, %s112
    %p118 = scmp.eq.s32.totalorder %s10, 0
    %p119 = por %p117, %p118
    %p120 = scmp.ne.s32.totalorder %s109, %s112
    %p121 = scmp.eq.s32.totalorder %s15, 1
    %p122 = por %p120, %p121
    %p123 = scmp.ne.s32.totalorder %s112, %s113
    %p124 = scmp.eq.s32.totalorder %s15, 0
    %p125 = por %p123, %p124
    %p126 = scmp.ne.s32.totalorder %s112, %s113
    %p127 = scmp.eq.s32.totalorder %s16, 1
    %p128 = por %p126, %p127
    %p130 = scmp.ne.s32.totalorder %s113, %s129
    %p131 = scmp.eq.s32.totalorder %s16, 0
    %p132 = por %p130, %p131
    %p133 = scmp.le.s32.totalorder 1, %s10
    %p134 = scmp.lt.s32.totalorder %s10, 3
    %p135 = pnand %p133, %p134
    %p136 = pneg %p135
    // Predicated region
    $region9: #{edsr_forward.1} parent=5 // pred_check
      _
    $region10: #{edsr_forward.1} parent=5 // pred_check_branch
      %138 = sbr.rel (%p135) target = $region12
    $region11: #{edsr_forward.1} parent=5 // pred_region
      %s139 = ssub.s32 %s10, 1
      // Predicated region
      $region13: #{edsr_forward.1} parent=11 // pred_check
        %p140 = pneg %p57
      $region14: #{edsr_forward.1} parent=11 // pred_check_branch
        %142 = sbr.rel (%p140) target = $region16
      $region15: #{edsr_forward.1} parent=11 // pred_region
        _
      $region16: #{edsr_forward.1} parent=11 // pred_fallthru
        _
      // Predicated region
      $region17: #{edsr_forward.1} parent=11 // pred_check
        %p143 = pneg %p78
      $region18: #{edsr_forward.1} parent=11 // pred_check_branch
        %145 = sbr.rel (%p143) target = $region20
      $region19: #{edsr_forward.1} parent=11 // pred_region
        _
      $region20: #{edsr_forward.1} parent=11 // pred_fallthru
        _
      // Predicated region
      $region21: #{edsr_forward.1} parent=11 // pred_check
        %p146 = pneg %p99
      $region22: #{edsr_forward.1} parent=11 // pred_check_branch
        %148 = sbr.rel (%p146) target = $region24
      $region23: #{edsr_forward.1} parent=11 // pred_region
        _
      $region24: #{edsr_forward.1} parent=11 // pred_fallthru
        _
    $region12: #{edsr_forward.1} parent=5 // pred_fallthru
      _
    %p149 = scmp.lt.s32.totalorder %s10, 2
    // Predicated region
    $region25: #{edsr_forward.1} parent=5 // pred_check
      %p150 = pneg %p149
    $region26: #{edsr_forward.1} parent=5 // pred_check_branch
      %152 = sbr.rel (%p150) target = $region28
    $region27: #{edsr_forward.1} parent=5 // pred_region
      // Predicated region
      $region29: #{edsr_forward.1} parent=27 // pred_check
        %p153 = pneg %p30
      $region30: #{edsr_forward.1} parent=27 // pred_check_branch
        %155 = sbr.rel (%p153) target = $region32
      $region31: #{edsr_forward.1} parent=27 // pred_region
        %p156 = scmp.lt.s32.totalorder %s10, 1
        %s157 = scalar_select %p156, %s10, 1
        %s158 = smul.addr %s157, 54
        %s159 = smul.addr %s158, 8
        %s160 = scalar_lea.vmem %s0, %s159
      $region32: #{edsr_forward.1} parent=27 // pred_fallthru
        _
    $region28: #{edsr_forward.1} parent=5 // pred_fallthru
      _
    %p161 = scmp.le.s32.totalorder 1, %s10
    %p162 = scmp.lt.s32.totalorder %s10, 3
    %p163 = pnand %p161, %p162
    %p164 = pneg %p163
    // Predicated region
    $region33: #{edsr_forward.1} parent=5 // pred_check
      _
    $region34: #{edsr_forward.1} parent=5 // pred_check_branch
      %166 = sbr.rel (%p163) target = $region36
    $region35: #{edsr_forward.1} parent=5 // pred_region
      %s167 = ssub.s32 %s10, 1
      %p168 = scmp.lt.s32.totalorder %s15, 1
      %s169 = scalar_select %p168, %s15, 1
      %s170 = smul.addr %s169, 54
      %s171 = smul.addr %s170, 8
      %s172 = scalar_lea.vmem %s0, %s171
      %p173 = pneg %p36
      %p174 = pneg %p33
      %p175 = pneg %p57
      %p176 = pneg %p54
      %p177 = pneg %p78
      %p178 = pneg %p75
      %p179 = pneg %p99
      %p180 = pneg %p96
      %p181 = pneg %p125
      %p182 = pneg %p122
      %p183 = scmp.lt.s32.totalorder %s15, 1
      %s184 = scalar_select %p183, %s15, 1
      %s185 = smul.addr %s184, 54
      %s186 = smul.addr %s185, 8
      %s187 = scalar_lea.vmem %s4, %s186
      %p188 = scmp.lt.s32.totalorder %s15, 1
      %s189 = scalar_select %p188, %s15, 1
      %s190 = smul.addr %s189, 54
      %s191 = smul.addr %s190, 8
      %s192 = scalar_lea.vmem %s0, %s191
      %p193 = scmp.lt.s32.totalorder %s15, 1
      %s194 = scalar_select %p193, %s15, 1
      %s195 = smul.addr %s194, 54
      %s196 = smul.addr %s195, 8
      %s197 = scalar_lea.vmem %s4, %s196
      %v199 = vld [vmem:[%s192] sm:$0xff]
      %v200 = vld [vmem:[%s192 + $0x8] sm:$0xff]
      %v201 = vld [vmem:[%s192 + $0x10] sm:$0xff]
      %v202 = vld [vmem:[%s192 + $0x18] sm:$0xff]
      %v203 = vld [vmem:[%s192 + $0x20] sm:$0xff]
      %v204 = vld [vmem:[%s192 + $0x28] sm:$0xff]
      %v205 = vld [vmem:[%s192 + $0x30] sm:$0xff]
      %v206 = vld [vmem:[%s192 + $0x38] sm:$0xff]
      %v207 = vld [vmem:[%s192 + $0x40] sm:$0xff]
      %v208 = vld [vmem:[%s192 + $0x48] sm:$0xff]
      %v209 = vld [vmem:[%s192 + $0x50] sm:$0xff]
      %v210 = vld [vmem:[%s192 + $0x58] sm:$0xff]
      %v211 = vld [vmem:[%s192 + $0x60] sm:$0xff]
      %v212 = vld [vmem:[%s192 + $0x68] sm:$0xff]
      %v213 = vld [vmem:[%s192 + $0x70] sm:$0xff]
      %v214 = vld [vmem:[%s192 + $0x78] sm:$0xff]
      %v215 = vld [vmem:[%s192 + $0x80] sm:$0xff]
      %v216 = vld [vmem:[%s192 + $0x88] sm:$0xff]
      %v217 = vld [vmem:[%s192 + $0x90] sm:$0xff]
      %v218 = vld [vmem:[%s192 + $0x98] sm:$0xff]
      %v219 = vld [vmem:[%s192 + $0xa0] sm:$0xff]
      %v220 = vld [vmem:[%s192 + $0xa8] sm:$0xff]
      %v221 = vld [vmem:[%s192 + $0xb0] sm:$0xff]
      %v222 = vld [vmem:[%s192 + $0xb8] sm:$0xff]
      %v223 = vld [vmem:[%s192 + $0xc0] sm:$0xff]
      %v224 = vld [vmem:[%s192 + $0xc8] sm:$0xff]
      %v225 = vld [vmem:[%s192 + $0xd0] sm:$0xff]
      %v226 = vld [vmem:[%s192 + $0xd8] sm:$0xff]
      %v227 = vld [vmem:[%s192 + $0xe0] sm:$0xff]
      %v228 = vld [vmem:[%s192 + $0xe8] sm:$0xff]
      %v229 = vld [vmem:[%s192 + $0xf0] sm:$0xff]
      %v230 = vld [vmem:[%s192 + $0xf8] sm:$0xff]
      %v231 = vld [vmem:[%s192 + $0x100] sm:$0xff]
      %v232 = vld [vmem:[%s192 + $0x108] sm:$0xff]
      %v233 = vld [vmem:[%s192 + $0x110] sm:$0xff]
      %v234 = vld [vmem:[%s192 + $0x118] sm:$0xff]
      %v235 = vld [vmem:[%s192 + $0x120] sm:$0xff]
      %v236 = vld [vmem:[%s192 + $0x128] sm:$0xff]
      %v237 = vld [vmem:[%s192 + $0x130] sm:$0xff]
      %v238 = vld [vmem:[%s192 + $0x138] sm:$0xff]
      %v239 = vld [vmem:[%s192 + $0x140] sm:$0xff]
      %v240 = vld [vmem:[%s192 + $0x148] sm:$0xff]
      %v241 = vld [vmem:[%s192 + $0x150] sm:$0xff]
      %v242 = vld [vmem:[%s192 + $0x158] sm:$0xff]
      %v243 = vld [vmem:[%s192 + $0x160] sm:$0xff]
      %v244 = vld [vmem:[%s192 + $0x168] sm:$0xff]
      %v245 = vld [vmem:[%s192 + $0x170] sm:$0xff]
      %v246 = vld [vmem:[%s192 + $0x178] sm:$0xff]
      %v247 = vld [vmem:[%s192 + $0x180] sm:$0xff]
      %v248 = vld [vmem:[%s192 + $0x188] sm:$0xff]
      %v249 = vld [vmem:[%s192 + $0x190] sm:$0xff]
      %v250 = vld [vmem:[%s192 + $0x198] sm:$0xff]
      %v251 = vld [vmem:[%s192 + $0x1a0] sm:$0xff]
      %v252 = vld [vmem:[%s192 + $0x1a8] sm:$0xff]
      %vm253 = vcmask 523264
      %254 = vst.msk [vmem:[#allocation2] sm:$0xff] %vm253, %v199
      %255 = vst.msk [vmem:[#allocation2 + $0x8] sm:$0xff] %vm253, %v200
      %256 = vst.msk [vmem:[#allocation2 + $0x10] sm:$0xff] %vm253, %v201
      %257 = vst.msk [vmem:[#allocation2 + $0x18] sm:$0xff] %vm253, %v202
      %258 = vst.msk [vmem:[#allocation2 + $0x20] sm:$0xff] %vm253, %v203
      %259 = vst.msk [vmem:[#allocation2 + $0x28] sm:$0xff] %vm253, %v204
      %260 = vst.msk [vmem:[#allocation2 + $0x30] sm:$0xff] %vm253, %v205
      %261 = vst.msk [vmem:[#allocation2 + $0x38] sm:$0xff] %vm253, %v206
      %262 = vst.msk [vmem:[#allocation2 + $0x40] sm:$0xff] %vm253, %v207
      %263 = vst.msk [vmem:[#allocation2 + $0x48] sm:$0xff] %vm253, %v208
      %264 = vst.msk [vmem:[#allocation2 + $0x50] sm:$0xff] %vm253, %v209
      %265 = vst.msk [vmem:[#allocation2 + $0x58] sm:$0xff] %vm253, %v210
      %266 = vst.msk [vmem:[#allocation2 + $0x60] sm:$0xff] %vm253, %v211
      %267 = vst.msk [vmem:[#allocation2 + $0x68] sm:$0xff] %vm253, %v212
      %268 = vst.msk [vmem:[#allocation2 + $0x70] sm:$0xff] %vm253, %v213
      %269 = vst.msk [vmem:[#allocation2 + $0x78] sm:$0xff] %vm253, %v214
      %270 = vst.msk [vmem:[#allocation2 + $0x80] sm:$0xff] %vm253, %v215
      %271 = vst.msk [vmem:[#allocation2 + $0x88] sm:$0xff] %vm253, %v216
      %272 = vst.msk [vmem:[#allocation2 + $0x90] sm:$0xff] %vm253, %v217
      %273 = vst.msk [vmem:[#allocation2 + $0x98] sm:$0xff] %vm253, %v218
      %274 = vst.msk [vmem:[#allocation2 + $0xa0] sm:$0xff] %vm253, %v219
      %275 = vst.msk [vmem:[#allocation2 + $0xa8] sm:$0xff] %vm253, %v220
      %276 = vst.msk [vmem:[#allocation2 + $0xb0] sm:$0xff] %vm253, %v221
      %277 = vst.msk [vmem:[#allocation2 + $0xb8] sm:$0xff] %vm253, %v222
      %278 = vst.msk [vmem:[#allocation2 + $0xc0] sm:$0xff] %vm253, %v223
      %279 = vst.msk [vmem:[#allocation2 + $0xc8] sm:$0xff] %vm253, %v224
      %280 = vst.msk [vmem:[#allocation2 + $0xd0] sm:$0xff] %vm253, %v225
      %281 = vst.msk [vmem:[#allocation2 + $0xd8] sm:$0xff] %vm253, %v226
      %282 = vst.msk [vmem:[#allocation2 + $0xe0] sm:$0xff] %vm253, %v227
      %283 = vst.msk [vmem:[#allocation2 + $0xe8] sm:$0xff] %vm253, %v228
      %284 = vst.msk [vmem:[#allocation2 + $0xf0] sm:$0xff] %vm253, %v229
      %285 = vst.msk [vmem:[#allocation2 + $0xf8] sm:$0xff] %vm253, %v230
      %286 = vst.msk [vmem:[#allocation2 + $0x100] sm:$0xff] %vm253, %v231
      %287 = vst.msk [vmem:[#allocation2 + $0x108] sm:$0xff] %vm253, %v232
      %288 = vst.msk [vmem:[#allocation2 + $0x110] sm:$0xff] %vm253, %v233
      %289 = vst.msk [vmem:[#allocation2 + $0x118] sm:$0xff] %vm253, %v234
      %290 = vst.msk [vmem:[#allocation2 + $0x120] sm:$0xff] %vm253, %v235
      %291 = vst.msk [vmem:[#allocation2 + $0x128] sm:$0xff] %vm253, %v236
      %292 = vst.msk [vmem:[#allocation2 + $0x130] sm:$0xff] %vm253, %v237
      %293 = vst.msk [vmem:[#allocation2 + $0x138] sm:$0xff] %vm253, %v238
      %294 = vst.msk [vmem:[#allocation2 + $0x140] sm:$0xff] %vm253, %v239
      %295 = vst.msk [vmem:[#allocation2 + $0x148] sm:$0xff] %vm253, %v240
      %296 = vst.msk [vmem:[#allocation2 + $0x150] sm:$0xff] %vm253, %v241
      %297 = vst.msk [vmem:[#allocation2 + $0x158] sm:$0xff] %vm253, %v242
      %298 = vst.msk [vmem:[#allocation2 + $0x160] sm:$0xff] %vm253, %v243
      %299 = vst.msk [vmem:[#allocation2 + $0x168] sm:$0xff] %vm253, %v244
      %300 = vst.msk [vmem:[#allocation2 + $0x170] sm:$0xff] %vm253, %v245
      %301 = vst.msk [vmem:[#allocation2 + $0x178] sm:$0xff] %vm253, %v246
      %302 = vst.msk [vmem:[#allocation2 + $0x180] sm:$0xff] %vm253, %v247
      %303 = vst.msk [vmem:[#allocation2 + $0x188] sm:$0xff] %vm253, %v248
      %304 = vst.msk [vmem:[#allocation2 + $0x190] sm:$0xff] %vm253, %v249
      %305 = vst.msk [vmem:[#allocation2 + $0x198] sm:$0xff] %vm253, %v250
      %306 = vst.msk [vmem:[#allocation2 + $0x1a0] sm:$0xff] %vm253, %v251
      %307 = vst.msk [vmem:[#allocation2 + $0x1a8] sm:$0xff] %vm253, %v252
      loop: start=0, step=1, limit=35
      $region37: #{edsr_forward.1} parent=35 // loop_pre_header
        _
      $region38: #{edsr_forward.1} parent=35 // loop_header
        %s309 = sphi 0, %s313
        %p310 = scmp.ge.s32.totalorder %s309, 35
      $region39: #{edsr_forward.1} parent=35 // loop_header_branch
        %312 = sbr.rel (%p310) target = $region43
      $region40: #{edsr_forward.1} parent=35 // loop_body
        %v314 = vld [vmem:[#allocation2] sm:$0xff]
        %v315 = vld [vmem:[#allocation2 + $0x8] sm:$0xff]
        %v316 = vld [vmem:[#allocation2 + $0x10] sm:$0xff]
        %v317 = vld [vmem:[#allocation2 + $0x18] sm:$0xff]
        %v318 = vld [vmem:[#allocation2 + $0x20] sm:$0xff]
        %v319 = vld [vmem:[#allocation2 + $0x28] sm:$0xff]
        %v320 = vld [vmem:[#allocation2 + $0x30] sm:$0xff]
        %v321 = vld [vmem:[#allocation2 + $0x38] sm:$0xff]
        %v322 = vld [vmem:[#allocation2 + $0x40] sm:$0xff]
        %v323 = vld [vmem:[#allocation2 + $0x48] sm:$0xff]
        %v324 = vld [vmem:[#allocation2 + $0x50] sm:$0xff]
        %v325 = vld [vmem:[#allocation2 + $0x58] sm:$0xff]
        %v326 = vld [vmem:[#allocation2 + $0x60] sm:$0xff]
        %v327 = vld [vmem:[#allocation2 + $0x68] sm:$0xff]
        %v328 = vld [vmem:[#allocation2 + $0x70] sm:$0xff]
        %v329 = vld [vmem:[#allocation2 + $0x78] sm:$0xff]
        %v330 = vld [vmem:[#allocation2 + $0x80] sm:$0xff]
        %v331 = vld [vmem:[#allocation2 + $0x88] sm:$0xff]
        %v332 = vld [vmem:[#allocation2 + $0x90] sm:$0xff]
        %v333 = vld [vmem:[#allocation2 + $0x98] sm:$0xff]
        %v334 = vld [vmem:[#allocation2 + $0xa0] sm:$0xff]
        %v335 = vld [vmem:[#allocation2 + $0xa8] sm:$0xff]
        %v336 = vld [vmem:[#allocation2 + $0xb0] sm:$0xff]
        %v337 = vld [vmem:[#allocation2 + $0xb8] sm:$0xff]
        %v338 = vld [vmem:[#allocation2 + $0xc0] sm:$0xff]
        %v339 = vld [vmem:[#allocation2 + $0xc8] sm:$0xff]
        %v340 = vld [vmem:[#allocation2 + $0xd0] sm:$0xff]
        %v341 = vld [vmem:[#allocation2 + $0xd8] sm:$0xff]
        %v342 = vld [vmem:[#allocation2 + $0xe0] sm:$0xff]
        %v343 = vld [vmem:[#allocation2 + $0xe8] sm:$0xff]
        %v344 = vld [vmem:[#allocation2 + $0xf0] sm:$0xff]
        %v345 = vld [vmem:[#allocation2 + $0xf8] sm:$0xff]
        %v346 = vld [vmem:[#allocation2 + $0x100] sm:$0xff]
        %v347 = vld [vmem:[#allocation2 + $0x108] sm:$0xff]
        %v348 = vld [vmem:[#allocation2 + $0x110] sm:$0xff]
        %v349 = vld [vmem:[#allocation2 + $0x118] sm:$0xff]
        %v350 = vld [vmem:[#allocation2 + $0x120] sm:$0xff]
        %v351 = vld [vmem:[#allocation2 + $0x128] sm:$0xff]
        %v352 = vld [vmem:[#allocation2 + $0x130] sm:$0xff]
        %v353 = vld [vmem:[#allocation2 + $0x138] sm:$0xff]
        %v354 = vld [vmem:[#allocation2 + $0x140] sm:$0xff]
        %v355 = vld [vmem:[#allocation2 + $0x148] sm:$0xff]
        %v356 = vld [vmem:[#allocation2 + $0x150] sm:$0xff]
        %v357 = vld [vmem:[#allocation2 + $0x158] sm:$0xff]
        %v358 = vld [vmem:[#allocation2 + $0x160] sm:$0xff]
        %v359 = vld [vmem:[#allocation2 + $0x168] sm:$0xff]
        %v360 = vld [vmem:[#allocation2 + $0x170] sm:$0xff]
        %v361 = vld [vmem:[#allocation2 + $0x178] sm:$0xff]
        %v362 = vld [vmem:[#allocation2 + $0x180] sm:$0xff]
        %v363 = vld [vmem:[#allocation2 + $0x188] sm:$0xff]
        %v364 = vld [vmem:[#allocation2 + $0x190] sm:$0xff]
        %v365 = vld [vmem:[#allocation2 + $0x198] sm:$0xff]
        %v366 = vld [vmem:[#allocation2 + $0x1a0] sm:$0xff]
        %v367 = vld [vmem:[#allocation2 + $0x1a8] sm:$0xff]
        %v368 = vrot.slane %v314, 7
        %v369 = vrot.slane %v315, 7
        %v370 = vrot.slane %v316, 7
        %v371 = vrot.slane %v317, 7
        %v372 = vrot.slane %v318, 7
        %v373 = vrot.slane %v319, 7
        %v374 = vrot.slane %v320, 7
        %v375 = vrot.slane %v321, 7
        %v376 = vrot.slane %v322, 7
        %v377 = vrot.slane %v323, 7
        %v378 = vrot.slane %v324, 7
        %v379 = vrot.slane %v325, 7
        %v380 = vrot.slane %v326, 7
        %v381 = vrot.slane %v327, 7
        %v382 = vrot.slane %v328, 7
        %v383 = vrot.slane %v329, 7
        %v384 = vrot.slane %v330, 7
        %v385 = vrot.slane %v331, 7
        %v386 = vrot.slane %v332, 7
        %v387 = vrot.slane %v333, 7
        %v388 = vrot.slane %v334, 7
        %v389 = vrot.slane %v335, 7
        %v390 = vrot.slane %v336, 7
        %v391 = vrot.slane %v337, 7
        %v392 = vrot.slane %v338, 7
        %v393 = vrot.slane %v339, 7
        %v394 = vrot.slane %v340, 7
        %v395 = vrot.slane %v341, 7
        %v396 = vrot.slane %v342, 7
        %v397 = vrot.slane %v343, 7
        %v398 = vrot.slane %v344, 7
        %v399 = vrot.slane %v345, 7
        %v400 = vrot.slane %v346, 7
        %v401 = vrot.slane %v347, 7
        %v402 = vrot.slane %v348, 7
        %v403 = vrot.slane %v349, 7
        %v404 = vrot.slane %v350, 7
        %v405 = vrot.slane %v351, 7
        %v406 = vrot.slane %v352, 7
        %v407 = vrot.slane %v353, 7
        %v408 = vrot.slane %v354, 7
        %v409 = vrot.slane %v355, 7
        %v410 = vrot.slane %v356, 7
        %v411 = vrot.slane %v357, 7
        %v412 = vrot.slane %v358, 7
        %v413 = vrot.slane %v359, 7
        %v414 = vrot.slane %v360, 7
        %v415 = vrot.slane %v361, 7
        %v416 = vrot.slane %v362, 7
        %v417 = vrot.slane %v363, 7
        %v418 = vrot.slane %v364, 7
        %v419 = vrot.slane %v365, 7
        %v420 = vrot.slane %v366, 7
        %v421 = vrot.slane %v367, 7
        %v422 = vlaneseq
        %v423 = vshrl.u32 %v422, 7
        %vm424 = vcmp.lt.s32.totalorder %v423, 1
        %v425 = vsel %vm424, %v420, %v421
        %v426 = vsel %vm424, %v419, %v420
        %v427 = vsel %vm424, %v418, %v419
        %v428 = vsel %vm424, %v417, %v418
        %v429 = vsel %vm424, %v416, %v417
        %v430 = vsel %vm424, %v415, %v416
        %v431 = vsel %vm424, %v414, %v415
        %v432 = vsel %vm424, %v413, %v414
        %v433 = vsel %vm424, %v412, %v413
        %v434 = vsel %vm424, %v411, %v412
        %v435 = vsel %vm424, %v410, %v411
        %v436 = vsel %vm424, %v409, %v410
        %v437 = vsel %vm424, %v408, %v409
        %v438 = vsel %vm424, %v407, %v408
        %v439 = vsel %vm424, %v406, %v407
        %v440 = vsel %vm424, %v405, %v406
        %v441 = vsel %vm424, %v404, %v405
        %v442 = vsel %vm424, %v403, %v404
        %v443 = vsel %vm424, %v402, %v403
        %v444 = vsel %vm424, %v401, %v402
        %v445 = vsel %vm424, %v400, %v401
        %v446 = vsel %vm424, %v399, %v400
        %v447 = vsel %vm424, %v398, %v399
        %v448 = vsel %vm424, %v397, %v398
        %v449 = vsel %vm424, %v396, %v397
        %v450 = vsel %vm424, %v395, %v396
        %v451 = vsel %vm424, %v394, %v395
        %v452 = vsel %vm424, %v393, %v394
        %v453 = vsel %vm424, %v392, %v393
        %v454 = vsel %vm424, %v391, %v392
        %v455 = vsel %vm424, %v390, %v391
        %v456 = vsel %vm424, %v389, %v390
        %v457 = vsel %vm424, %v388, %v389
        %v458 = vsel %vm424, %v387, %v388
        %v459 = vsel %vm424, %v386, %v387
        %v460 = vsel %vm424, %v385, %v386
        %v461 = vsel %vm424, %v384, %v385
        %v462 = vsel %vm424, %v383, %v384
        %v463 = vsel %vm424, %v382, %v383
        %v464 = vsel %vm424, %v381, %v382
        %v465 = vsel %vm424, %v380, %v381
        %v466 = vsel %vm424, %v379, %v380
        %v467 = vsel %vm424, %v378, %v379
        %v468 = vsel %vm424, %v377, %v378
        %v469 = vsel %vm424, %v376, %v377
        %v470 = vsel %vm424, %v375, %v376
        %v471 = vsel %vm424, %v374, %v375
        %v472 = vsel %vm424, %v373, %v374
        %v473 = vsel %vm424, %v372, %v373
        %v474 = vsel %vm424, %v371, %v372
        %v475 = vsel %vm424, %v370, %v371
        %v476 = vsel %vm424, %v369, %v370
        %v477 = vsel %vm424, %v368, %v369
        %v478 = vsel %vm424, %v421, %v368
        %v479 = vrot.slane %v314, 1
        %v480 = vrot.slane %v315, 1
        %v481 = vrot.slane %v316, 1
        %v482 = vrot.slane %v317, 1
        %v483 = vrot.slane %v318, 1
        %v484 = vrot.slane %v319, 1
        %v485 = vrot.slane %v320, 1
        %v486 = vrot.slane %v321, 1
        %v487 = vrot.slane %v322, 1
        %v488 = vrot.slane %v323, 1
        %v489 = vrot.slane %v324, 1
        %v490 = vrot.slane %v325, 1
        %v491 = vrot.slane %v326, 1
        %v492 = vrot.slane %v327, 1
        %v493 = vrot.slane %v328, 1
        %v494 = vrot.slane %v329, 1
        %v495 = vrot.slane %v330, 1
        %v496 = vrot.slane %v331, 1
        %v497 = vrot.slane %v332, 1
        %v498 = vrot.slane %v333, 1
        %v499 = vrot.slane %v334, 1
        %v500 = vrot.slane %v335, 1
        %v501 = vrot.slane %v336, 1
        %v502 = vrot.slane %v337, 1
        %v503 = vrot.slane %v338, 1
        %v504 = vrot.slane %v339, 1
        %v505 = vrot.slane %v340, 1
        %v506 = vrot.slane %v341, 1
        %v507 = vrot.slane %v342, 1
        %v508 = vrot.slane %v343, 1
        %v509 = vrot.slane %v344, 1
        %v510 = vrot.slane %v345, 1
        %v511 = vrot.slane %v346, 1
        %v512 = vrot.slane %v347, 1
        %v513 = vrot.slane %v348, 1
        %v514 = vrot.slane %v349, 1
        %v515 = vrot.slane %v350, 1
        %v516 = vrot.slane %v351, 1
        %v517 = vrot.slane %v352, 1
        %v518 = vrot.slane %v353, 1
        %v519 = vrot.slane %v354, 1
        %v520 = vrot.slane %v355, 1
        %v521 = vrot.slane %v356, 1
        %v522 = vrot.slane %v357, 1
        %v523 = vrot.slane %v358, 1
        %v524 = vrot.slane %v359, 1
        %v525 = vrot.slane %v360, 1
        %v526 = vrot.slane %v361, 1
        %v527 = vrot.slane %v362, 1
        %v528 = vrot.slane %v363, 1
        %v529 = vrot.slane %v364, 1
        %v530 = vrot.slane %v365, 1
        %v531 = vrot.slane %v366, 1
        %v532 = vrot.slane %v367, 1
        %vm533 = vcmp.lt.s32.totalorder %v423, 7
        %v534 = vsel %vm533, %v531, %v532
        %v535 = vsel %vm533, %v530, %v531
        %v536 = vsel %vm533, %v529, %v530
        %v537 = vsel %vm533, %v528, %v529
        %v538 = vsel %vm533, %v527, %v528
        %v539 = vsel %vm533, %v526, %v527
        %v540 = vsel %vm533, %v525, %v526
        %v541 = vsel %vm533, %v524, %v525
        %v542 = vsel %vm533, %v523, %v524
        %v543 = vsel %vm533, %v522, %v523
        %v544 = vsel %vm533, %v521, %v522
        %v545 = vsel %vm533, %v520, %v521
        %v546 = vsel %vm533, %v519, %v520
        %v547 = vsel %vm533, %v518, %v519
        %v548 = vsel %vm533, %v517, %v518
        %v549 = vsel %vm533, %v516, %v517
        %v550 = vsel %vm533, %v515, %v516
        %v551 = vsel %vm533, %v514, %v515
        %v552 = vsel %vm533, %v513, %v514
        %v553 = vsel %vm533, %v512, %v513
        %v554 = vsel %vm533, %v511, %v512
        %v555 = vsel %vm533, %v510, %v511
        %v556 = vsel %vm533, %v509, %v510
        %v557 = vsel %vm533, %v508, %v509
        %v558 = vsel %vm533, %v507, %v508
        %v559 = vsel %vm533, %v506, %v507
        %v560 = vsel %vm533, %v505, %v506
        %v561 = vsel %vm533, %v504, %v505
        %v562 = vsel %vm533, %v503, %v504
        %v563 = vsel %vm533, %v502, %v503
        %v564 = vsel %vm533, %v501, %v502
        %v565 = vsel %vm533, %v500, %v501
        %v566 = vsel %vm533, %v499, %v500
        %v567 = vsel %vm533, %v498, %v499
        %v568 = vsel %vm533, %v497, %v498
        %v569 = vsel %vm533, %v496, %v497
        %v570 = vsel %vm533, %v495, %v496
        %v571 = vsel %vm533, %v494, %v495
        %v572 = vsel %vm533, %v493, %v494
        %v573 = vsel %vm533, %v492, %v493
        %v574 = vsel %vm533, %v491, %v492
        %v575 = vsel %vm533, %v490, %v491
        %v576 = vsel %vm533, %v489, %v490
        %v577 = vsel %vm533, %v488, %v489
        %v578 = vsel %vm533, %v487, %v488
        %v579 = vsel %vm533, %v486, %v487
        %v580 = vsel %vm533, %v485, %v486
        %v581 = vsel %vm533, %v484, %v485
        %v582 = vsel %vm533, %v483, %v484
        %v583 = vsel %vm533, %v482, %v483
        %v584 = vsel %vm533, %v481, %v482
        %v585 = vsel %vm533, %v480, %v481
        %v586 = vsel %vm533, %v479, %v480
        %v587 = vsel %vm533, %v532, %v479
        %642 = vrot.lane.b32.xlu0 %v365, 64
        %v643 = vpop.permute.xlu0 %642
        %644 = vrot.lane.b32.xlu0 %v366, 64
        %v645 = vpop.permute.xlu0 %644
        %646 = vrot.lane.b32.xlu0 %v367, 64
        %v647 = vpop.permute.xlu0 %646
        %648 = vrot.lane.b32.xlu0 %v314, 64
        %v649 = vpop.permute.xlu0 %648
        %650 = vrot.lane.b32.xlu0 %v315, 64
        %v651 = vpop.permute.xlu0 %650
        %652 = vrot.lane.b32.xlu0 %v316, 64
        %v653 = vpop.permute.xlu0 %652
        %654 = vrot.lane.b32.xlu0 %v317, 64
        %v655 = vpop.permute.xlu0 %654
        %656 = vrot.lane.b32.xlu0 %v318, 64
        %v657 = vpop.permute.xlu0 %656
        %658 = vrot.lane.b32.xlu0 %v319, 64
        %v659 = vpop.permute.xlu0 %658
        %660 = vrot.lane.b32.xlu0 %v320, 64
        %v661 = vpop.permute.xlu0 %660
        %662 = vrot.lane.b32.xlu0 %v321, 64
        %v663 = vpop.permute.xlu0 %662
        %664 = vrot.lane.b32.xlu0 %v322, 64
        %v665 = vpop.permute.xlu0 %664
        %666 = vrot.lane.b32.xlu0 %v323, 64
        %v667 = vpop.permute.xlu0 %666
        %668 = vrot.lane.b32.xlu0 %v324, 64
        %v669 = vpop.permute.xlu0 %668
        %670 = vrot.lane.b32.xlu0 %v325, 64
        %v671 = vpop.permute.xlu0 %670
        %672 = vrot.lane.b32.xlu0 %v326, 64
        %v673 = vpop.permute.xlu0 %672
        %674 = vrot.lane.b32.xlu0 %v327, 64
        %v675 = vpop.permute.xlu0 %674
        %676 = vrot.lane.b32.xlu0 %v328, 64
        %v677 = vpop.permute.xlu0 %676
        %678 = vrot.lane.b32.xlu0 %v329, 64
        %v679 = vpop.permute.xlu0 %678
        %680 = vrot.lane.b32.xlu0 %v330, 64
        %v681 = vpop.permute.xlu0 %680
        %682 = vrot.lane.b32.xlu0 %v331, 64
        %v683 = vpop.permute.xlu0 %682
        %684 = vrot.lane.b32.xlu0 %v332, 64
        %v685 = vpop.permute.xlu0 %684
        %686 = vrot.lane.b32.xlu0 %v333, 64
        %v687 = vpop.permute.xlu0 %686
        %688 = vrot.lane.b32.xlu0 %v334, 64
        %v689 = vpop.permute.xlu0 %688
        %690 = vrot.lane.b32.xlu0 %v335, 64
        %v691 = vpop.permute.xlu0 %690
        %692 = vrot.lane.b32.xlu0 %v336, 64
        %v693 = vpop.permute.xlu0 %692
        %694 = vrot.lane.b32.xlu0 %v337, 64
        %v695 = vpop.permute.xlu0 %694
        %696 = vrot.lane.b32.xlu0 %v338, 64
        %v697 = vpop.permute.xlu0 %696
        %698 = vrot.lane.b32.xlu0 %v339, 64
        %v699 = vpop.permute.xlu0 %698
        %700 = vrot.lane.b32.xlu0 %v340, 64
        %v701 = vpop.permute.xlu0 %700
        %702 = vrot.lane.b32.xlu0 %v341, 64
        %v703 = vpop.permute.xlu0 %702
        %704 = vrot.lane.b32.xlu0 %v342, 64
        %v705 = vpop.permute.xlu0 %704
        %706 = vrot.lane.b32.xlu0 %v343, 64
        %v707 = vpop.permute.xlu0 %706
        %708 = vrot.lane.b32.xlu0 %v344, 64
        %v709 = vpop.permute.xlu0 %708
        %710 = vrot.lane.b32.xlu0 %v345, 64
        %v711 = vpop.permute.xlu0 %710
        %712 = vrot.lane.b32.xlu0 %v346, 64
        %v713 = vpop.permute.xlu0 %712
        %714 = vrot.lane.b32.xlu0 %v347, 64
        %v715 = vpop.permute.xlu0 %714
        %716 = vrot.lane.b32.xlu0 %v348, 64
        %v717 = vpop.permute.xlu0 %716
        %718 = vrot.lane.b32.xlu0 %v349, 64
        %v719 = vpop.permute.xlu0 %718
        %720 = vrot.lane.b32.xlu0 %v350, 64
        %v721 = vpop.permute.xlu0 %720
        %722 = vrot.lane.b32.xlu0 %v351, 64
        %v723 = vpop.permute.xlu0 %722
        %724 = vrot.lane.b32.xlu0 %v352, 64
        %v725 = vpop.permute.xlu0 %724
        %726 = vrot.lane.b32.xlu0 %v353, 64
        %v727 = vpop.permute.xlu0 %726
        %728 = vrot.lane.b32.xlu0 %v354, 64
        %v729 = vpop.permute.xlu0 %728
        %730 = vrot.lane.b32.xlu0 %v355, 64
        %v731 = vpop.permute.xlu0 %730
        %732 = vrot.lane.b32.xlu0 %v356, 64
        %v733 = vpop.permute.xlu0 %732
        %734 = vrot.lane.b32.xlu0 %v357, 64
        %v735 = vpop.permute.xlu0 %734
        %736 = vrot.lane.b32.xlu0 %v358, 64
        %v737 = vpop.permute.xlu0 %736
        %738 = vrot.lane.b32.xlu0 %v359, 64
        %v739 = vpop.permute.xlu0 %738
        %740 = vrot.lane.b32.xlu0 %v360, 64
        %v741 = vpop.permute.xlu0 %740
        %742 = vrot.lane.b32.xlu0 %v361, 64
        %v743 = vpop.permute.xlu0 %742
        %744 = vrot.lane.b32.xlu0 %v362, 64
        %v745 = vpop.permute.xlu0 %744
        %746 = vrot.lane.b32.xlu0 %v363, 64
        %v747 = vpop.permute.xlu0 %746
        %748 = vrot.lane.b32.xlu0 %v364, 64
        %v749 = vpop.permute.xlu0 %748
        %v804 = vsel %vm253, %v427, %v643
        %v805 = vsel %vm253, %v426, %v645
        %v806 = vsel %vm253, %v425, %v647
        %v807 = vsel %vm253, %v478, %v649
        %v808 = vsel %vm253, %v477, %v651
        %v809 = vsel %vm253, %v476, %v653
        %v810 = vsel %vm253, %v475, %v655
        %v811 = vsel %vm253, %v474, %v657
        %v812 = vsel %vm253, %v473, %v659
        %v813 = vsel %vm253, %v472, %v661
        %v814 = vsel %vm253, %v471, %v663
        %v815 = vsel %vm253, %v470, %v665
        %v816 = vsel %vm253, %v469, %v667
        %v817 = vsel %vm253, %v468, %v669
        %v818 = vsel %vm253, %v467, %v671
        %v819 = vsel %vm253, %v466, %v673
        %v820 = vsel %vm253, %v465, %v675
        %v821 = vsel %vm253, %v464, %v677
        %v822 = vsel %vm253, %v463, %v679
        %v823 = vsel %vm253, %v462, %v681
        %v824 = vsel %vm253, %v461, %v683
        %v825 = vsel %vm253, %v460, %v685
        %v826 = vsel %vm253, %v459, %v687
        %v827 = vsel %vm253, %v458, %v689
        %v828 = vsel %vm253, %v457, %v691
        %v829 = vsel %vm253, %v456, %v693
        %v830 = vsel %vm253, %v455, %v695
        %v831 = vsel %vm253, %v454, %v697
        %v832 = vsel %vm253, %v453, %v699
        %v833 = vsel %vm253, %v452, %v701
        %v834 = vsel %vm253, %v451, %v703
        %v835 = vsel %vm253, %v450, %v705
        %v836 = vsel %vm253, %v449, %v707
        %v837 = vsel %vm253, %v448, %v709
        %v838 = vsel %vm253, %v447, %v711
        %v839 = vsel %vm253, %v446, %v713
        %v840 = vsel %vm253, %v445, %v715
        %v841 = vsel %vm253, %v444, %v717
        %v842 = vsel %vm253, %v443, %v719
        %v843 = vsel %vm253, %v442, %v721
        %v844 = vsel %vm253, %v441, %v723
        %v845 = vsel %vm253, %v440, %v725
        %v846 = vsel %vm253, %v439, %v727
        %v847 = vsel %vm253, %v438, %v729
        %v848 = vsel %vm253, %v437, %v731
        %v849 = vsel %vm253, %v436, %v733
        %v850 = vsel %vm253, %v435, %v735
        %v851 = vsel %vm253, %v434, %v737
        %v852 = vsel %vm253, %v433, %v739
        %v853 = vsel %vm253, %v432, %v741
        %v854 = vsel %vm253, %v431, %v743
        %v855 = vsel %vm253, %v430, %v745
        %v856 = vsel %vm253, %v429, %v747
        %v857 = vsel %vm253, %v428, %v749
        %912 = vrot.lane.b32.xlu0 %v478, 64
        %v913 = vpop.permute.xlu0 %912
        %914 = vrot.lane.b32.xlu0 %v477, 64
        %v915 = vpop.permute.xlu0 %914
        %916 = vrot.lane.b32.xlu0 %v476, 64
        %v917 = vpop.permute.xlu0 %916
        %918 = vrot.lane.b32.xlu0 %v475, 64
        %v919 = vpop.permute.xlu0 %918
        %920 = vrot.lane.b32.xlu0 %v474, 64
        %v921 = vpop.permute.xlu0 %920
        %922 = vrot.lane.b32.xlu0 %v473, 64
        %v923 = vpop.permute.xlu0 %922
        %924 = vrot.lane.b32.xlu0 %v472, 64
        %v925 = vpop.permute.xlu0 %924
        %926 = vrot.lane.b32.xlu0 %v471, 64
        %v927 = vpop.permute.xlu0 %926
        %928 = vrot.lane.b32.xlu0 %v470, 64
        %v929 = vpop.permute.xlu0 %928
        %930 = vrot.lane.b32.xlu0 %v469, 64
        %v931 = vpop.permute.xlu0 %930
        %932 = vrot.lane.b32.xlu0 %v468, 64
        %v933 = vpop.permute.xlu0 %932
        %934 = vrot.lane.b32.xlu0 %v467, 64
        %v935 = vpop.permute.xlu0 %934
        %936 = vrot.lane.b32.xlu0 %v466, 64
        %v937 = vpop.permute.xlu0 %936
        %938 = vrot.lane.b32.xlu0 %v465, 64
        %v939 = vpop.permute.xlu0 %938
        %940 = vrot.lane.b32.xlu0 %v464, 64
        %v941 = vpop.permute.xlu0 %940
        %942 = vrot.lane.b32.xlu0 %v463, 64
        %v943 = vpop.permute.xlu0 %942
        %944 = vrot.lane.b32.xlu0 %v462, 64
        %v945 = vpop.permute.xlu0 %944
        %946 = vrot.lane.b32.xlu0 %v461, 64
        %v947 = vpop.permute.xlu0 %946
        %948 = vrot.lane.b32.xlu0 %v460, 64
        %v949 = vpop.permute.xlu0 %948
        %950 = vrot.lane.b32.xlu0 %v459, 64
        %v951 = vpop.permute.xlu0 %950
        %952 = vrot.lane.b32.xlu0 %v458, 64
        %v953 = vpop.permute.xlu0 %952
        %954 = vrot.lane.b32.xlu0 %v457, 64
        %v955 = vpop.permute.xlu0 %954
        %956 = vrot.lane.b32.xlu0 %v456, 64
        %v957 = vpop.permute.xlu0 %956
        %958 = vrot.lane.b32.xlu0 %v455, 64
        %v959 = vpop.permute.xlu0 %958
        %960 = vrot.lane.b32.xlu0 %v454, 64
        %v961 = vpop.permute.xlu0 %960
        %962 = vrot.lane.b32.xlu0 %v453, 64
        %v963 = vpop.permute.xlu0 %962
        %964 = vrot.lane.b32.xlu0 %v452, 64
        %v965 = vpop.permute.xlu0 %964
        %966 = vrot.lane.b32.xlu0 %v451, 64
        %v967 = vpop.permute.xlu0 %966
        %968 = vrot.lane.b32.xlu0 %v450, 64
        %v969 = vpop.permute.xlu0 %968
        %970 = vrot.lane.b32.xlu0 %v449, 64
        %v971 = vpop.permute.xlu0 %970
        %972 = vrot.lane.b32.xlu0 %v448, 64
        %v973 = vpop.permute.xlu0 %972
        %974 = vrot.lane.b32.xlu0 %v447, 64
        %v975 = vpop.permute.xlu0 %974
        %976 = vrot.lane.b32.xlu0 %v446, 64
        %v977 = vpop.permute.xlu0 %976
        %978 = vrot.lane.b32.xlu0 %v445, 64
        %v979 = vpop.permute.xlu0 %978
        %980 = vrot.lane.b32.xlu0 %v444, 64
        %v981 = vpop.permute.xlu0 %980
        %982 = vrot.lane.b32.xlu0 %v443, 64
        %v983 = vpop.permute.xlu0 %982
        %984 = vrot.lane.b32.xlu0 %v442, 64
        %v985 = vpop.permute.xlu0 %984
        %986 = vrot.lane.b32.xlu0 %v441, 64
        %v987 = vpop.permute.xlu0 %986
        %988 = vrot.lane.b32.xlu0 %v440, 64
        %v989 = vpop.permute.xlu0 %988
        %990 = vrot.lane.b32.xlu0 %v439, 64
        %v991 = vpop.permute.xlu0 %990
        %992 = vrot.lane.b32.xlu0 %v438, 64
        %v993 = vpop.permute.xlu0 %992
        %994 = vrot.lane.b32.xlu0 %v437, 64
        %v995 = vpop.permute.xlu0 %994
        %996 = vrot.lane.b32.xlu0 %v436, 64
        %v997 = vpop.permute.xlu0 %996
        %998 = vrot.lane.b32.xlu0 %v435, 64
        %v999 = vpop.permute.xlu0 %998
        %1000 = vrot.lane.b32.xlu0 %v434, 64
        %v1001 = vpop.permute.xlu0 %1000
        %1002 = vrot.lane.b32.xlu0 %v433, 64
        %v1003 = vpop.permute.xlu0 %1002
        %1004 = vrot.lane.b32.xlu0 %v432, 64
        %v1005 = vpop.permute.xlu0 %1004
        %1006 = vrot.lane.b32.xlu0 %v431, 64
        %v1007 = vpop.permute.xlu0 %1006
        %1008 = vrot.lane.b32.xlu0 %v430, 64
        %v1009 = vpop.permute.xlu0 %1008
        %1010 = vrot.lane.b32.xlu0 %v429, 64
        %v1011 = vpop.permute.xlu0 %1010
        %1012 = vrot.lane.b32.xlu0 %v428, 64
        %v1013 = vpop.permute.xlu0 %1012
        %1014 = vrot.lane.b32.xlu0 %v427, 64
        %v1015 = vpop.permute.xlu0 %1014
        %1016 = vrot.lane.b32.xlu0 %v426, 64
        %v1017 = vpop.permute.xlu0 %1016
        %1018 = vrot.lane.b32.xlu0 %v425, 64
        %v1019 = vpop.permute.xlu0 %1018
        %v1074 = vsel %vm253, %v535, %v913
        %v1075 = vsel %vm253, %v534, %v915
        %v1076 = vsel %vm253, %v587, %v917
        %v1077 = vsel %vm253, %v586, %v919
        %v1078 = vsel %vm253, %v585, %v921
        %v1079 = vsel %vm253, %v584, %v923
        %v1080 = vsel %vm253, %v583, %v925
        %v1081 = vsel %vm253, %v582, %v927
        %v1082 = vsel %vm253, %v581, %v929
        %v1083 = vsel %vm253, %v580, %v931
        %v1084 = vsel %vm253, %v579, %v933
        %v1085 = vsel %vm253, %v578, %v935
        %v1086 = vsel %vm253, %v577, %v937
        %v1087 = vsel %vm253, %v576, %v939
        %v1088 = vsel %vm253, %v575, %v941
        %v1089 = vsel %vm253, %v574, %v943
        %v1090 = vsel %vm253, %v573, %v945
        %v1091 = vsel %vm253, %v572, %v947
        %v1092 = vsel %vm253, %v571, %v949
        %v1093 = vsel %vm253, %v570, %v951
        %v1094 = vsel %vm253, %v569, %v953
        %v1095 = vsel %vm253, %v568, %v955
        %v1096 = vsel %vm253, %v567, %v957
        %v1097 = vsel %vm253, %v566, %v959
        %v1098 = vsel %vm253, %v565, %v961
        %v1099 = vsel %vm253, %v564, %v963
        %v1100 = vsel %vm253, %v563, %v965
        %v1101 = vsel %vm253, %v562, %v967
        %v1102 = vsel %vm253, %v561, %v969
        %v1103 = vsel %vm253, %v560, %v971
        %v1104 = vsel %vm253, %v559, %v973
        %v1105 = vsel %vm253, %v558, %v975
        %v1106 = vsel %vm253, %v557, %v977
        %v1107 = vsel %vm253, %v556, %v979
        %v1108 = vsel %vm253, %v555, %v981
        %v1109 = vsel %vm253, %v554, %v983
        %v1110 = vsel %vm253, %v553, %v985
        %v1111 = vsel %vm253, %v552, %v987
        %v1112 = vsel %vm253, %v551, %v989
        %v1113 = vsel %vm253, %v550, %v991
        %v1114 = vsel %vm253, %v549, %v993
        %v1115 = vsel %vm253, %v548, %v995
        %v1116 = vsel %vm253, %v547, %v997
        %v1117 = vsel %vm253, %v546, %v999
        %v1118 = vsel %vm253, %v545, %v1001
        %v1119 = vsel %vm253, %v544, %v1003
        %v1120 = vsel %vm253, %v543, %v1005
        %v1121 = vsel %vm253, %v542, %v1007
        %v1122 = vsel %vm253, %v541, %v1009
        %v1123 = vsel %vm253, %v540, %v1011
        %v1124 = vsel %vm253, %v539, %v1013
        %v1125 = vsel %vm253, %v538, %v1015
        %v1126 = vsel %vm253, %v537, %v1017
        %v1127 = vsel %vm253, %v536, %v1019
        %1182 = vrot.lane.b32.xlu0 %v586, 64
        %v1183 = vpop.permute.xlu0 %1182
        %1184 = vrot.lane.b32.xlu0 %v585, 64
        %v1185 = vpop.permute.xlu0 %1184
        %1186 = vrot.lane.b32.xlu0 %v584, 64
        %v1187 = vpop.permute.xlu0 %1186
        %1188 = vrot.lane.b32.xlu0 %v583, 64
        %v1189 = vpop.permute.xlu0 %1188
        %1190 = vrot.lane.b32.xlu0 %v582, 64
        %v1191 = vpop.permute.xlu0 %1190
        %1192 = vrot.lane.b32.xlu0 %v581, 64
        %v1193 = vpop.permute.xlu0 %1192
        %1194 = vrot.lane.b32.xlu0 %v580, 64
        %v1195 = vpop.permute.xlu0 %1194
        %1196 = vrot.lane.b32.xlu0 %v579, 64
        %v1197 = vpop.permute.xlu0 %1196
        %1198 = vrot.lane.b32.xlu0 %v578, 64
        %v1199 = vpop.permute.xlu0 %1198
        %1200 = vrot.lane.b32.xlu0 %v577, 64
        %v1201 = vpop.permute.xlu0 %1200
        %1202 = vrot.lane.b32.xlu0 %v576, 64
        %v1203 = vpop.permute.xlu0 %1202
        %1204 = vrot.lane.b32.xlu0 %v575, 64
        %v1205 = vpop.permute.xlu0 %1204
        %1206 = vrot.lane.b32.xlu0 %v574, 64
        %v1207 = vpop.permute.xlu0 %1206
        %1208 = vrot.lane.b32.xlu0 %v573, 64
        %v1209 = vpop.permute.xlu0 %1208
        %1210 = vrot.lane.b32.xlu0 %v572, 64
        %v1211 = vpop.permute.xlu0 %1210
        %1212 = vrot.lane.b32.xlu0 %v571, 64
        %v1213 = vpop.permute.xlu0 %1212
        %1214 = vrot.lane.b32.xlu0 %v570, 64
        %v1215 = vpop.permute.xlu0 %1214
        %1216 = vrot.lane.b32.xlu0 %v569, 64
        %v1217 = vpop.permute.xlu0 %1216
        %1218 = vrot.lane.b32.xlu0 %v568, 64
        %v1219 = vpop.permute.xlu0 %1218
        %1220 = vrot.lane.b32.xlu0 %v567, 64
        %v1221 = vpop.permute.xlu0 %1220
        %1222 = vrot.lane.b32.xlu0 %v566, 64
        %v1223 = vpop.permute.xlu0 %1222
        %1224 = vrot.lane.b32.xlu0 %v565, 64
        %v1225 = vpop.permute.xlu0 %1224
        %1226 = vrot.lane.b32.xlu0 %v564, 64
        %v1227 = vpop.permute.xlu0 %1226
        %1228 = vrot.lane.b32.xlu0 %v563, 64
        %v1229 = vpop.permute.xlu0 %1228
        %1230 = vrot.lane.b32.xlu0 %v562, 64
        %v1231 = vpop.permute.xlu0 %1230
        %1232 = vrot.lane.b32.xlu0 %v561, 64
        %v1233 = vpop.permute.xlu0 %1232
        %1234 = vrot.lane.b32.xlu0 %v560, 64
        %v1235 = vpop.permute.xlu0 %1234
        %1236 = vrot.lane.b32.xlu0 %v559, 64
        %v1237 = vpop.permute.xlu0 %1236
        %1238 = vrot.lane.b32.xlu0 %v558, 64
        %v1239 = vpop.permute.xlu0 %1238
        %1240 = vrot.lane.b32.xlu0 %v557, 64
        %v1241 = vpop.permute.xlu0 %1240
        %1242 = vrot.lane.b32.xlu0 %v556, 64
        %v1243 = vpop.permute.xlu0 %1242
        %1244 = vrot.lane.b32.xlu0 %v555, 64
        %v1245 = vpop.permute.xlu0 %1244
        %1246 = vrot.lane.b32.xlu0 %v554, 64
        %v1247 = vpop.permute.xlu0 %1246
        %1248 = vrot.lane.b32.xlu0 %v553, 64
        %v1249 = vpop.permute.xlu0 %1248
        %1250 = vrot.lane.b32.xlu0 %v552, 64
        %v1251 = vpop.permute.xlu0 %1250
        %1252 = vrot.lane.b32.xlu0 %v551, 64
        %v1253 = vpop.permute.xlu0 %1252
        %1254 = vrot.lane.b32.xlu0 %v550, 64
        %v1255 = vpop.permute.xlu0 %1254
        %1256 = vrot.lane.b32.xlu0 %v549, 64
        %v1257 = vpop.permute.xlu0 %1256
        %1258 = vrot.lane.b32.xlu0 %v548, 64
        %v1259 = vpop.permute.xlu0 %1258
        %1260 = vrot.lane.b32.xlu0 %v547, 64
        %v1261 = vpop.permute.xlu0 %1260
        %1262 = vrot.lane.b32.xlu0 %v546, 64
        %v1263 = vpop.permute.xlu0 %1262
        %1264 = vrot.lane.b32.xlu0 %v545, 64
        %v1265 = vpop.permute.xlu0 %1264
        %1266 = vrot.lane.b32.xlu0 %v544, 64
        %v1267 = vpop.permute.xlu0 %1266
        %1268 = vrot.lane.b32.xlu0 %v543, 64
        %v1269 = vpop.permute.xlu0 %1268
        %1270 = vrot.lane.b32.xlu0 %v542, 64
        %v1271 = vpop.permute.xlu0 %1270
        %1272 = vrot.lane.b32.xlu0 %v541, 64
        %v1273 = vpop.permute.xlu0 %1272
        %1274 = vrot.lane.b32.xlu0 %v540, 64
        %v1275 = vpop.permute.xlu0 %1274
        %1276 = vrot.lane.b32.xlu0 %v539, 64
        %v1277 = vpop.permute.xlu0 %1276
        %1278 = vrot.lane.b32.xlu0 %v538, 64
        %v1279 = vpop.permute.xlu0 %1278
        %1280 = vrot.lane.b32.xlu0 %v537, 64
        %v1281 = vpop.permute.xlu0 %1280
        %1282 = vrot.lane.b32.xlu0 %v536, 64
        %v1283 = vpop.permute.xlu0 %1282
        %1284 = vrot.lane.b32.xlu0 %v535, 64
        %v1285 = vpop.permute.xlu0 %1284
        %1286 = vrot.lane.b32.xlu0 %v534, 64
        %v1287 = vpop.permute.xlu0 %1286
        %1288 = vrot.lane.b32.xlu0 %v587, 64
        %v1289 = vpop.permute.xlu0 %1288
        %v1344 = vsel %vm253, %v314, %v1183
        %v1345 = vsel %vm253, %v315, %v1185
        %v1346 = vsel %vm253, %v316, %v1187
        %v1347 = vsel %vm253, %v317, %v1189
        %v1348 = vsel %vm253, %v318, %v1191
        %v1349 = vsel %vm253, %v319, %v1193
        %v1350 = vsel %vm253, %v320, %v1195
        %v1351 = vsel %vm253, %v321, %v1197
        %v1352 = vsel %vm253, %v322, %v1199
        %v1353 = vsel %vm253, %v323, %v1201
        %v1354 = vsel %vm253, %v324, %v1203
        %v1355 = vsel %vm253, %v325, %v1205
        %v1356 = vsel %vm253, %v326, %v1207
        %v1357 = vsel %vm253, %v327, %v1209
        %v1358 = vsel %vm253, %v328, %v1211
        %v1359 = vsel %vm253, %v329, %v1213
        %v1360 = vsel %vm253, %v330, %v1215
        %v1361 = vsel %vm253, %v331, %v1217
        %v1362 = vsel %vm253, %v332, %v1219
        %v1363 = vsel %vm253, %v333, %v1221
        %v1364 = vsel %vm253, %v334, %v1223
        %v1365 = vsel %vm253, %v335, %v1225
        %v1366 = vsel %vm253, %v336, %v1227
        %v1367 = vsel %vm253, %v337, %v1229
        %v1368 = vsel %vm253, %v338, %v1231
        %v1369 = vsel %vm253, %v339, %v1233
        %v1370 = vsel %vm253, %v340, %v1235
        %v1371 = vsel %vm253, %v341, %v1237
        %v1372 = vsel %vm253, %v342, %v1239
        %v1373 = vsel %vm253, %v343, %v1241
        %v1374 = vsel %vm253, %v344, %v1243
        %v1375 = vsel %vm253, %v345, %v1245
        %v1376 = vsel %vm253, %v346, %v1247
        %v1377 = vsel %vm253, %v347, %v1249
        %v1378 = vsel %vm253, %v348, %v1251
        %v1379 = vsel %vm253, %v349, %v1253
        %v1380 = vsel %vm253, %v350, %v1255
        %v1381 = vsel %vm253, %v351, %v1257
        %v1382 = vsel %vm253, %v352, %v1259
        %v1383 = vsel %vm253, %v353, %v1261
        %v1384 = vsel %vm253, %v354, %v1263
        %v1385 = vsel %vm253, %v355, %v1265
        %v1386 = vsel %vm253, %v356, %v1267
        %v1387 = vsel %vm253, %v357, %v1269
        %v1388 = vsel %vm253, %v358, %v1271
        %v1389 = vsel %vm253, %v359, %v1273
        %v1390 = vsel %vm253, %v360, %v1275
        %v1391 = vsel %vm253, %v361, %v1277
        %v1392 = vsel %vm253, %v362, %v1279
        %v1393 = vsel %vm253, %v363, %v1281
        %v1394 = vsel %vm253, %v364, %v1283
        %v1395 = vsel %vm253, %v365, %v1285
        %v1396 = vsel %vm253, %v366, %v1287
        %v1397 = vsel %vm253, %v367, %v1289
        %v1398 = vpack.c.bf16 %v805, %v804
        %v1399 = vpack.c.bf16 %v1075, %v1074
        %v1400 = vpack.c.bf16 %v1345, %v1344
        %v1401 = vpack.c.bf16 %v811, %v810
        %v1402 = vpack.c.bf16 %v582, %v583
        %v1403 = vpack.c.bf16 %v807, %v806
        %v1404 = vpack.c.bf16 %v1077, %v1076
        %v1405 = vpack.c.bf16 %v1347, %v1346
        %v1406 = vpack.c.bf16 %v813, %v812
        %v1407 = vpack.c.bf16 %v580, %v581
        %v1408 = vpack.c.bf16 %v809, %v808
        %v1409 = vpack.c.bf16 %v1079, %v1078
        %v1410 = vpack.c.bf16 %v1349, %v1348
        %v1411 = vpack.c.bf16 %v815, %v814
        %v1412 = vpack.c.bf16 %v578, %v579
        %v1413 = vpack.c.bf16 %v1081, %v1080
        %v1414 = vpack.c.bf16 %v1351, %v1350
        %v1415 = vpack.c.bf16 %v817, %v816
        %v1416 = vpack.c.bf16 %v576, %v577
        %v1417 = vpack.c.bf16 %v1083, %v1082
        %v1418 = vpack.c.bf16 %v1353, %v1352
        %v1419 = vpack.c.bf16 %v819, %v818
        %v1420 = vpack.c.bf16 %v574, %v575
        %v1421 = vpack.c.bf16 %v1085, %v1084
        %v1422 = vpack.c.bf16 %v1355, %v1354
        %v1423 = vpack.c.bf16 %v821, %v820
        %v1424 = vpack.c.bf16 %v572, %v573
        %v1425 = vpack.c.bf16 %v1087, %v1086
        %v1426 = vpack.c.bf16 %v1357, %v1356
        %v1427 = vpack.c.bf16 %v823, %v822
        %v1428 = vpack.c.bf16 %v570, %v571
        %v1429 = vpack.c.bf16 %v1089, %v1088
        %v1430 = vpack.c.bf16 %v1359, %v1358
        %v1431 = vpack.c.bf16 %v825, %v824
        %v1432 = vpack.c.bf16 %v568, %v569
        %v1433 = vpack.c.bf16 %v1091, %v1090
        %v1434 = vpack.c.bf16 %v1361, %v1360
        %v1435 = vpack.c.bf16 %v827, %v826
        %v1436 = vpack.c.bf16 %v566, %v567
        %v1437 = vpack.c.bf16 %v1093, %v1092
        %v1438 = vpack.c.bf16 %v1363, %v1362
        %v1439 = vpack.c.bf16 %v829, %v828
        %v1440 = vpack.c.bf16 %v564, %v565
        %v1441 = vpack.c.bf16 %v1095, %v1094
        %v1442 = vpack.c.bf16 %v1365, %v1364
        %v1443 = vpack.c.bf16 %v831, %v830
        %v1444 = vpack.c.bf16 %v562, %v563
        %v1445 = vpack.c.bf16 %v1097, %v1096
        %v1446 = vpack.c.bf16 %v1367, %v1366
        %v1447 = vpack.c.bf16 %v833, %v832
        %v1448 = vpack.c.bf16 %v560, %v561
        %v1449 = vpack.c.bf16 %v1099, %v1098
        %v1450 = vpack.c.bf16 %v1369, %v1368
        %v1451 = vpack.c.bf16 %v835, %v834
        %v1452 = vpack.c.bf16 %v558, %v559
        %v1453 = vpack.c.bf16 %v1101, %v1100
        %v1454 = vpack.c.bf16 %v1371, %v1370
        %v1455 = vpack.c.bf16 %v837, %v836
        %v1456 = vpack.c.bf16 %v556, %v557
        %v1457 = vpack.c.bf16 %v1103, %v1102
        %v1458 = vpack.c.bf16 %v1373, %v1372
        %v1459 = vpack.c.bf16 %v839, %v838
        %v1460 = vpack.c.bf16 %v554, %v555
        %v1461 = vpack.c.bf16 %v1105, %v1104
        %v1462 = vpack.c.bf16 %v1375, %v1374
        %v1463 = vpack.c.bf16 %v841, %v840
        %v1464 = vpack.c.bf16 %v552, %v553
        %v1465 = vpack.c.bf16 %v1107, %v1106
        %v1466 = vpack.c.bf16 %v1377, %v1376
        %v1467 = vpack.c.bf16 %v843, %v842
        %v1468 = vpack.c.bf16 %v550, %v551
        %v1469 = vpack.c.bf16 %v1109, %v1108
        %v1470 = vpack.c.bf16 %v1379, %v1378
        %v1471 = vpack.c.bf16 %v845, %v844
        %v1472 = vpack.c.bf16 %v548, %v549
        %v1473 = vpack.c.bf16 %v1111, %v1110
        %v1474 = vpack.c.bf16 %v1381, %v1380
        %v1475 = vpack.c.bf16 %v847, %v846
        %v1476 = vpack.c.bf16 %v546, %v547
        %v1477 = vpack.c.bf16 %v1113, %v1112
        %v1478 = vpack.c.bf16 %v1383, %v1382
        %v1479 = vpack.c.bf16 %v849, %v848
        %v1480 = vpack.c.bf16 %v544, %v545
        %v1481 = vpack.c.bf16 %v1115, %v1114
        %v1482 = vpack.c.bf16 %v1385, %v1384
        %v1483 = vpack.c.bf16 %v851, %v850
        %v1484 = vpack.c.bf16 %v542, %v543
        %v1485 = vpack.c.bf16 %v1117, %v1116
        %v1486 = vpack.c.bf16 %v1387, %v1386
        %v1487 = vpack.c.bf16 %v853, %v852
        %v1488 = vpack.c.bf16 %v540, %v541
        %v1489 = vpack.c.bf16 %v1119, %v1118
        %v1490 = vpack.c.bf16 %v1389, %v1388
        %v1491 = vpack.c.bf16 %v855, %v854
        %v1492 = vpack.c.bf16 %v538, %v539
        %v1493 = vpack.c.bf16 %v1121, %v1120
        %v1494 = vpack.c.bf16 %v1391, %v1390
        %v1495 = vpack.c.bf16 %v857, %v856
        %v1496 = vpack.c.bf16 %v536, %v537
        %v1497 = vpack.c.bf16 %v1123, %v1122
        %v1498 = vpack.c.bf16 %v1393, %v1392
        %v1499 = vpack.c.bf16 %v534, %v535
        %v1500 = vpack.c.bf16 %v1125, %v1124
        %v1501 = vpack.c.bf16 %v1395, %v1394
        %v1502 = vpack.c.bf16 %v586, %v587
        %v1503 = vpack.c.bf16 %v1127, %v1126
        %v1504 = vpack.c.bf16 %v1397, %v1396
        %v1505 = vpack.c.bf16 %v584, %v585
        %s1506 = smul.u32 %s309, 72
        %s1507 = smul.addr %s1506, 4
        %s1508 = scalar_lea.vmem %s1, %s1507
        %v1509 = vld [vmem:[%s1508] sm:$0xf]
        %v1510 = vld [vmem:[%s1508 + $0x4] sm:$0xf]
        %v1511 = vld [vmem:[%s1508 + $0x8] sm:$0xf]
        %v1512 = vld [vmem:[%s1508 + $0xc] sm:$0xf]
        %v1513 = vld [vmem:[%s1508 + $0x10] sm:$0xf]
        %v1514 = vld [vmem:[%s1508 + $0x14] sm:$0xf]
        %v1515 = vld [vmem:[%s1508 + $0x18] sm:$0xf]
        %v1516 = vld [vmem:[%s1508 + $0x1c] sm:$0xf]
        %v1517 = vld [vmem:[%s1508 + $0x20] sm:$0xf]
        %v1518 = vld [vmem:[%s1508 + $0x24] sm:$0xf]
        %v1519 = vld [vmem:[%s1508 + $0x28] sm:$0xf]
        %v1520 = vld [vmem:[%s1508 + $0x2c] sm:$0xf]
        %v1521 = vld [vmem:[%s1508 + $0x30] sm:$0xf]
        %v1522 = vld [vmem:[%s1508 + $0x34] sm:$0xf]
        %v1523 = vld [vmem:[%s1508 + $0x38] sm:$0xf]
        %v1524 = vld [vmem:[%s1508 + $0x3c] sm:$0xf]
        %v1525 = vld [vmem:[%s1508 + $0x40] sm:$0xf]
        %v1526 = vld [vmem:[%s1508 + $0x44] sm:$0xf]
        %v1527 = vld [vmem:[%s1508 + $0x48] sm:$0xf]
        %v1528 = vld [vmem:[%s1508 + $0x4c] sm:$0xf]
        %v1529 = vld [vmem:[%s1508 + $0x50] sm:$0xf]
        %v1530 = vld [vmem:[%s1508 + $0x54] sm:$0xf]
        %v1531 = vld [vmem:[%s1508 + $0x58] sm:$0xf]
        %v1532 = vld [vmem:[%s1508 + $0x5c] sm:$0xf]
        %v1533 = vld [vmem:[%s1508 + $0x60] sm:$0xf]
        %v1534 = vld [vmem:[%s1508 + $0x64] sm:$0xf]
        %v1535 = vld [vmem:[%s1508 + $0x68] sm:$0xf]
        %v1536 = vld [vmem:[%s1508 + $0x6c] sm:$0xf]
        %v1537 = vld [vmem:[%s1508 + $0x70] sm:$0xf]
        %v1538 = vld [vmem:[%s1508 + $0x74] sm:$0xf]
        %v1539 = vld [vmem:[%s1508 + $0x78] sm:$0xf]
        %v1540 = vld [vmem:[%s1508 + $0x7c] sm:$0xf]
        %v1541 = vld [vmem:[%s1508 + $0x80] sm:$0xf]
        %v1542 = vld [vmem:[%s1508 + $0x84] sm:$0xf]
        %v1543 = vld [vmem:[%s1508 + $0x88] sm:$0xf]
        %v1544 = vld [vmem:[%s1508 + $0x8c] sm:$0xf]
        %v1545 = vld [vmem:[%s1508 + $0x90] sm:$0xf]
        %v1546 = vld [vmem:[%s1508 + $0x94] sm:$0xf]
        %v1547 = vld [vmem:[%s1508 + $0x98] sm:$0xf]
        %v1548 = vld [vmem:[%s1508 + $0x9c] sm:$0xf]
        %v1549 = vld [vmem:[%s1508 + $0xa0] sm:$0xf]
        %v1550 = vld [vmem:[%s1508 + $0xa4] sm:$0xf]
        %v1551 = vld [vmem:[%s1508 + $0xa8] sm:$0xf]
        %v1552 = vld [vmem:[%s1508 + $0xac] sm:$0xf]
        %v1553 = vld [vmem:[%s1508 + $0xb0] sm:$0xf]
        %v1554 = vld [vmem:[%s1508 + $0xb4] sm:$0xf]
        %v1555 = vld [vmem:[%s1508 + $0xb8] sm:$0xf]
        %v1556 = vld [vmem:[%s1508 + $0xbc] sm:$0xf]
        %v1557 = vld [vmem:[%s1508 + $0xc0] sm:$0xf]
        %v1558 = vld [vmem:[%s1508 + $0xc4] sm:$0xf]
        %v1559 = vld [vmem:[%s1508 + $0xc8] sm:$0xf]
        %v1560 = vld [vmem:[%s1508 + $0xcc] sm:$0xf]
        %v1561 = vld [vmem:[%s1508 + $0xd0] sm:$0xf]
        %v1562 = vld [vmem:[%s1508 + $0xd4] sm:$0xf]
        %v1563 = vld [vmem:[%s1508 + $0xd8] sm:$0xf]
        %v1564 = vld [vmem:[%s1508 + $0xdc] sm:$0xf]
        %v1565 = vld [vmem:[%s1508 + $0xe0] sm:$0xf]
        %v1566 = vld [vmem:[%s1508 + $0xe4] sm:$0xf]
        %v1567 = vld [vmem:[%s1508 + $0xe8] sm:$0xf]
        %v1568 = vld [vmem:[%s1508 + $0xec] sm:$0xf]
        %v1569 = vld [vmem:[%s1508 + $0xf0] sm:$0xf]
        %v1570 = vld [vmem:[%s1508 + $0xf4] sm:$0xf]
        %v1571 = vld [vmem:[%s1508 + $0xf8] sm:$0xf]
        %v1572 = vld [vmem:[%s1508 + $0xfc] sm:$0xf]
        %v1573 = vld [vmem:[%s1508 + $0x100] sm:$0xf]
        %v1574 = vld [vmem:[%s1508 + $0x104] sm:$0xf]
        %v1575 = vld [vmem:[%s1508 + $0x108] sm:$0xf]
        %v1576 = vld [vmem:[%s1508 + $0x10c] sm:$0xf]
        %v1577 = vld [vmem:[%s1508 + $0x110] sm:$0xf]
        %v1578 = vld [vmem:[%s1508 + $0x114] sm:$0xf]
        %v1579 = vld [vmem:[%s1508 + $0x118] sm:$0xf]
        %v1580 = vld [vmem:[%s1508 + $0x11c] sm:$0xf]
        %s1581 = scalar_lea.vmem %s2, %s309
        %v1582 = vld [vmem:[%s1581] sm:$0x1]
        %v1584 = vlaneseq
        %v1585 = vshrl.u32 %v1584, 7
        %v1586 = vsub.s32 0, %v1585
        %v1587 = vrot.slane %v1582, %v1586
        %v1661 = vunpack.c.l.b16 %v1509
        %v1662 = vunpack.c.l.b16 %v1510
        %v1663 = vunpack.c.l.b16 %v1511
        %v1664 = vunpack.c.l.b16 %v1512
        %v1665 = vunpack.c.l.b16 %v1513
        %v1666 = vunpack.c.l.b16 %v1514
        %v1667 = vunpack.c.l.b16 %v1515
        %v1668 = vunpack.c.l.b16 %v1516
        %v1669 = vunpack.c.l.b16 %v1517
        %v1670 = vunpack.c.l.b16 %v1518
        %v1671 = vunpack.c.l.b16 %v1519
        %v1672 = vunpack.c.l.b16 %v1520
        %v1673 = vunpack.c.l.b16 %v1521
        %v1674 = vunpack.c.l.b16 %v1522
        %v1675 = vunpack.c.l.b16 %v1523
        %v1676 = vunpack.c.l.b16 %v1524
        %v1677 = vunpack.c.l.b16 %v1525
        %v1678 = vunpack.c.l.b16 %v1526
        %v1679 = vunpack.c.l.b16 %v1527
        %v1680 = vunpack.c.l.b16 %v1528
        %v1681 = vunpack.c.l.b16 %v1529
        %v1682 = vunpack.c.l.b16 %v1530
        %v1683 = vunpack.c.l.b16 %v1531
        %v1684 = vunpack.c.l.b16 %v1532
        %v1685 = vunpack.c.l.b16 %v1533
        %v1686 = vunpack.c.l.b16 %v1534
        %v1687 = vunpack.c.l.b16 %v1535
        %v1688 = vunpack.c.l.b16 %v1536
        %v1689 = vunpack.c.l.b16 %v1537
        %v1690 = vunpack.c.l.b16 %v1538
        %v1691 = vunpack.c.l.b16 %v1539
        %v1692 = vunpack.c.l.b16 %v1540
        %v1693 = vunpack.c.l.b16 %v1541
        %v1694 = vunpack.c.l.b16 %v1542
        %v1695 = vunpack.c.l.b16 %v1543
        %v1696 = vunpack.c.l.b16 %v1544
        %v1697 = vunpack.c.l.b16 %v1545
        %v1698 = vunpack.c.l.b16 %v1546
        %v1699 = vunpack.c.l.b16 %v1547
        %v1700 = vunpack.c.l.b16 %v1548
        %v1701 = vunpack.c.l.b16 %v1549
        %v1702 = vunpack.c.l.b16 %v1550
        %v1703 = vunpack.c.l.b16 %v1551
        %v1704 = vunpack.c.l.b16 %v1552
        %v1705 = vunpack.c.l.b16 %v1553
        %v1706 = vunpack.c.l.b16 %v1554
        %v1707 = vunpack.c.l.b16 %v1555
        %v1708 = vunpack.c.l.b16 %v1556
        %v1709 = vunpack.c.l.b16 %v1557
        %v1710 = vunpack.c.l.b16 %v1558
        %v1711 = vunpack.c.l.b16 %v1559
        %v1712 = vunpack.c.l.b16 %v1560
        %v1713 = vunpack.c.l.b16 %v1561
        %v1714 = vunpack.c.l.b16 %v1562
        %v1715 = vunpack.c.l.b16 %v1563
        %v1716 = vunpack.c.l.b16 %v1564
        %v1717 = vunpack.c.l.b16 %v1565
        %v1718 = vunpack.c.l.b16 %v1566
        %v1719 = vunpack.c.l.b16 %v1567
        %v1720 = vunpack.c.l.b16 %v1568
        %v1721 = vunpack.c.l.b16 %v1569
        %v1722 = vunpack.c.l.b16 %v1570
        %v1723 = vunpack.c.l.b16 %v1571
        %v1724 = vunpack.c.l.b16 %v1572
        %v1725 = vunpack.c.l.b16 %v1573
        %v1726 = vunpack.c.l.b16 %v1574
        %v1727 = vunpack.c.l.b16 %v1575
        %v1728 = vunpack.c.l.b16 %v1576
        %v1729 = vunpack.c.l.b16 %v1577
        %v1730 = vunpack.c.l.b16 %v1578
        %v1731 = vunpack.c.l.b16 %v1579
        %v1732 = vunpack.c.l.b16 %v1580
        %v1733 = vpack.c.b16 %v1662, %v1661
        %v1734 = vpack.c.b16 %v1664, %v1663
        %v1735 = vpack.c.b16 %v1666, %v1665
        %v1736 = vpack.c.b16 %v1668, %v1667
        %v1737 = vpack.c.b16 %v1670, %v1669
        %v1738 = vpack.c.b16 %v1672, %v1671
        %v1739 = vpack.c.b16 %v1674, %v1673
        %v1740 = vpack.c.b16 %v1676, %v1675
        %v1741 = vpack.c.b16 %v1678, %v1677
        %v1742 = vpack.c.b16 %v1680, %v1679
        %v1743 = vpack.c.b16 %v1682, %v1681
        %v1744 = vpack.c.b16 %v1684, %v1683
        %v1745 = vpack.c.b16 %v1686, %v1685
        %v1746 = vpack.c.b16 %v1688, %v1687
        %v1747 = vpack.c.b16 %v1690, %v1689
        %v1748 = vpack.c.b16 %v1692, %v1691
        %v1749 = vpack.c.b16 %v1694, %v1693
        %v1750 = vpack.c.b16 %v1696, %v1695
        %v1751 = vpack.c.b16 %v1698, %v1697
        %v1752 = vpack.c.b16 %v1700, %v1699
        %v1753 = vpack.c.b16 %v1702, %v1701
        %v1754 = vpack.c.b16 %v1704, %v1703
        %v1755 = vpack.c.b16 %v1706, %v1705
        %v1756 = vpack.c.b16 %v1708, %v1707
        %v1757 = vpack.c.b16 %v1710, %v1709
        %v1758 = vpack.c.b16 %v1712, %v1711
        %v1759 = vpack.c.b16 %v1714, %v1713
        %v1760 = vpack.c.b16 %v1716, %v1715
        %v1761 = vpack.c.b16 %v1718, %v1717
        %v1762 = vpack.c.b16 %v1720, %v1719
        %v1763 = vpack.c.b16 %v1722, %v1721
        %v1764 = vpack.c.b16 %v1724, %v1723
        %v1765 = vpack.c.b16 %v1726, %v1725
        %v1766 = vpack.c.b16 %v1728, %v1727
        %v1767 = vpack.c.b16 %v1730, %v1729
        %v1768 = vpack.c.b16 %v1732, %v1731
        %v1806 = vsel %vm253, %v1402, 0
        %v1809 = vsel %vm253, %v1407, 0
        %v1812 = vsel %vm253, %v1412, 0
        %v1815 = vsel %vm253, %v1416, 0
        %v1818 = vsel %vm253, %v1420, 0
        %v1821 = vsel %vm253, %v1424, 0
        %v1824 = vsel %vm253, %v1428, 0
        %v1827 = vsel %vm253, %v1432, 0
        %v1830 = vsel %vm253, %v1436, 0
        %v1833 = vsel %vm253, %v1440, 0
        %v1836 = vsel %vm253, %v1444, 0
        %v1839 = vsel %vm253, %v1448, 0
        %v1842 = vsel %vm253, %v1452, 0
        %v1845 = vsel %vm253, %v1456, 0
        %v1848 = vsel %vm253, %v1460, 0
        %v1851 = vsel %vm253, %v1464, 0
        %v1854 = vsel %vm253, %v1468, 0
        %v1857 = vsel %vm253, %v1472, 0
        %v1860 = vsel %vm253, %v1476, 0
        %v1863 = vsel %vm253, %v1480, 0
        %v1866 = vsel %vm253, %v1484, 0
        %v1869 = vsel %vm253, %v1488, 0
        %v1872 = vsel %vm253, %v1492, 0
        %v1875 = vsel %vm253, %v1496, 0
        %v1878 = vsel %vm253, %v1499, 0
        %v1881 = vsel %vm253, %v1502, 0
        %v1884 = vsel %vm253, %v1505, 0
        %1886 = vmatprep.subr.bf16.mxu0 0
        %1887 = vmatpush1.bf16.msra.mxu0 %v1740
        %1888 = vmatprep.subr.bf16.mxu0 0
        %1889 = vmatpush1.bf16.msra.mxu0 %v1739
        %1890 = vmatprep.subr.bf16.mxu0 0
        %1891 = vmatpush1.bf16.msra.mxu0 %v1738
        %1892 = vmatprep.subr.bf16.mxu0 0
        %1893 = vmatpush1.bf16.msra.mxu0 %v1737
        %1894 = vmatprep.subr.bf16.mxu0 0
        %1895 = vmatpush1.bf16.msra.mxu0 %v1736
        %1896 = vmatprep.subr.bf16.mxu0 0
        %1897 = vmatpush1.bf16.msra.mxu0 %v1735
        %1898 = vmatprep.subr.bf16.mxu0 0
        %1899 = vmatpush1.bf16.msra.mxu0 %v1734
        %1900 = vmatprep.subr.bf16.mxu0 0
        %1901 = vmatpush1.bf16.msra.mxu0 %v1733
        %1902 = vmatprep.subr.bf16.mxu0 0
        %1903 = vmatpush2.bf16.msra.mxu0 %v1748
        %1904 = vmatprep.subr.bf16.mxu0 0
        %1905 = vmatpush2.bf16.msra.mxu0 %v1747
        %1906 = vmatprep.subr.bf16.mxu0 0
        %1907 = vmatpush2.bf16.msra.mxu0 %v1746
        %1908 = vmatprep.subr.bf16.mxu0 0
        %1909 = vmatpush2.bf16.msra.mxu0 %v1745
        %1910 = vmatprep.subr.bf16.mxu0 0
        %1911 = vmatpush2.bf16.msra.mxu0 %v1744
        %1912 = vmatprep.subr.bf16.mxu0 0
        %1913 = vmatpush2.bf16.msra.mxu0 %v1743
        %1914 = vmatprep.subr.bf16.mxu0 0
        %1915 = vmatpush2.bf16.msra.mxu0 %v1742
        %1916 = vmatprep.subr.bf16.mxu0 0
        %1917 = vmatpush2.bf16.msra.mxu0 %v1741
        %1918 = vmatprep.mubr.bf16.mxu0 %v1399
        %1919 = vmatmul.mubr.bf16.gmra.mxu0 %v1398
        %v1920 = vpop.f32.mrf.mxu0
        %v1921 = vadd.f32 %v1587, %v1920
        %v1922 = vpop.f32.mrf.mxu0
        %v1923 = vpop.f32.mrf.mxu0
        %v1924 = vadd.f32 %v1587, %v1923
        %v1925 = vpop.f32.mrf.mxu0
        %1926 = vmatprep.mubr.bf16.mxu0 %v1404
        %1927 = vmatmul.mubr.bf16.gmra.mxu0 %v1403
        %v1928 = vpop.f32.mrf.mxu0
        %v1929 = vadd.f32 %v1587, %v1928
        %v1930 = vpop.f32.mrf.mxu0
        %v1931 = vpop.f32.mrf.mxu0
        %v1932 = vadd.f32 %v1587, %v1931
        %v1933 = vpop.f32.mrf.mxu0
        %1934 = vmatprep.mubr.bf16.mxu0 %v1409
        %1935 = vmatmul.mubr.bf16.gmra.mxu0 %v1408
        %v1936 = vpop.f32.mrf.mxu0
        %v1937 = vadd.f32 %v1587, %v1936
        %v1938 = vpop.f32.mrf.mxu0
        %v1939 = vpop.f32.mrf.mxu0
        %v1940 = vadd.f32 %v1587, %v1939
        %v1941 = vpop.f32.mrf.mxu0
        %1942 = vmatprep.mubr.bf16.mxu0 %v1413
        %1943 = vmatmul.mubr.bf16.gmra.mxu0 %v1401
        %v1944 = vpop.f32.mrf.mxu0
        %v1945 = vadd.f32 %v1587, %v1944
        %v1946 = vpop.f32.mrf.mxu0
        %v1947 = vpop.f32.mrf.mxu0
        %v1948 = vadd.f32 %v1587, %v1947
        %v1949 = vpop.f32.mrf.mxu0
        %1950 = vmatprep.mubr.bf16.mxu0 %v1417
        %1951 = vmatmul.mubr.bf16.gmra.mxu0 %v1406
        %v1952 = vpop.f32.mrf.mxu0
        %v1953 = vadd.f32 %v1587, %v1952
        %v1954 = vpop.f32.mrf.mxu0
        %v1955 = vpop.f32.mrf.mxu0
        %v1956 = vadd.f32 %v1587, %v1955
        %v1957 = vpop.f32.mrf.mxu0
        %1958 = vmatprep.mubr.bf16.mxu0 %v1421
        %1959 = vmatmul.mubr.bf16.gmra.mxu0 %v1411
        %v1960 = vpop.f32.mrf.mxu0
        %v1961 = vadd.f32 %v1587, %v1960
        %v1962 = vpop.f32.mrf.mxu0
        %v1963 = vpop.f32.mrf.mxu0
        %v1964 = vadd.f32 %v1587, %v1963
        %v1965 = vpop.f32.mrf.mxu0
        %1966 = vmatprep.mubr.bf16.mxu0 %v1425
        %1967 = vmatmul.mubr.bf16.gmra.mxu0 %v1415
        %v1968 = vpop.f32.mrf.mxu0
        %v1969 = vadd.f32 %v1587, %v1968
        %v1970 = vpop.f32.mrf.mxu0
        %v1971 = vpop.f32.mrf.mxu0
        %v1972 = vadd.f32 %v1587, %v1971
        %v1973 = vpop.f32.mrf.mxu0
        %1974 = vmatprep.mubr.bf16.mxu0 %v1429
        %1975 = vmatmul.mubr.bf16.gmra.mxu0 %v1419
        %v1976 = vpop.f32.mrf.mxu0
        %v1977 = vadd.f32 %v1587, %v1976
        %v1978 = vpop.f32.mrf.mxu0
        %v1979 = vpop.f32.mrf.mxu0
        %v1980 = vadd.f32 %v1587, %v1979
        %v1981 = vpop.f32.mrf.mxu0
        %1982 = vmatprep.mubr.bf16.mxu0 %v1433
        %1983 = vmatmul.mubr.bf16.gmra.mxu0 %v1423
        %v1984 = vpop.f32.mrf.mxu0
        %v1985 = vadd.f32 %v1587, %v1984
        %v1986 = vpop.f32.mrf.mxu0
        %v1987 = vpop.f32.mrf.mxu0
        %v1988 = vadd.f32 %v1587, %v1987
        %v1989 = vpop.f32.mrf.mxu0
        %1990 = vmatprep.mubr.bf16.mxu0 %v1437
        %1991 = vmatmul.mubr.bf16.gmra.mxu0 %v1427
        %v1992 = vpop.f32.mrf.mxu0
        %v1993 = vadd.f32 %v1587, %v1992
        %v1994 = vpop.f32.mrf.mxu0
        %v1995 = vpop.f32.mrf.mxu0
        %v1996 = vadd.f32 %v1587, %v1995
        %v1997 = vpop.f32.mrf.mxu0
        %1998 = vmatprep.mubr.bf16.mxu0 %v1441
        %1999 = vmatmul.mubr.bf16.gmra.mxu0 %v1431
        %v2000 = vpop.f32.mrf.mxu0
        %v2001 = vadd.f32 %v1587, %v2000
        %v2002 = vpop.f32.mrf.mxu0
        %v2003 = vpop.f32.mrf.mxu0
        %v2004 = vadd.f32 %v1587, %v2003
        %v2005 = vpop.f32.mrf.mxu0
        %2006 = vmatprep.mubr.bf16.mxu0 %v1445
        %2007 = vmatmul.mubr.bf16.gmra.mxu0 %v1435
        %v2008 = vpop.f32.mrf.mxu0
        %v2009 = vadd.f32 %v1587, %v2008
        %v2010 = vpop.f32.mrf.mxu0
        %v2011 = vpop.f32.mrf.mxu0
        %v2012 = vadd.f32 %v1587, %v2011
        %v2013 = vpop.f32.mrf.mxu0
        %2014 = vmatprep.mubr.bf16.mxu0 %v1449
        %2015 = vmatmul.mubr.bf16.gmra.mxu0 %v1439
        %v2016 = vpop.f32.mrf.mxu0
        %v2017 = vadd.f32 %v1587, %v2016
        %v2018 = vpop.f32.mrf.mxu0
        %v2019 = vpop.f32.mrf.mxu0
        %v2020 = vadd.f32 %v1587, %v2019
        %v2021 = vpop.f32.mrf.mxu0
        %2022 = vmatprep.mubr.bf16.mxu0 %v1453
        %2023 = vmatmul.mubr.bf16.gmra.mxu0 %v1443
        %v2024 = vpop.f32.mrf.mxu0
        %v2025 = vadd.f32 %v1587, %v2024
        %v2026 = vpop.f32.mrf.mxu0
        %v2027 = vpop.f32.mrf.mxu0
        %v2028 = vadd.f32 %v1587, %v2027
        %v2029 = vpop.f32.mrf.mxu0
        %2030 = vmatprep.mubr.bf16.mxu0 %v1457
        %2031 = vmatmul.mubr.bf16.gmra.mxu0 %v1447
        %v2032 = vpop.f32.mrf.mxu0
        %v2033 = vadd.f32 %v1587, %v2032
        %v2034 = vpop.f32.mrf.mxu0
        %v2035 = vpop.f32.mrf.mxu0
        %v2036 = vadd.f32 %v1587, %v2035
        %v2037 = vpop.f32.mrf.mxu0
        %2038 = vmatprep.mubr.bf16.mxu0 %v1461
        %2039 = vmatmul.mubr.bf16.gmra.mxu0 %v1451
        %v2040 = vpop.f32.mrf.mxu0
        %v2041 = vadd.f32 %v1587, %v2040
        %v2042 = vpop.f32.mrf.mxu0
        %v2043 = vpop.f32.mrf.mxu0
        %v2044 = vadd.f32 %v1587, %v2043
        %v2045 = vpop.f32.mrf.mxu0
        %2046 = vmatprep.mubr.bf16.mxu0 %v1465
        %2047 = vmatmul.mubr.bf16.gmra.mxu0 %v1455
        %v2048 = vpop.f32.mrf.mxu0
        %v2049 = vadd.f32 %v1587, %v2048
        %v2050 = vpop.f32.mrf.mxu0
        %v2051 = vpop.f32.mrf.mxu0
        %v2052 = vadd.f32 %v1587, %v2051
        %v2053 = vpop.f32.mrf.mxu0
        %2054 = vmatprep.mubr.bf16.mxu0 %v1469
        %2055 = vmatmul.mubr.bf16.gmra.mxu0 %v1459
        %v2056 = vpop.f32.mrf.mxu0
        %v2057 = vadd.f32 %v1587, %v2056
        %v2058 = vpop.f32.mrf.mxu0
        %v2059 = vpop.f32.mrf.mxu0
        %v2060 = vadd.f32 %v1587, %v2059
        %v2061 = vpop.f32.mrf.mxu0
        %2062 = vmatprep.mubr.bf16.mxu0 %v1473
        %2063 = vmatmul.mubr.bf16.gmra.mxu0 %v1463
        %v2064 = vpop.f32.mrf.mxu0
        %v2065 = vadd.f32 %v1587, %v2064
        %v2066 = vpop.f32.mrf.mxu0
        %v2067 = vpop.f32.mrf.mxu0
        %v2068 = vadd.f32 %v1587, %v2067
        %v2069 = vpop.f32.mrf.mxu0
        %2070 = vmatprep.mubr.bf16.mxu0 %v1477
        %2071 = vmatmul.mubr.bf16.gmra.mxu0 %v1467
        %v2072 = vpop.f32.mrf.mxu0
        %v2073 = vadd.f32 %v1587, %v2072
        %v2074 = vpop.f32.mrf.mxu0
        %v2075 = vpop.f32.mrf.mxu0
        %v2076 = vadd.f32 %v1587, %v2075
        %v2077 = vpop.f32.mrf.mxu0
        %2078 = vmatprep.mubr.bf16.mxu0 %v1481
        %2079 = vmatmul.mubr.bf16.gmra.mxu0 %v1471
        %v2080 = vpop.f32.mrf.mxu0
        %v2081 = vadd.f32 %v1587, %v2080
        %v2082 = vpop.f32.mrf.mxu0
        %v2083 = vpop.f32.mrf.mxu0
        %v2084 = vadd.f32 %v1587, %v2083
        %v2085 = vpop.f32.mrf.mxu0
        %2086 = vmatprep.mubr.bf16.mxu0 %v1485
        %2087 = vmatmul.mubr.bf16.gmra.mxu0 %v1475
        %v2088 = vpop.f32.mrf.mxu0
        %v2089 = vadd.f32 %v1587, %v2088
        %v2090 = vpop.f32.mrf.mxu0
        %v2091 = vpop.f32.mrf.mxu0
        %v2092 = vadd.f32 %v1587, %v2091
        %v2093 = vpop.f32.mrf.mxu0
        %2094 = vmatprep.mubr.bf16.mxu0 %v1489
        %2095 = vmatmul.mubr.bf16.gmra.mxu0 %v1479
        %v2096 = vpop.f32.mrf.mxu0
        %v2097 = vadd.f32 %v1587, %v2096
        %v2098 = vpop.f32.mrf.mxu0
        %v2099 = vpop.f32.mrf.mxu0
        %v2100 = vadd.f32 %v1587, %v2099
        %v2101 = vpop.f32.mrf.mxu0
        %2102 = vmatprep.mubr.bf16.mxu0 %v1493
        %2103 = vmatmul.mubr.bf16.gmra.mxu0 %v1483
        %v2104 = vpop.f32.mrf.mxu0
        %v2105 = vadd.f32 %v1587, %v2104
        %v2106 = vpop.f32.mrf.mxu0
        %v2107 = vpop.f32.mrf.mxu0
        %v2108 = vadd.f32 %v1587, %v2107
        %v2109 = vpop.f32.mrf.mxu0
        %2110 = vmatprep.mubr.bf16.mxu0 %v1497
        %2111 = vmatmul.mubr.bf16.gmra.mxu0 %v1487
        %v2112 = vpop.f32.mrf.mxu0
        %v2113 = vadd.f32 %v1587, %v2112
        %v2114 = vpop.f32.mrf.mxu0
        %v2115 = vpop.f32.mrf.mxu0
        %v2116 = vadd.f32 %v1587, %v2115
        %v2117 = vpop.f32.mrf.mxu0
        %2118 = vmatprep.mubr.bf16.mxu0 %v1500
        %2119 = vmatmul.mubr.bf16.gmra.mxu0 %v1491
        %v2120 = vpop.f32.mrf.mxu0
        %v2121 = vadd.f32 %v1587, %v2120
        %v2122 = vpop.f32.mrf.mxu0
        %v2123 = vpop.f32.mrf.mxu0
        %v2124 = vadd.f32 %v1587, %v2123
        %v2125 = vpop.f32.mrf.mxu0
        %2126 = vmatprep.mubr.bf16.mxu0 %v1503
        %2127 = vmatmul.mubr.bf16.gmra.mxu0 %v1495
        %v2128 = vpop.f32.mrf.mxu0
        %v2129 = vadd.f32 %v1587, %v2128
        %v2130 = vpop.f32.mrf.mxu0
        %v2131 = vpop.f32.mrf.mxu0
        %v2132 = vadd.f32 %v1587, %v2131
        %v2133 = vpop.f32.mrf.mxu0
        %2134 = vdwg.mxu0
        %2135 = vmatprep.subr.bf16.mxu0 0
        %2136 = vmatpush1.bf16.msra.mxu0 %v1756
        %2137 = vmatprep.subr.bf16.mxu0 0
        %2138 = vmatpush1.bf16.msra.mxu0 %v1755
        %2139 = vmatprep.subr.bf16.mxu0 0
        %2140 = vmatpush1.bf16.msra.mxu0 %v1754
        %2141 = vmatprep.subr.bf16.mxu0 0
        %2142 = vmatpush1.bf16.msra.mxu0 %v1753
        %2143 = vmatprep.subr.bf16.mxu0 0
        %2144 = vmatpush1.bf16.msra.mxu0 %v1752
        %2145 = vmatprep.subr.bf16.mxu0 0
        %2146 = vmatpush1.bf16.msra.mxu0 %v1751
        %2147 = vmatprep.subr.bf16.mxu0 0
        %2148 = vmatpush1.bf16.msra.mxu0 %v1750
        %2149 = vmatprep.subr.bf16.mxu0 0
        %2150 = vmatpush1.bf16.msra.mxu0 %v1749
        %2151 = vmatprep.subr.bf16.mxu0 0
        %2152 = vmatpush2.bf16.msra.mxu0 %v1764
        %2153 = vmatprep.subr.bf16.mxu0 0
        %2154 = vmatpush2.bf16.msra.mxu0 %v1763
        %2155 = vmatprep.subr.bf16.mxu0 0
        %2156 = vmatpush2.bf16.msra.mxu0 %v1762
        %2157 = vmatprep.subr.bf16.mxu0 0
        %2158 = vmatpush2.bf16.msra.mxu0 %v1761
        %2159 = vmatprep.subr.bf16.mxu0 0
        %2160 = vmatpush2.bf16.msra.mxu0 %v1760
        %2161 = vmatprep.subr.bf16.mxu0 0
        %2162 = vmatpush2.bf16.msra.mxu0 %v1759
        %2163 = vmatprep.subr.bf16.mxu0 0
        %2164 = vmatpush2.bf16.msra.mxu0 %v1758
        %2165 = vmatprep.subr.bf16.mxu0 0
        %2166 = vmatpush2.bf16.msra.mxu0 %v1757
        %2167 = vmatprep.mubr.bf16.mxu0 %v1401
        %2168 = vmatmul.mubr.bf16.gmra.mxu0 %v1400
        %v2169 = vpop.f32.mrf.mxu0
        %v2170 = vadd.f32 %v1921, %v2169
        %v2171 = vpop.f32.mrf.mxu0
        %v2172 = vpop.f32.mrf.mxu0
        %v2173 = vadd.f32 %v1924, %v2172
        %v2174 = vpop.f32.mrf.mxu0
        %2175 = vmatprep.mubr.bf16.mxu0 %v1406
        %2176 = vmatmul.mubr.bf16.gmra.mxu0 %v1405
        %v2177 = vpop.f32.mrf.mxu0
        %v2178 = vadd.f32 %v1929, %v2177
        %v2179 = vpop.f32.mrf.mxu0
        %v2180 = vpop.f32.mrf.mxu0
        %v2181 = vadd.f32 %v1932, %v2180
        %v2182 = vpop.f32.mrf.mxu0
        %2183 = vmatprep.mubr.bf16.mxu0 %v1411
        %2184 = vmatmul.mubr.bf16.gmra.mxu0 %v1410
        %v2185 = vpop.f32.mrf.mxu0
        %v2186 = vadd.f32 %v1937, %v2185
        %v2187 = vpop.f32.mrf.mxu0
        %v2188 = vpop.f32.mrf.mxu0
        %v2189 = vadd.f32 %v1940, %v2188
        %v2190 = vpop.f32.mrf.mxu0
        %2191 = vmatprep.mubr.bf16.mxu0 %v1415
        %2192 = vmatmul.mubr.bf16.gmra.mxu0 %v1414
        %v2193 = vpop.f32.mrf.mxu0
        %v2194 = vadd.f32 %v1945, %v2193
        %v2195 = vpop.f32.mrf.mxu0
        %v2196 = vpop.f32.mrf.mxu0
        %v2197 = vadd.f32 %v1948, %v2196
        %v2198 = vpop.f32.mrf.mxu0
        %2199 = vmatprep.mubr.bf16.mxu0 %v1419
        %2200 = vmatmul.mubr.bf16.gmra.mxu0 %v1418
        %v2201 = vpop.f32.mrf.mxu0
        %v2202 = vadd.f32 %v1953, %v2201
        %v2203 = vpop.f32.mrf.mxu0
        %v2204 = vpop.f32.mrf.mxu0
        %v2205 = vadd.f32 %v1956, %v2204
        %v2206 = vpop.f32.mrf.mxu0
        %2207 = vmatprep.mubr.bf16.mxu0 %v1423
        %2208 = vmatmul.mubr.bf16.gmra.mxu0 %v1422
        %v2209 = vpop.f32.mrf.mxu0
        %v2210 = vadd.f32 %v1961, %v2209
        %v2211 = vpop.f32.mrf.mxu0
        %v2212 = vpop.f32.mrf.mxu0
        %v2213 = vadd.f32 %v1964, %v2212
        %v2214 = vpop.f32.mrf.mxu0
        %2215 = vmatprep.mubr.bf16.mxu0 %v1427
        %2216 = vmatmul.mubr.bf16.gmra.mxu0 %v1426
        %v2217 = vpop.f32.mrf.mxu0
        %v2218 = vadd.f32 %v1969, %v2217
        %v2219 = vpop.f32.mrf.mxu0
        %v2220 = vpop.f32.mrf.mxu0
        %v2221 = vadd.f32 %v1972, %v2220
        %v2222 = vpop.f32.mrf.mxu0
        %2223 = vmatprep.mubr.bf16.mxu0 %v1431
        %2224 = vmatmul.mubr.bf16.gmra.mxu0 %v1430
        %v2225 = vpop.f32.mrf.mxu0
        %v2226 = vadd.f32 %v1977, %v2225
        %v2227 = vpop.f32.mrf.mxu0
        %v2228 = vpop.f32.mrf.mxu0
        %v2229 = vadd.f32 %v1980, %v2228
        %v2230 = vpop.f32.mrf.mxu0
        %2231 = vmatprep.mubr.bf16.mxu0 %v1435
        %2232 = vmatmul.mubr.bf16.gmra.mxu0 %v1434
        %v2233 = vpop.f32.mrf.mxu0
        %v2234 = vadd.f32 %v1985, %v2233
        %v2235 = vpop.f32.mrf.mxu0
        %v2236 = vpop.f32.mrf.mxu0
        %v2237 = vadd.f32 %v1988, %v2236
        %v2238 = vpop.f32.mrf.mxu0
        %2239 = vmatprep.mubr.bf16.mxu0 %v1439
        %2240 = vmatmul.mubr.bf16.gmra.mxu0 %v1438
        %v2241 = vpop.f32.mrf.mxu0
        %v2242 = vadd.f32 %v1993, %v2241
        %v2243 = vpop.f32.mrf.mxu0
        %v2244 = vpop.f32.mrf.mxu0
        %v2245 = vadd.f32 %v1996, %v2244
        %v2246 = vpop.f32.mrf.mxu0
        %2247 = vmatprep.mubr.bf16.mxu0 %v1443
        %2248 = vmatmul.mubr.bf16.gmra.mxu0 %v1442
        %v2249 = vpop.f32.mrf.mxu0
        %v2250 = vadd.f32 %v2001, %v2249
        %v2251 = vpop.f32.mrf.mxu0
        %v2252 = vpop.f32.mrf.mxu0
        %v2253 = vadd.f32 %v2004, %v2252
        %v2254 = vpop.f32.mrf.mxu0
        %2255 = vmatprep.mubr.bf16.mxu0 %v1447
        %2256 = vmatmul.mubr.bf16.gmra.mxu0 %v1446
        %v2257 = vpop.f32.mrf.mxu0
        %v2258 = vadd.f32 %v2009, %v2257
        %v2259 = vpop.f32.mrf.mxu0
        %v2260 = vpop.f32.mrf.mxu0
        %v2261 = vadd.f32 %v2012, %v2260
        %v2262 = vpop.f32.mrf.mxu0
        %2263 = vmatprep.mubr.bf16.mxu0 %v1451
        %2264 = vmatmul.mubr.bf16.gmra.mxu0 %v1450
        %v2265 = vpop.f32.mrf.mxu0
        %v2266 = vadd.f32 %v2017, %v2265
        %v2267 = vpop.f32.mrf.mxu0
        %v2268 = vpop.f32.mrf.mxu0
        %v2269 = vadd.f32 %v2020, %v2268
        %v2270 = vpop.f32.mrf.mxu0
        %2271 = vmatprep.mubr.bf16.mxu0 %v1455
        %2272 = vmatmul.mubr.bf16.gmra.mxu0 %v1454
        %v2273 = vpop.f32.mrf.mxu0
        %v2274 = vadd.f32 %v2025, %v2273
        %v2275 = vpop.f32.mrf.mxu0
        %v2276 = vpop.f32.mrf.mxu0
        %v2277 = vadd.f32 %v2028, %v2276
        %v2278 = vpop.f32.mrf.mxu0
        %2279 = vmatprep.mubr.bf16.mxu0 %v1459
        %2280 = vmatmul.mubr.bf16.gmra.mxu0 %v1458
        %v2281 = vpop.f32.mrf.mxu0
        %v2282 = vadd.f32 %v2033, %v2281
        %v2283 = vpop.f32.mrf.mxu0
        %v2284 = vpop.f32.mrf.mxu0
        %v2285 = vadd.f32 %v2036, %v2284
        %v2286 = vpop.f32.mrf.mxu0
        %2287 = vmatprep.mubr.bf16.mxu0 %v1463
        %2288 = vmatmul.mubr.bf16.gmra.mxu0 %v1462
        %v2289 = vpop.f32.mrf.mxu0
        %v2290 = vadd.f32 %v2041, %v2289
        %v2291 = vpop.f32.mrf.mxu0
        %v2292 = vpop.f32.mrf.mxu0
        %v2293 = vadd.f32 %v2044, %v2292
        %v2294 = vpop.f32.mrf.mxu0
        %2295 = vmatprep.mubr.bf16.mxu0 %v1467
        %2296 = vmatmul.mubr.bf16.gmra.mxu0 %v1466
        %v2297 = vpop.f32.mrf.mxu0
        %v2298 = vadd.f32 %v2049, %v2297
        %v2299 = vpop.f32.mrf.mxu0
        %v2300 = vpop.f32.mrf.mxu0
        %v2301 = vadd.f32 %v2052, %v2300
        %v2302 = vpop.f32.mrf.mxu0
        %2303 = vmatprep.mubr.bf16.mxu0 %v1471
        %2304 = vmatmul.mubr.bf16.gmra.mxu0 %v1470
        %v2305 = vpop.f32.mrf.mxu0
        %v2306 = vadd.f32 %v2057, %v2305
        %v2307 = vpop.f32.mrf.mxu0
        %v2308 = vpop.f32.mrf.mxu0
        %v2309 = vadd.f32 %v2060, %v2308
        %v2310 = vpop.f32.mrf.mxu0
        %2311 = vmatprep.mubr.bf16.mxu0 %v1475
        %2312 = vmatmul.mubr.bf16.gmra.mxu0 %v1474
        %v2313 = vpop.f32.mrf.mxu0
        %v2314 = vadd.f32 %v2065, %v2313
        %v2315 = vpop.f32.mrf.mxu0
        %v2316 = vpop.f32.mrf.mxu0
        %v2317 = vadd.f32 %v2068, %v2316
        %v2318 = vpop.f32.mrf.mxu0
        %2319 = vmatprep.mubr.bf16.mxu0 %v1479
        %2320 = vmatmul.mubr.bf16.gmra.mxu0 %v1478
        %v2321 = vpop.f32.mrf.mxu0
        %v2322 = vadd.f32 %v2073, %v2321
        %v2323 = vpop.f32.mrf.mxu0
        %v2324 = vpop.f32.mrf.mxu0
        %v2325 = vadd.f32 %v2076, %v2324
        %v2326 = vpop.f32.mrf.mxu0
        %2327 = vmatprep.mubr.bf16.mxu0 %v1483
        %2328 = vmatmul.mubr.bf16.gmra.mxu0 %v1482
        %v2329 = vpop.f32.mrf.mxu0
        %v2330 = vadd.f32 %v2081, %v2329
        %v2331 = vpop.f32.mrf.mxu0
        %v2332 = vpop.f32.mrf.mxu0
        %v2333 = vadd.f32 %v2084, %v2332
        %v2334 = vpop.f32.mrf.mxu0
        %2335 = vmatprep.mubr.bf16.mxu0 %v1487
        %2336 = vmatmul.mubr.bf16.gmra.mxu0 %v1486
        %v2337 = vpop.f32.mrf.mxu0
        %v2338 = vadd.f32 %v2089, %v2337
        %v2339 = vpop.f32.mrf.mxu0
        %v2340 = vpop.f32.mrf.mxu0
        %v2341 = vadd.f32 %v2092, %v2340
        %v2342 = vpop.f32.mrf.mxu0
        %2343 = vmatprep.mubr.bf16.mxu0 %v1491
        %2344 = vmatmul.mubr.bf16.gmra.mxu0 %v1490
        %v2345 = vpop.f32.mrf.mxu0
        %v2346 = vadd.f32 %v2097, %v2345
        %v2347 = vpop.f32.mrf.mxu0
        %v2348 = vpop.f32.mrf.mxu0
        %v2349 = vadd.f32 %v2100, %v2348
        %v2350 = vpop.f32.mrf.mxu0
        %2351 = vmatprep.mubr.bf16.mxu0 %v1495
        %2352 = vmatmul.mubr.bf16.gmra.mxu0 %v1494
        %v2353 = vpop.f32.mrf.mxu0
        %v2354 = vadd.f32 %v2105, %v2353
        %v2355 = vpop.f32.mrf.mxu0
        %v2356 = vpop.f32.mrf.mxu0
        %v2357 = vadd.f32 %v2108, %v2356
        %v2358 = vpop.f32.mrf.mxu0
        %2359 = vmatprep.mubr.bf16.mxu0 %v1398
        %2360 = vmatmul.mubr.bf16.gmra.mxu0 %v1498
        %v2361 = vpop.f32.mrf.mxu0
        %v2362 = vadd.f32 %v2113, %v2361
        %v2363 = vpop.f32.mrf.mxu0
        %v2364 = vpop.f32.mrf.mxu0
        %v2365 = vadd.f32 %v2116, %v2364
        %v2366 = vpop.f32.mrf.mxu0
        %2367 = vmatprep.mubr.bf16.mxu0 %v1403
        %2368 = vmatmul.mubr.bf16.gmra.mxu0 %v1501
        %v2369 = vpop.f32.mrf.mxu0
        %v2370 = vadd.f32 %v2121, %v2369
        %v2371 = vpop.f32.mrf.mxu0
        %v2372 = vpop.f32.mrf.mxu0
        %v2373 = vadd.f32 %v2124, %v2372
        %v2374 = vpop.f32.mrf.mxu0
        %2375 = vmatprep.mubr.bf16.mxu0 %v1408
        %2376 = vmatmul.mubr.bf16.gmra.mxu0 %v1504
        %v2377 = vpop.f32.mrf.mxu0
        %v2378 = vadd.f32 %v2129, %v2377
        %v2379 = vpop.f32.mrf.mxu0
        %v2380 = vpop.f32.mrf.mxu0
        %v2381 = vadd.f32 %v2132, %v2380
        %v2382 = vpop.f32.mrf.mxu0
        %2383 = vdwg.mxu0
        %2384 = vmatprep.subr.bf16.mxu0 0
        %2385 = vmatpush1.bf16.msra.mxu0 0
        %2386 = vmatprep.subr.bf16.mxu0 0
        %2387 = vmatpush1.bf16.msra.mxu0 0
        %2388 = vmatprep.subr.bf16.mxu0 0
        %2389 = vmatpush1.bf16.msra.mxu0 0
        %2390 = vmatprep.subr.bf16.mxu0 0
        %2391 = vmatpush1.bf16.msra.mxu0 0
        %2392 = vmatprep.subr.bf16.mxu0 0
        %2393 = vmatpush1.bf16.msra.mxu0 %v1768
        %2394 = vmatprep.subr.bf16.mxu0 0
        %2395 = vmatpush1.bf16.msra.mxu0 %v1767
        %2396 = vmatprep.subr.bf16.mxu0 0
        %2397 = vmatpush1.bf16.msra.mxu0 %v1766
        %2398 = vmatprep.subr.bf16.mxu0 0
        %2399 = vmatpush1.bf16.msra.mxu0 %v1765
        %2400 = vmatprep.subr.bf16.mxu0 0
        %2401 = vmatpush2.bf16.msra.mxu0 0
        %2402 = vmatprep.subr.bf16.mxu0 0
        %2403 = vmatpush2.bf16.msra.mxu0 0
        %2404 = vmatprep.subr.bf16.mxu0 0
        %2405 = vmatpush2.bf16.msra.mxu0 0
        %2406 = vmatprep.subr.bf16.mxu0 0
        %2407 = vmatpush2.bf16.msra.mxu0 0
        %2408 = vmatprep.subr.bf16.mxu0 0
        %2409 = vmatpush2.bf16.msra.mxu0 0
        %2410 = vmatprep.subr.bf16.mxu0 0
        %2411 = vmatpush2.bf16.msra.mxu0 0
        %2412 = vmatprep.subr.bf16.mxu0 0
        %2413 = vmatpush2.bf16.msra.mxu0 0
        %2414 = vmatprep.subr.bf16.mxu0 0
        %2415 = vmatpush2.bf16.msra.mxu0 0
        %2416 = vmatprep.mubr.bf16.mxu0 0
        %2417 = vmatmul.mubr.bf16.gmra.mxu0 %v1806
        %v2418 = vpop.f32.mrf.mxu0
        %v2419 = vadd.f32 %v2170, %v2418
        %v2420 = vpop.f32.mrf.mxu0
        %v2421 = vpop.f32.mrf.mxu0
        %v2422 = vadd.f32 %v2173, %v2421
        %v2423 = vpop.f32.mrf.mxu0
        %2424 = vmatprep.mubr.bf16.mxu0 0
        %2425 = vmatmul.mubr.bf16.gmra.mxu0 %v1809
        %v2426 = vpop.f32.mrf.mxu0
        %v2427 = vadd.f32 %v2178, %v2426
        %v2428 = vpop.f32.mrf.mxu0
        %v2429 = vpop.f32.mrf.mxu0
        %v2430 = vadd.f32 %v2181, %v2429
        %v2431 = vpop.f32.mrf.mxu0
        %2432 = vmatprep.mubr.bf16.mxu0 0
        %2433 = vmatmul.mubr.bf16.gmra.mxu0 %v1812
        %v2434 = vpop.f32.mrf.mxu0
        %v2435 = vadd.f32 %v2186, %v2434
        %v2436 = vpop.f32.mrf.mxu0
        %v2437 = vpop.f32.mrf.mxu0
        %v2438 = vadd.f32 %v2189, %v2437
        %v2439 = vpop.f32.mrf.mxu0
        %2440 = vmatprep.mubr.bf16.mxu0 0
        %2441 = vmatmul.mubr.bf16.gmra.mxu0 %v1815
        %v2442 = vpop.f32.mrf.mxu0
        %v2443 = vadd.f32 %v2194, %v2442
        %v2444 = vpop.f32.mrf.mxu0
        %v2445 = vpop.f32.mrf.mxu0
        %v2446 = vadd.f32 %v2197, %v2445
        %v2447 = vpop.f32.mrf.mxu0
        %2448 = vmatprep.mubr.bf16.mxu0 0
        %2449 = vmatmul.mubr.bf16.gmra.mxu0 %v1818
        %v2450 = vpop.f32.mrf.mxu0
        %v2451 = vadd.f32 %v2202, %v2450
        %v2452 = vpop.f32.mrf.mxu0
        %v2453 = vpop.f32.mrf.mxu0
        %v2454 = vadd.f32 %v2205, %v2453
        %v2455 = vpop.f32.mrf.mxu0
        %2456 = vmatprep.mubr.bf16.mxu0 0
        %2457 = vmatmul.mubr.bf16.gmra.mxu0 %v1821
        %v2458 = vpop.f32.mrf.mxu0
        %v2459 = vadd.f32 %v2210, %v2458
        %v2460 = vpop.f32.mrf.mxu0
        %v2461 = vpop.f32.mrf.mxu0
        %v2462 = vadd.f32 %v2213, %v2461
        %v2463 = vpop.f32.mrf.mxu0
        %2464 = vmatprep.mubr.bf16.mxu0 0
        %2465 = vmatmul.mubr.bf16.gmra.mxu0 %v1824
        %v2466 = vpop.f32.mrf.mxu0
        %v2467 = vadd.f32 %v2218, %v2466
        %v2468 = vpop.f32.mrf.mxu0
        %v2469 = vpop.f32.mrf.mxu0
        %v2470 = vadd.f32 %v2221, %v2469
        %v2471 = vpop.f32.mrf.mxu0
        %2472 = vmatprep.mubr.bf16.mxu0 0
        %2473 = vmatmul.mubr.bf16.gmra.mxu0 %v1827
        %v2474 = vpop.f32.mrf.mxu0
        %v2475 = vadd.f32 %v2226, %v2474
        %v2476 = vpop.f32.mrf.mxu0
        %v2477 = vpop.f32.mrf.mxu0
        %v2478 = vadd.f32 %v2229, %v2477
        %v2479 = vpop.f32.mrf.mxu0
        %2480 = vmatprep.mubr.bf16.mxu0 0
        %2481 = vmatmul.mubr.bf16.gmra.mxu0 %v1830
        %v2482 = vpop.f32.mrf.mxu0
        %v2483 = vadd.f32 %v2234, %v2482
        %v2484 = vpop.f32.mrf.mxu0
        %v2485 = vpop.f32.mrf.mxu0
        %v2486 = vadd.f32 %v2237, %v2485
        %v2487 = vpop.f32.mrf.mxu0
        %2488 = vmatprep.mubr.bf16.mxu0 0
        %2489 = vmatmul.mubr.bf16.gmra.mxu0 %v1833
        %v2490 = vpop.f32.mrf.mxu0
        %v2491 = vadd.f32 %v2242, %v2490
        %v2492 = vpop.f32.mrf.mxu0
        %v2493 = vpop.f32.mrf.mxu0
        %v2494 = vadd.f32 %v2245, %v2493
        %v2495 = vpop.f32.mrf.mxu0
        %2496 = vmatprep.mubr.bf16.mxu0 0
        %2497 = vmatmul.mubr.bf16.gmra.mxu0 %v1836
        %v2498 = vpop.f32.mrf.mxu0
        %v2499 = vadd.f32 %v2250, %v2498
        %v2500 = vpop.f32.mrf.mxu0
        %v2501 = vpop.f32.mrf.mxu0
        %v2502 = vadd.f32 %v2253, %v2501
        %v2503 = vpop.f32.mrf.mxu0
        %2504 = vmatprep.mubr.bf16.mxu0 0
        %2505 = vmatmul.mubr.bf16.gmra.mxu0 %v1839
        %v2506 = vpop.f32.mrf.mxu0
        %v2507 = vadd.f32 %v2258, %v2506
        %v2508 = vpop.f32.mrf.mxu0
        %v2509 = vpop.f32.mrf.mxu0
        %v2510 = vadd.f32 %v2261, %v2509
        %v2511 = vpop.f32.mrf.mxu0
        %2512 = vmatprep.mubr.bf16.mxu0 0
        %2513 = vmatmul.mubr.bf16.gmra.mxu0 %v1842
        %v2514 = vpop.f32.mrf.mxu0
        %v2515 = vadd.f32 %v2266, %v2514
        %v2516 = vpop.f32.mrf.mxu0
        %v2517 = vpop.f32.mrf.mxu0
        %v2518 = vadd.f32 %v2269, %v2517
        %v2519 = vpop.f32.mrf.mxu0
        %2520 = vmatprep.mubr.bf16.mxu0 0
        %2521 = vmatmul.mubr.bf16.gmra.mxu0 %v1845
        %v2522 = vpop.f32.mrf.mxu0
        %v2523 = vadd.f32 %v2274, %v2522
        %v2524 = vpop.f32.mrf.mxu0
        %v2525 = vpop.f32.mrf.mxu0
        %v2526 = vadd.f32 %v2277, %v2525
        %v2527 = vpop.f32.mrf.mxu0
        %2528 = vmatprep.mubr.bf16.mxu0 0
        %2529 = vmatmul.mubr.bf16.gmra.mxu0 %v1848
        %v2530 = vpop.f32.mrf.mxu0
        %v2531 = vadd.f32 %v2282, %v2530
        %v2532 = vpop.f32.mrf.mxu0
        %v2533 = vpop.f32.mrf.mxu0
        %v2534 = vadd.f32 %v2285, %v2533
        %v2535 = vpop.f32.mrf.mxu0
        %2536 = vmatprep.mubr.bf16.mxu0 0
        %2537 = vmatmul.mubr.bf16.gmra.mxu0 %v1851
        %v2538 = vpop.f32.mrf.mxu0
        %v2539 = vadd.f32 %v2290, %v2538
        %v2540 = vpop.f32.mrf.mxu0
        %v2541 = vpop.f32.mrf.mxu0
        %v2542 = vadd.f32 %v2293, %v2541
        %v2543 = vpop.f32.mrf.mxu0
        %2544 = vmatprep.mubr.bf16.mxu0 0
        %2545 = vmatmul.mubr.bf16.gmra.mxu0 %v1854
        %v2546 = vpop.f32.mrf.mxu0
        %v2547 = vadd.f32 %v2298, %v2546
        %v2548 = vpop.f32.mrf.mxu0
        %v2549 = vpop.f32.mrf.mxu0
        %v2550 = vadd.f32 %v2301, %v2549
        %v2551 = vpop.f32.mrf.mxu0
        %2552 = vmatprep.mubr.bf16.mxu0 0
        %2553 = vmatmul.mubr.bf16.gmra.mxu0 %v1857
        %v2554 = vpop.f32.mrf.mxu0
        %v2555 = vadd.f32 %v2306, %v2554
        %v2556 = vpop.f32.mrf.mxu0
        %v2557 = vpop.f32.mrf.mxu0
        %v2558 = vadd.f32 %v2309, %v2557
        %v2559 = vpop.f32.mrf.mxu0
        %2560 = vmatprep.mubr.bf16.mxu0 0
        %2561 = vmatmul.mubr.bf16.gmra.mxu0 %v1860
        %v2562 = vpop.f32.mrf.mxu0
        %v2563 = vadd.f32 %v2314, %v2562
        %v2564 = vpop.f32.mrf.mxu0
        %v2565 = vpop.f32.mrf.mxu0
        %v2566 = vadd.f32 %v2317, %v2565
        %v2567 = vpop.f32.mrf.mxu0
        %2568 = vmatprep.mubr.bf16.mxu0 0
        %2569 = vmatmul.mubr.bf16.gmra.mxu0 %v1863
        %v2570 = vpop.f32.mrf.mxu0
        %v2571 = vadd.f32 %v2322, %v2570
        %v2572 = vpop.f32.mrf.mxu0
        %v2573 = vpop.f32.mrf.mxu0
        %v2574 = vadd.f32 %v2325, %v2573
        %v2575 = vpop.f32.mrf.mxu0
        %2576 = vmatprep.mubr.bf16.mxu0 0
        %2577 = vmatmul.mubr.bf16.gmra.mxu0 %v1866
        %v2578 = vpop.f32.mrf.mxu0
        %v2579 = vadd.f32 %v2330, %v2578
        %v2580 = vpop.f32.mrf.mxu0
        %v2581 = vpop.f32.mrf.mxu0
        %v2582 = vadd.f32 %v2333, %v2581
        %v2583 = vpop.f32.mrf.mxu0
        %2584 = vmatprep.mubr.bf16.mxu0 0
        %2585 = vmatmul.mubr.bf16.gmra.mxu0 %v1869
        %v2586 = vpop.f32.mrf.mxu0
        %v2587 = vadd.f32 %v2338, %v2586
        %v2588 = vpop.f32.mrf.mxu0
        %v2589 = vpop.f32.mrf.mxu0
        %v2590 = vadd.f32 %v2341, %v2589
        %v2591 = vpop.f32.mrf.mxu0
        %2592 = vmatprep.mubr.bf16.mxu0 0
        %2593 = vmatmul.mubr.bf16.gmra.mxu0 %v1872
        %v2594 = vpop.f32.mrf.mxu0
        %v2595 = vadd.f32 %v2346, %v2594
        %v2596 = vpop.f32.mrf.mxu0
        %v2597 = vpop.f32.mrf.mxu0
        %v2598 = vadd.f32 %v2349, %v2597
        %v2599 = vpop.f32.mrf.mxu0
        %2600 = vmatprep.mubr.bf16.mxu0 0
        %2601 = vmatmul.mubr.bf16.gmra.mxu0 %v1875
        %v2602 = vpop.f32.mrf.mxu0
        %v2603 = vadd.f32 %v2354, %v2602
        %v2604 = vpop.f32.mrf.mxu0
        %v2605 = vpop.f32.mrf.mxu0
        %v2606 = vadd.f32 %v2357, %v2605
        %v2607 = vpop.f32.mrf.mxu0
        %2608 = vmatprep.mubr.bf16.mxu0 0
        %2609 = vmatmul.mubr.bf16.gmra.mxu0 %v1878
        %v2610 = vpop.f32.mrf.mxu0
        %v2611 = vadd.f32 %v2362, %v2610
        %v2612 = vpop.f32.mrf.mxu0
        %v2613 = vpop.f32.mrf.mxu0
        %v2614 = vadd.f32 %v2365, %v2613
        %v2615 = vpop.f32.mrf.mxu0
        %2616 = vmatprep.mubr.bf16.mxu0 0
        %2617 = vmatmul.mubr.bf16.gmra.mxu0 %v1881
        %v2618 = vpop.f32.mrf.mxu0
        %v2619 = vadd.f32 %v2370, %v2618
        %v2620 = vpop.f32.mrf.mxu0
        %v2621 = vpop.f32.mrf.mxu0
        %v2622 = vadd.f32 %v2373, %v2621
        %v2623 = vpop.f32.mrf.mxu0
        %2624 = vmatprep.mubr.bf16.mxu0 0
        %2625 = vmatmul.mubr.bf16.gmra.mxu0 %v1884
        %v2626 = vpop.f32.mrf.mxu0
        %v2627 = vadd.f32 %v2378, %v2626
        %v2628 = vpop.f32.mrf.mxu0
        %v2629 = vpop.f32.mrf.mxu0
        %v2630 = vadd.f32 %v2381, %v2629
        %v2631 = vpop.f32.mrf.mxu0
        %2632 = vdwg.mxu0
        %v2633 = vld [vmem:[%s3] sm:$0xff]
        %v2634 = vld [vmem:[%s3 + $0x8] sm:$0xff]
        %v2635 = vld [vmem:[%s3 + $0x10] sm:$0xff]
        %v2636 = vld [vmem:[%s3 + $0x18] sm:$0xff]
        %v2637 = vld [vmem:[%s3 + $0x20] sm:$0xff]
        %v2638 = vld [vmem:[%s3 + $0x28] sm:$0xff]
        %v2639 = vld [vmem:[%s3 + $0x30] sm:$0xff]
        %v2640 = vld [vmem:[%s3 + $0x38] sm:$0xff]
        %v2641 = vld [vmem:[%s3 + $0x40] sm:$0xff]
        %v2642 = vld [vmem:[%s3 + $0x48] sm:$0xff]
        %v2643 = vld [vmem:[%s3 + $0x50] sm:$0xff]
        %v2644 = vld [vmem:[%s3 + $0x58] sm:$0xff]
        %v2645 = vld [vmem:[%s3 + $0x60] sm:$0xff]
        %v2646 = vld [vmem:[%s3 + $0x68] sm:$0xff]
        %v2647 = vld [vmem:[%s3 + $0x70] sm:$0xff]
        %v2648 = vld [vmem:[%s3 + $0x78] sm:$0xff]
        %v2649 = vld [vmem:[%s3 + $0x80] sm:$0xff]
        %v2650 = vld [vmem:[%s3 + $0x88] sm:$0xff]
        %v2651 = vld [vmem:[%s3 + $0x90] sm:$0xff]
        %v2652 = vld [vmem:[%s3 + $0x98] sm:$0xff]
        %v2653 = vld [vmem:[%s3 + $0xa0] sm:$0xff]
        %v2654 = vld [vmem:[%s3 + $0xa8] sm:$0xff]
        %v2655 = vld [vmem:[%s3 + $0xb0] sm:$0xff]
        %v2656 = vld [vmem:[%s3 + $0xb8] sm:$0xff]
        %v2657 = vld [vmem:[%s3 + $0xc0] sm:$0xff]
        %v2658 = vld [vmem:[%s3 + $0xc8] sm:$0xff]
        %v2659 = vld [vmem:[%s3 + $0xd0] sm:$0xff]
        %v2660 = vld [vmem:[%s3 + $0xd8] sm:$0xff]
        %v2661 = vld [vmem:[%s3 + $0xe0] sm:$0xff]
        %v2662 = vld [vmem:[%s3 + $0xe8] sm:$0xff]
        %v2663 = vld [vmem:[%s3 + $0xf0] sm:$0xff]
        %v2664 = vld [vmem:[%s3 + $0xf8] sm:$0xff]
        %v2665 = vld [vmem:[%s3 + $0x100] sm:$0xff]
        %v2666 = vld [vmem:[%s3 + $0x108] sm:$0xff]
        %v2667 = vld [vmem:[%s3 + $0x110] sm:$0xff]
        %v2668 = vld [vmem:[%s3 + $0x118] sm:$0xff]
        %v2669 = vld [vmem:[%s3 + $0x120] sm:$0xff]
        %v2670 = vld [vmem:[%s3 + $0x128] sm:$0xff]
        %v2671 = vld [vmem:[%s3 + $0x130] sm:$0xff]
        %v2672 = vld [vmem:[%s3 + $0x138] sm:$0xff]
        %v2673 = vld [vmem:[%s3 + $0x140] sm:$0xff]
        %v2674 = vld [vmem:[%s3 + $0x148] sm:$0xff]
        %v2675 = vld [vmem:[%s3 + $0x150] sm:$0xff]
        %v2676 = vld [vmem:[%s3 + $0x158] sm:$0xff]
        %v2677 = vld [vmem:[%s3 + $0x160] sm:$0xff]
        %v2678 = vld [vmem:[%s3 + $0x168] sm:$0xff]
        %v2679 = vld [vmem:[%s3 + $0x170] sm:$0xff]
        %v2680 = vld [vmem:[%s3 + $0x178] sm:$0xff]
        %v2681 = vld [vmem:[%s3 + $0x180] sm:$0xff]
        %v2682 = vld [vmem:[%s3 + $0x188] sm:$0xff]
        %v2683 = vld [vmem:[%s3 + $0x190] sm:$0xff]
        %v2684 = vld [vmem:[%s3 + $0x198] sm:$0xff]
        %v2685 = vld [vmem:[%s3 + $0x1a0] sm:$0xff]
        %v2686 = vld [vmem:[%s3 + $0x1a8] sm:$0xff]
        %2688 = vset.pattern.permute.xlu0 0
        %2689 = vperm.xlu0 %2688, %v2633
        %v2690 = vpop.permute.xlu0 %2689
        %2693 = vset.pattern.permute.xlu0 0
        %2694 = vperm.xlu0 %2693, %v2634
        %v2695 = vpop.permute.xlu0 %2694
        %2698 = vset.pattern.permute.xlu0 0
        %2699 = vperm.xlu0 %2698, %v2635
        %v2700 = vpop.permute.xlu0 %2699
        %2703 = vset.pattern.permute.xlu0 0
        %2704 = vperm.xlu0 %2703, %v2636
        %v2705 = vpop.permute.xlu0 %2704
        %2708 = vset.pattern.permute.xlu0 0
        %2709 = vperm.xlu0 %2708, %v2637
        %v2710 = vpop.permute.xlu0 %2709
        %2713 = vset.pattern.permute.xlu0 0
        %2714 = vperm.xlu0 %2713, %v2638
        %v2715 = vpop.permute.xlu0 %2714
        %2718 = vset.pattern.permute.xlu0 0
        %2719 = vperm.xlu0 %2718, %v2639
        %v2720 = vpop.permute.xlu0 %2719
        %2723 = vset.pattern.permute.xlu0 0
        %2724 = vperm.xlu0 %2723, %v2640
        %v2725 = vpop.permute.xlu0 %2724
        %2728 = vset.pattern.permute.xlu0 0
        %2729 = vperm.xlu0 %2728, %v2641
        %v2730 = vpop.permute.xlu0 %2729
        %2733 = vset.pattern.permute.xlu0 0
        %2734 = vperm.xlu0 %2733, %v2642
        %v2735 = vpop.permute.xlu0 %2734
        %2738 = vset.pattern.permute.xlu0 0
        %2739 = vperm.xlu0 %2738, %v2643
        %v2740 = vpop.permute.xlu0 %2739
        %2743 = vset.pattern.permute.xlu0 0
        %2744 = vperm.xlu0 %2743, %v2644
        %v2745 = vpop.permute.xlu0 %2744
        %2748 = vset.pattern.permute.xlu0 0
        %2749 = vperm.xlu0 %2748, %v2645
        %v2750 = vpop.permute.xlu0 %2749
        %2753 = vset.pattern.permute.xlu0 0
        %2754 = vperm.xlu0 %2753, %v2646
        %v2755 = vpop.permute.xlu0 %2754
        %2758 = vset.pattern.permute.xlu0 0
        %2759 = vperm.xlu0 %2758, %v2647
        %v2760 = vpop.permute.xlu0 %2759
        %2763 = vset.pattern.permute.xlu0 0
        %2764 = vperm.xlu0 %2763, %v2648
        %v2765 = vpop.permute.xlu0 %2764
        %2768 = vset.pattern.permute.xlu0 0
        %2769 = vperm.xlu0 %2768, %v2649
        %v2770 = vpop.permute.xlu0 %2769
        %2773 = vset.pattern.permute.xlu0 0
        %2774 = vperm.xlu0 %2773, %v2650
        %v2775 = vpop.permute.xlu0 %2774
        %2778 = vset.pattern.permute.xlu0 0
        %2779 = vperm.xlu0 %2778, %v2651
        %v2780 = vpop.permute.xlu0 %2779
        %2783 = vset.pattern.permute.xlu0 0
        %2784 = vperm.xlu0 %2783, %v2652
        %v2785 = vpop.permute.xlu0 %2784
        %2788 = vset.pattern.permute.xlu0 0
        %2789 = vperm.xlu0 %2788, %v2653
        %v2790 = vpop.permute.xlu0 %2789
        %2793 = vset.pattern.permute.xlu0 0
        %2794 = vperm.xlu0 %2793, %v2654
        %v2795 = vpop.permute.xlu0 %2794
        %2798 = vset.pattern.permute.xlu0 0
        %2799 = vperm.xlu0 %2798, %v2655
        %v2800 = vpop.permute.xlu0 %2799
        %2803 = vset.pattern.permute.xlu0 0
        %2804 = vperm.xlu0 %2803, %v2656
        %v2805 = vpop.permute.xlu0 %2804
        %2808 = vset.pattern.permute.xlu0 0
        %2809 = vperm.xlu0 %2808, %v2657
        %v2810 = vpop.permute.xlu0 %2809
        %2813 = vset.pattern.permute.xlu0 0
        %2814 = vperm.xlu0 %2813, %v2658
        %v2815 = vpop.permute.xlu0 %2814
        %2818 = vset.pattern.permute.xlu0 0
        %2819 = vperm.xlu0 %2818, %v2659
        %v2820 = vpop.permute.xlu0 %2819
        %2823 = vset.pattern.permute.xlu0 0
        %2824 = vperm.xlu0 %2823, %v2660
        %v2825 = vpop.permute.xlu0 %2824
        %2828 = vset.pattern.permute.xlu0 0
        %2829 = vperm.xlu0 %2828, %v2661
        %v2830 = vpop.permute.xlu0 %2829
        %2833 = vset.pattern.permute.xlu0 0
        %2834 = vperm.xlu0 %2833, %v2662
        %v2835 = vpop.permute.xlu0 %2834
        %2838 = vset.pattern.permute.xlu0 0
        %2839 = vperm.xlu0 %2838, %v2663
        %v2840 = vpop.permute.xlu0 %2839
        %2843 = vset.pattern.permute.xlu0 0
        %2844 = vperm.xlu0 %2843, %v2664
        %v2845 = vpop.permute.xlu0 %2844
        %2848 = vset.pattern.permute.xlu0 0
        %2849 = vperm.xlu0 %2848, %v2665
        %v2850 = vpop.permute.xlu0 %2849
        %2853 = vset.pattern.permute.xlu0 0
        %2854 = vperm.xlu0 %2853, %v2666
        %v2855 = vpop.permute.xlu0 %2854
        %2858 = vset.pattern.permute.xlu0 0
        %2859 = vperm.xlu0 %2858, %v2667
        %v2860 = vpop.permute.xlu0 %2859
        %2863 = vset.pattern.permute.xlu0 0
        %2864 = vperm.xlu0 %2863, %v2668
        %v2865 = vpop.permute.xlu0 %2864
        %2868 = vset.pattern.permute.xlu0 0
        %2869 = vperm.xlu0 %2868, %v2669
        %v2870 = vpop.permute.xlu0 %2869
        %2873 = vset.pattern.permute.xlu0 0
        %2874 = vperm.xlu0 %2873, %v2670
        %v2875 = vpop.permute.xlu0 %2874
        %2878 = vset.pattern.permute.xlu0 0
        %2879 = vperm.xlu0 %2878, %v2671
        %v2880 = vpop.permute.xlu0 %2879
        %2883 = vset.pattern.permute.xlu0 0
        %2884 = vperm.xlu0 %2883, %v2672
        %v2885 = vpop.permute.xlu0 %2884
        %2888 = vset.pattern.permute.xlu0 0
        %2889 = vperm.xlu0 %2888, %v2673
        %v2890 = vpop.permute.xlu0 %2889
        %2893 = vset.pattern.permute.xlu0 0
        %2894 = vperm.xlu0 %2893, %v2674
        %v2895 = vpop.permute.xlu0 %2894
        %2898 = vset.pattern.permute.xlu0 0
        %2899 = vperm.xlu0 %2898, %v2675
        %v2900 = vpop.permute.xlu0 %2899
        %2903 = vset.pattern.permute.xlu0 0
        %2904 = vperm.xlu0 %2903, %v2676
        %v2905 = vpop.permute.xlu0 %2904
        %2908 = vset.pattern.permute.xlu0 0
        %2909 = vperm.xlu0 %2908, %v2677
        %v2910 = vpop.permute.xlu0 %2909
        %2913 = vset.pattern.permute.xlu0 0
        %2914 = vperm.xlu0 %2913, %v2678
        %v2915 = vpop.permute.xlu0 %2914
        %2918 = vset.pattern.permute.xlu0 0
        %2919 = vperm.xlu0 %2918, %v2679
        %v2920 = vpop.permute.xlu0 %2919
        %2923 = vset.pattern.permute.xlu0 0
        %2924 = vperm.xlu0 %2923, %v2680
        %v2925 = vpop.permute.xlu0 %2924
        %2928 = vset.pattern.permute.xlu0 0
        %2929 = vperm.xlu0 %2928, %v2681
        %v2930 = vpop.permute.xlu0 %2929
        %2933 = vset.pattern.permute.xlu0 0
        %2934 = vperm.xlu0 %2933, %v2682
        %v2935 = vpop.permute.xlu0 %2934
        %2938 = vset.pattern.permute.xlu0 0
        %2939 = vperm.xlu0 %2938, %v2683
        %v2940 = vpop.permute.xlu0 %2939
        %2943 = vset.pattern.permute.xlu0 0
        %2944 = vperm.xlu0 %2943, %v2684
        %v2945 = vpop.permute.xlu0 %2944
        %2948 = vset.pattern.permute.xlu0 0
        %2949 = vperm.xlu0 %2948, %v2685
        %v2950 = vpop.permute.xlu0 %2949
        %2953 = vset.pattern.permute.xlu0 0
        %2954 = vperm.xlu0 %2953, %v2686
        %v2955 = vpop.permute.xlu0 %2954
        %v2957 = vmul.f32 %v2419, %v2690
        %v2958 = vmul.f32 %v2422, %v2695
        %v2959 = vmul.f32 %v2427, %v2700
        %v2960 = vmul.f32 %v2430, %v2705
        %v2961 = vmul.f32 %v2435, %v2710
        %v2962 = vmul.f32 %v2438, %v2715
        %v2963 = vmul.f32 %v2443, %v2720
        %v2964 = vmul.f32 %v2446, %v2725
        %v2965 = vmul.f32 %v2451, %v2730
        %v2966 = vmul.f32 %v2454, %v2735
        %v2967 = vmul.f32 %v2459, %v2740
        %v2968 = vmul.f32 %v2462, %v2745
        %v2969 = vmul.f32 %v2467, %v2750
        %v2970 = vmul.f32 %v2470, %v2755
        %v2971 = vmul.f32 %v2475, %v2760
        %v2972 = vmul.f32 %v2478, %v2765
        %v2973 = vmul.f32 %v2483, %v2770
        %v2974 = vmul.f32 %v2486, %v2775
        %v2975 = vmul.f32 %v2491, %v2780
        %v2976 = vmul.f32 %v2494, %v2785
        %v2977 = vmul.f32 %v2499, %v2790
        %v2978 = vmul.f32 %v2502, %v2795
        %v2979 = vmul.f32 %v2507, %v2800
        %v2980 = vmul.f32 %v2510, %v2805
        %v2981 = vmul.f32 %v2515, %v2810
        %v2982 = vmul.f32 %v2518, %v2815
        %v2983 = vmul.f32 %v2523, %v2820
        %v2984 = vmul.f32 %v2526, %v2825
        %v2985 = vmul.f32 %v2531, %v2830
        %v2986 = vmul.f32 %v2534, %v2835
        %v2987 = vmul.f32 %v2539, %v2840
        %v2988 = vmul.f32 %v2542, %v2845
        %v2989 = vmul.f32 %v2547, %v2850
        %v2990 = vmul.f32 %v2550, %v2855
        %v2991 = vmul.f32 %v2555, %v2860
        %v2992 = vmul.f32 %v2558, %v2865
        %v2993 = vmul.f32 %v2563, %v2870
        %v2994 = vmul.f32 %v2566, %v2875
        %v2995 = vmul.f32 %v2571, %v2880
        %v2996 = vmul.f32 %v2574, %v2885
        %v2997 = vmul.f32 %v2579, %v2890
        %v2998 = vmul.f32 %v2582, %v2895
        %v2999 = vmul.f32 %v2587, %v2900
        %v3000 = vmul.f32 %v2590, %v2905
        %v3001 = vmul.f32 %v2595, %v2910
        %v3002 = vmul.f32 %v2598, %v2915
        %v3003 = vmul.f32 %v2603, %v2920
        %v3004 = vmul.f32 %v2606, %v2925
        %v3005 = vmul.f32 %v2611, %v2930
        %v3006 = vmul.f32 %v2614, %v2935
        %v3007 = vmul.f32 %v2619, %v2940
        %v3008 = vmul.f32 %v2622, %v2945
        %v3009 = vmul.f32 %v2627, %v2950
        %v3010 = vmul.f32 %v2630, %v2955
        %p3011 = scmp.eq.s32.totalorder %s309, 0
        %p3012 = scmp.eq.s32.totalorder %s309, 34
        %p3013 = scmp.eq.s32.totalorder %s309, 33
        %p3014 = scmp.ge.s32.totalorder %s309, 1
        %p3015 = scmp.le.s32.totalorder %s309, 32
        %p3016 = pnand %p3014, %p3015
        %p3017 = pneg %p3016
        %s3018 = ssub.s32 %s309, 1
        %p3019 = scmp.lt.s32.totalorder %s3018, 0
        %s3020 = ssub.s32 0, %s3018
        %s3021 = scalar_select %p3019, %s3020, %s3018
        %s3022 = sand.u32 %s3021, 1
        %s3023 = ssub.s32 0, %s3022
        %s3024 = scalar_select %p3019, %s3023, %s3022
        %p3025 = scmp.ne.s32.totalorder %s3024, 0
        %p3026 = scmp.lt.s32.totalorder %s3024, 0
        %p3027 = pnand %p3026, %p3025
        %p3028 = pneg %p3027
        %s3029 = sadd.s32 %s3024, 2
        %s3030 = scalar_select %p3028, %s3029, %s3024
        %p3031 = scmp.eq.s32.totalorder %s3030, 0
        %p3032 = pnand %p3017, %p3031
        %p3033 = pneg %p3032
        %p3034 = scmp.eq.s32.totalorder %s3030, 1
        %p3035 = pnand %p3017, %p3034
        %p3036 = pneg %p3035
        // Predicated region
        $region44: #{edsr_forward.1} parent=40 // pred_check
          %p3037 = pneg %p3011
        $region45: #{edsr_forward.1} parent=40 // pred_check_branch
          %3039 = sbr.rel (%p3037) target = $region47
        $region46: #{edsr_forward.1} parent=40 // pred_region
          %3040 = vst.msk [vmem:[#allocation4] sm:$0xff] %vm253, %v2957
          %3041 = vst.msk [vmem:[#allocation4 + $0x8] sm:$0xff] %vm253, %v2958
          %3042 = vst.msk [vmem:[#allocation4 + $0x10] sm:$0xff] %vm253, %v2959
          %3043 = vst.msk [vmem:[#allocation4 + $0x18] sm:$0xff] %vm253, %v2960
          %3044 = vst.msk [vmem:[#allocation4 + $0x20] sm:$0xff] %vm253, %v2961
          %3045 = vst.msk [vmem:[#allocation4 + $0x28] sm:$0xff] %vm253, %v2962
          %3046 = vst.msk [vmem:[#allocation4 + $0x30] sm:$0xff] %vm253, %v2963
          %3047 = vst.msk [vmem:[#allocation4 + $0x38] sm:$0xff] %vm253, %v2964
          %3048 = vst.msk [vmem:[#allocation4 + $0x40] sm:$0xff] %vm253, %v2965
          %3049 = vst.msk [vmem:[#allocation4 + $0x48] sm:$0xff] %vm253, %v2966
          %3050 = vst.msk [vmem:[#allocation4 + $0x50] sm:$0xff] %vm253, %v2967
          %3051 = vst.msk [vmem:[#allocation4 + $0x58] sm:$0xff] %vm253, %v2968
          %3052 = vst.msk [vmem:[#allocation4 + $0x60] sm:$0xff] %vm253, %v2969
          %3053 = vst.msk [vmem:[#allocation4 + $0x68] sm:$0xff] %vm253, %v2970
          %3054 = vst.msk [vmem:[#allocation4 + $0x70] sm:$0xff] %vm253, %v2971
          %3055 = vst.msk [vmem:[#allocation4 + $0x78] sm:$0xff] %vm253, %v2972
          %3056 = vst.msk [vmem:[#allocation4 + $0x80] sm:$0xff] %vm253, %v2973
          %3057 = vst.msk [vmem:[#allocation4 + $0x88] sm:$0xff] %vm253, %v2974
          %3058 = vst.msk [vmem:[#allocation4 + $0x90] sm:$0xff] %vm253, %v2975
          %3059 = vst.msk [vmem:[#allocation4 + $0x98] sm:$0xff] %vm253, %v2976
          %3060 = vst.msk [vmem:[#allocation4 + $0xa0] sm:$0xff] %vm253, %v2977
          %3061 = vst.msk [vmem:[#allocation4 + $0xa8] sm:$0xff] %vm253, %v2978
          %3062 = vst.msk [vmem:[#allocation4 + $0xb0] sm:$0xff] %vm253, %v2979
          %3063 = vst.msk [vmem:[#allocation4 + $0xb8] sm:$0xff] %vm253, %v2980
          %3064 = vst.msk [vmem:[#allocation4 + $0xc0] sm:$0xff] %vm253, %v2981
          %3065 = vst.msk [vmem:[#allocation4 + $0xc8] sm:$0xff] %vm253, %v2982
          %3066 = vst.msk [vmem:[#allocation4 + $0xd0] sm:$0xff] %vm253, %v2983
          %3067 = vst.msk [vmem:[#allocation4 + $0xd8] sm:$0xff] %vm253, %v2984
          %3068 = vst.msk [vmem:[#allocation4 + $0xe0] sm:$0xff] %vm253, %v2985
          %3069 = vst.msk [vmem:[#allocation4 + $0xe8] sm:$0xff] %vm253, %v2986
          %3070 = vst.msk [vmem:[#allocation4 + $0xf0] sm:$0xff] %vm253, %v2987
          %3071 = vst.msk [vmem:[#allocation4 + $0xf8] sm:$0xff] %vm253, %v2988
          %3072 = vst.msk [vmem:[#allocation4 + $0x100] sm:$0xff] %vm253, %v2989
          %3073 = vst.msk [vmem:[#allocation4 + $0x108] sm:$0xff] %vm253, %v2990
          %3074 = vst.msk [vmem:[#allocation4 + $0x110] sm:$0xff] %vm253, %v2991
          %3075 = vst.msk [vmem:[#allocation4 + $0x118] sm:$0xff] %vm253, %v2992
          %3076 = vst.msk [vmem:[#allocation4 + $0x120] sm:$0xff] %vm253, %v2993
          %3077 = vst.msk [vmem:[#allocation4 + $0x128] sm:$0xff] %vm253, %v2994
          %3078 = vst.msk [vmem:[#allocation4 + $0x130] sm:$0xff] %vm253, %v2995
          %3079 = vst.msk [vmem:[#allocation4 + $0x138] sm:$0xff] %vm253, %v2996
          %3080 = vst.msk [vmem:[#allocation4 + $0x140] sm:$0xff] %vm253, %v2997
          %3081 = vst.msk [vmem:[#allocation4 + $0x148] sm:$0xff] %vm253, %v2998
          %3082 = vst.msk [vmem:[#allocation4 + $0x150] sm:$0xff] %vm253, %v2999
          %3083 = vst.msk [vmem:[#allocation4 + $0x158] sm:$0xff] %vm253, %v3000
          %3084 = vst.msk [vmem:[#allocation4 + $0x160] sm:$0xff] %vm253, %v3001
          %3085 = vst.msk [vmem:[#allocation4 + $0x168] sm:$0xff] %vm253, %v3002
          %3086 = vst.msk [vmem:[#allocation4 + $0x170] sm:$0xff] %vm253, %v3003
          %3087 = vst.msk [vmem:[#allocation4 + $0x178] sm:$0xff] %vm253, %v3004
          %3088 = vst.msk [vmem:[#allocation4 + $0x180] sm:$0xff] %vm253, %v3005
          %3089 = vst.msk [vmem:[#allocation4 + $0x188] sm:$0xff] %vm253, %v3006
          %3090 = vst.msk [vmem:[#allocation4 + $0x190] sm:$0xff] %vm253, %v3007
          %3091 = vst.msk [vmem:[#allocation4 + $0x198] sm:$0xff] %vm253, %v3008
          %3092 = vst.msk [vmem:[#allocation4 + $0x1a0] sm:$0xff] %vm253, %v3009
          %3093 = vst.msk [vmem:[#allocation4 + $0x1a8] sm:$0xff] %vm253, %v3010
          %3094 = vst.msk [vmem:[#allocation3] sm:$0xff] %vm253, %v2957
          %3095 = vst.msk [vmem:[#allocation3 + $0x8] sm:$0xff] %vm253, %v2958
          %3096 = vst.msk [vmem:[#allocation3 + $0x10] sm:$0xff] %vm253, %v2959
          %3097 = vst.msk [vmem:[#allocation3 + $0x18] sm:$0xff] %vm253, %v2960
          %3098 = vst.msk [vmem:[#allocation3 + $0x20] sm:$0xff] %vm253, %v2961
          %3099 = vst.msk [vmem:[#allocation3 + $0x28] sm:$0xff] %vm253, %v2962
          %3100 = vst.msk [vmem:[#allocation3 + $0x30] sm:$0xff] %vm253, %v2963
          %3101 = vst.msk [vmem:[#allocation3 + $0x38] sm:$0xff] %vm253, %v2964
          %3102 = vst.msk [vmem:[#allocation3 + $0x40] sm:$0xff] %vm253, %v2965
          %3103 = vst.msk [vmem:[#allocation3 + $0x48] sm:$0xff] %vm253, %v2966
          %3104 = vst.msk [vmem:[#allocation3 + $0x50] sm:$0xff] %vm253, %v2967
          %3105 = vst.msk [vmem:[#allocation3 + $0x58] sm:$0xff] %vm253, %v2968
          %3106 = vst.msk [vmem:[#allocation3 + $0x60] sm:$0xff] %vm253, %v2969
          %3107 = vst.msk [vmem:[#allocation3 + $0x68] sm:$0xff] %vm253, %v2970
          %3108 = vst.msk [vmem:[#allocation3 + $0x70] sm:$0xff] %vm253, %v2971
          %3109 = vst.msk [vmem:[#allocation3 + $0x78] sm:$0xff] %vm253, %v2972
          %3110 = vst.msk [vmem:[#allocation3 + $0x80] sm:$0xff] %vm253, %v2973
          %3111 = vst.msk [vmem:[#allocation3 + $0x88] sm:$0xff] %vm253, %v2974
          %3112 = vst.msk [vmem:[#allocation3 + $0x90] sm:$0xff] %vm253, %v2975
          %3113 = vst.msk [vmem:[#allocation3 + $0x98] sm:$0xff] %vm253, %v2976
          %3114 = vst.msk [vmem:[#allocation3 + $0xa0] sm:$0xff] %vm253, %v2977
          %3115 = vst.msk [vmem:[#allocation3 + $0xa8] sm:$0xff] %vm253, %v2978
          %3116 = vst.msk [vmem:[#allocation3 + $0xb0] sm:$0xff] %vm253, %v2979
          %3117 = vst.msk [vmem:[#allocation3 + $0xb8] sm:$0xff] %vm253, %v2980
          %3118 = vst.msk [vmem:[#allocation3 + $0xc0] sm:$0xff] %vm253, %v2981
          %3119 = vst.msk [vmem:[#allocation3 + $0xc8] sm:$0xff] %vm253, %v2982
          %3120 = vst.msk [vmem:[#allocation3 + $0xd0] sm:$0xff] %vm253, %v2983
          %3121 = vst.msk [vmem:[#allocation3 + $0xd8] sm:$0xff] %vm253, %v2984
          %3122 = vst.msk [vmem:[#allocation3 + $0xe0] sm:$0xff] %vm253, %v2985
          %3123 = vst.msk [vmem:[#allocation3 + $0xe8] sm:$0xff] %vm253, %v2986
          %3124 = vst.msk [vmem:[#allocation3 + $0xf0] sm:$0xff] %vm253, %v2987
          %3125 = vst.msk [vmem:[#allocation3 + $0xf8] sm:$0xff] %vm253, %v2988
          %3126 = vst.msk [vmem:[#allocation3 + $0x100] sm:$0xff] %vm253, %v2989
          %3127 = vst.msk [vmem:[#allocation3 + $0x108] sm:$0xff] %vm253, %v2990
          %3128 = vst.msk [vmem:[#allocation3 + $0x110] sm:$0xff] %vm253, %v2991
          %3129 = vst.msk [vmem:[#allocation3 + $0x118] sm:$0xff] %vm253, %v2992
          %3130 = vst.msk [vmem:[#allocation3 + $0x120] sm:$0xff] %vm253, %v2993
          %3131 = vst.msk [vmem:[#allocation3 + $0x128] sm:$0xff] %vm253, %v2994
          %3132 = vst.msk [vmem:[#allocation3 + $0x130] sm:$0xff] %vm253, %v2995
          %3133 = vst.msk [vmem:[#allocation3 + $0x138] sm:$0xff] %vm253, %v2996
          %3134 = vst.msk [vmem:[#allocation3 + $0x140] sm:$0xff] %vm253, %v2997
          %3135 = vst.msk [vmem:[#allocation3 + $0x148] sm:$0xff] %vm253, %v2998
          %3136 = vst.msk [vmem:[#allocation3 + $0x150] sm:$0xff] %vm253, %v2999
          %3137 = vst.msk [vmem:[#allocation3 + $0x158] sm:$0xff] %vm253, %v3000
          %3138 = vst.msk [vmem:[#allocation3 + $0x160] sm:$0xff] %vm253, %v3001
          %3139 = vst.msk [vmem:[#allocation3 + $0x168] sm:$0xff] %vm253, %v3002
          %3140 = vst.msk [vmem:[#allocation3 + $0x170] sm:$0xff] %vm253, %v3003
          %3141 = vst.msk [vmem:[#allocation3 + $0x178] sm:$0xff] %vm253, %v3004
          %3142 = vst.msk [vmem:[#allocation3 + $0x180] sm:$0xff] %vm253, %v3005
          %3143 = vst.msk [vmem:[#allocation3 + $0x188] sm:$0xff] %vm253, %v3006
          %3144 = vst.msk [vmem:[#allocation3 + $0x190] sm:$0xff] %vm253, %v3007
          %3145 = vst.msk [vmem:[#allocation3 + $0x198] sm:$0xff] %vm253, %v3008
          %3146 = vst.msk [vmem:[#allocation3 + $0x1a0] sm:$0xff] %vm253, %v3009
          %3147 = vst.msk [vmem:[#allocation3 + $0x1a8] sm:$0xff] %vm253, %v3010
          %3148 = vst.msk [vmem:[#allocation2] sm:$0xff] %vm253, %v2957
          %3149 = vst.msk [vmem:[#allocation2 + $0x8] sm:$0xff] %vm253, %v2958
          %3150 = vst.msk [vmem:[#allocation2 + $0x10] sm:$0xff] %vm253, %v2959
          %3151 = vst.msk [vmem:[#allocation2 + $0x18] sm:$0xff] %vm253, %v2960
          %3152 = vst.msk [vmem:[#allocation2 + $0x20] sm:$0xff] %vm253, %v2961
          %3153 = vst.msk [vmem:[#allocation2 + $0x28] sm:$0xff] %vm253, %v2962
          %3154 = vst.msk [vmem:[#allocation2 + $0x30] sm:$0xff] %vm253, %v2963
          %3155 = vst.msk [vmem:[#allocation2 + $0x38] sm:$0xff] %vm253, %v2964
          %3156 = vst.msk [vmem:[#allocation2 + $0x40] sm:$0xff] %vm253, %v2965
          %3157 = vst.msk [vmem:[#allocation2 + $0x48] sm:$0xff] %vm253, %v2966
          %3158 = vst.msk [vmem:[#allocation2 + $0x50] sm:$0xff] %vm253, %v2967
          %3159 = vst.msk [vmem:[#allocation2 + $0x58] sm:$0xff] %vm253, %v2968
          %3160 = vst.msk [vmem:[#allocation2 + $0x60] sm:$0xff] %vm253, %v2969
          %3161 = vst.msk [vmem:[#allocation2 + $0x68] sm:$0xff] %vm253, %v2970
          %3162 = vst.msk [vmem:[#allocation2 + $0x70] sm:$0xff] %vm253, %v2971
          %3163 = vst.msk [vmem:[#allocation2 + $0x78] sm:$0xff] %vm253, %v2972
          %3164 = vst.msk [vmem:[#allocation2 + $0x80] sm:$0xff] %vm253, %v2973
          %3165 = vst.msk [vmem:[#allocation2 + $0x88] sm:$0xff] %vm253, %v2974
          %3166 = vst.msk [vmem:[#allocation2 + $0x90] sm:$0xff] %vm253, %v2975
          %3167 = vst.msk [vmem:[#allocation2 + $0x98] sm:$0xff] %vm253, %v2976
          %3168 = vst.msk [vmem:[#allocation2 + $0xa0] sm:$0xff] %vm253, %v2977
          %3169 = vst.msk [vmem:[#allocation2 + $0xa8] sm:$0xff] %vm253, %v2978
          %3170 = vst.msk [vmem:[#allocation2 + $0xb0] sm:$0xff] %vm253, %v2979
          %3171 = vst.msk [vmem:[#allocation2 + $0xb8] sm:$0xff] %vm253, %v2980
          %3172 = vst.msk [vmem:[#allocation2 + $0xc0] sm:$0xff] %vm253, %v2981
          %3173 = vst.msk [vmem:[#allocation2 + $0xc8] sm:$0xff] %vm253, %v2982
          %3174 = vst.msk [vmem:[#allocation2 + $0xd0] sm:$0xff] %vm253, %v2983
          %3175 = vst.msk [vmem:[#allocation2 + $0xd8] sm:$0xff] %vm253, %v2984
          %3176 = vst.msk [vmem:[#allocation2 + $0xe0] sm:$0xff] %vm253, %v2985
          %3177 = vst.msk [vmem:[#allocation2 + $0xe8] sm:$0xff] %vm253, %v2986
          %3178 = vst.msk [vmem:[#allocation2 + $0xf0] sm:$0xff] %vm253, %v2987
          %3179 = vst.msk [vmem:[#allocation2 + $0xf8] sm:$0xff] %vm253, %v2988
          %3180 = vst.msk [vmem:[#allocation2 + $0x100] sm:$0xff] %vm253, %v2989
          %3181 = vst.msk [vmem:[#allocation2 + $0x108] sm:$0xff] %vm253, %v2990
          %3182 = vst.msk [vmem:[#allocation2 + $0x110] sm:$0xff] %vm253, %v2991
          %3183 = vst.msk [vmem:[#allocation2 + $0x118] sm:$0xff] %vm253, %v2992
          %3184 = vst.msk [vmem:[#allocation2 + $0x120] sm:$0xff] %vm253, %v2993
          %3185 = vst.msk [vmem:[#allocation2 + $0x128] sm:$0xff] %vm253, %v2994
          %3186 = vst.msk [vmem:[#allocation2 + $0x130] sm:$0xff] %vm253, %v2995
          %3187 = vst.msk [vmem:[#allocation2 + $0x138] sm:$0xff] %vm253, %v2996
          %3188 = vst.msk [vmem:[#allocation2 + $0x140] sm:$0xff] %vm253, %v2997
          %3189 = vst.msk [vmem:[#allocation2 + $0x148] sm:$0xff] %vm253, %v2998
          %3190 = vst.msk [vmem:[#allocation2 + $0x150] sm:$0xff] %vm253, %v2999
          %3191 = vst.msk [vmem:[#allocation2 + $0x158] sm:$0xff] %vm253, %v3000
          %3192 = vst.msk [vmem:[#allocation2 + $0x160] sm:$0xff] %vm253, %v3001
          %3193 = vst.msk [vmem:[#allocation2 + $0x168] sm:$0xff] %vm253, %v3002
          %3194 = vst.msk [vmem:[#allocation2 + $0x170] sm:$0xff] %vm253, %v3003
          %3195 = vst.msk [vmem:[#allocation2 + $0x178] sm:$0xff] %vm253, %v3004
          %3196 = vst.msk [vmem:[#allocation2 + $0x180] sm:$0xff] %vm253, %v3005
          %3197 = vst.msk [vmem:[#allocation2 + $0x188] sm:$0xff] %vm253, %v3006
          %3198 = vst.msk [vmem:[#allocation2 + $0x190] sm:$0xff] %vm253, %v3007
          %3199 = vst.msk [vmem:[#allocation2 + $0x198] sm:$0xff] %vm253, %v3008
          %3200 = vst.msk [vmem:[#allocation2 + $0x1a0] sm:$0xff] %vm253, %v3009
          %3201 = vst.msk [vmem:[#allocation2 + $0x1a8] sm:$0xff] %vm253, %v3010
        $region47: #{edsr_forward.1} parent=40 // pred_fallthru
          _
        // Predicated region
        $region48: #{edsr_forward.1} parent=40 // pred_check
          _
        $region49: #{edsr_forward.1} parent=40 // pred_check_branch
          %3203 = sbr.rel (%p3032) target = $region51
        $region50: #{edsr_forward.1} parent=40 // pred_region
          %v3204 = vmax.f32 %v2957, 0.0
          %v3205 = vmax.f32 %v2958, 0.0
          %v3206 = vmax.f32 %v2959, 0.0
          %v3207 = vmax.f32 %v2960, 0.0
          %v3208 = vmax.f32 %v2961, 0.0
          %v3209 = vmax.f32 %v2962, 0.0
          %v3210 = vmax.f32 %v2963, 0.0
          %v3211 = vmax.f32 %v2964, 0.0
          %v3212 = vmax.f32 %v2965, 0.0
          %v3213 = vmax.f32 %v2966, 0.0
          %v3214 = vmax.f32 %v2967, 0.0
          %v3215 = vmax.f32 %v2968, 0.0
          %v3216 = vmax.f32 %v2969, 0.0
          %v3217 = vmax.f32 %v2970, 0.0
          %v3218 = vmax.f32 %v2971, 0.0
          %v3219 = vmax.f32 %v2972, 0.0
          %v3220 = vmax.f32 %v2973, 0.0
          %v3221 = vmax.f32 %v2974, 0.0
          %v3222 = vmax.f32 %v2975, 0.0
          %v3223 = vmax.f32 %v2976, 0.0
          %v3224 = vmax.f32 %v2977, 0.0
          %v3225 = vmax.f32 %v2978, 0.0
          %v3226 = vmax.f32 %v2979, 0.0
          %v3227 = vmax.f32 %v2980, 0.0
          %v3228 = vmax.f32 %v2981, 0.0
          %v3229 = vmax.f32 %v2982, 0.0
          %v3230 = vmax.f32 %v2983, 0.0
          %v3231 = vmax.f32 %v2984, 0.0
          %v3232 = vmax.f32 %v2985, 0.0
          %v3233 = vmax.f32 %v2986, 0.0
          %v3234 = vmax.f32 %v2987, 0.0
          %v3235 = vmax.f32 %v2988, 0.0
          %v3236 = vmax.f32 %v2989, 0.0
          %v3237 = vmax.f32 %v2990, 0.0
          %v3238 = vmax.f32 %v2991, 0.0
          %v3239 = vmax.f32 %v2992, 0.0
          %v3240 = vmax.f32 %v2993, 0.0
          %v3241 = vmax.f32 %v2994, 0.0
          %v3242 = vmax.f32 %v2995, 0.0
          %v3243 = vmax.f32 %v2996, 0.0
          %v3244 = vmax.f32 %v2997, 0.0
          %v3245 = vmax.f32 %v2998, 0.0
          %v3246 = vmax.f32 %v2999, 0.0
          %v3247 = vmax.f32 %v3000, 0.0
          %v3248 = vmax.f32 %v3001, 0.0
          %v3249 = vmax.f32 %v3002, 0.0
          %v3250 = vmax.f32 %v3003, 0.0
          %v3251 = vmax.f32 %v3004, 0.0
          %v3252 = vmax.f32 %v3005, 0.0
          %v3253 = vmax.f32 %v3006, 0.0
          %v3254 = vmax.f32 %v3007, 0.0
          %v3255 = vmax.f32 %v3008, 0.0
          %v3256 = vmax.f32 %v3009, 0.0
          %v3257 = vmax.f32 %v3010, 0.0
          %3258 = vst.msk [vmem:[#allocation2] sm:$0xff] %vm253, %v3204
          %3259 = vst.msk [vmem:[#allocation2 + $0x8] sm:$0xff] %vm253, %v3205
          %3260 = vst.msk [vmem:[#allocation2 + $0x10] sm:$0xff] %vm253, %v3206
          %3261 = vst.msk [vmem:[#allocation2 + $0x18] sm:$0xff] %vm253, %v3207
          %3262 = vst.msk [vmem:[#allocation2 + $0x20] sm:$0xff] %vm253, %v3208
          %3263 = vst.msk [vmem:[#allocation2 + $0x28] sm:$0xff] %vm253, %v3209
          %3264 = vst.msk [vmem:[#allocation2 + $0x30] sm:$0xff] %vm253, %v3210
          %3265 = vst.msk [vmem:[#allocation2 + $0x38] sm:$0xff] %vm253, %v3211
          %3266 = vst.msk [vmem:[#allocation2 + $0x40] sm:$0xff] %vm253, %v3212
          %3267 = vst.msk [vmem:[#allocation2 + $0x48] sm:$0xff] %vm253, %v3213
          %3268 = vst.msk [vmem:[#allocation2 + $0x50] sm:$0xff] %vm253, %v3214
          %3269 = vst.msk [vmem:[#allocation2 + $0x58] sm:$0xff] %vm253, %v3215
          %3270 = vst.msk [vmem:[#allocation2 + $0x60] sm:$0xff] %vm253, %v3216
          %3271 = vst.msk [vmem:[#allocation2 + $0x68] sm:$0xff] %vm253, %v3217
          %3272 = vst.msk [vmem:[#allocation2 + $0x70] sm:$0xff] %vm253, %v3218
          %3273 = vst.msk [vmem:[#allocation2 + $0x78] sm:$0xff] %vm253, %v3219
          %3274 = vst.msk [vmem:[#allocation2 + $0x80] sm:$0xff] %vm253, %v3220
          %3275 = vst.msk [vmem:[#allocation2 + $0x88] sm:$0xff] %vm253, %v3221
          %3276 = vst.msk [vmem:[#allocation2 + $0x90] sm:$0xff] %vm253, %v3222
          %3277 = vst.msk [vmem:[#allocation2 + $0x98] sm:$0xff] %vm253, %v3223
          %3278 = vst.msk [vmem:[#allocation2 + $0xa0] sm:$0xff] %vm253, %v3224
          %3279 = vst.msk [vmem:[#allocation2 + $0xa8] sm:$0xff] %vm253, %v3225
          %3280 = vst.msk [vmem:[#allocation2 + $0xb0] sm:$0xff] %vm253, %v3226
          %3281 = vst.msk [vmem:[#allocation2 + $0xb8] sm:$0xff] %vm253, %v3227
          %3282 = vst.msk [vmem:[#allocation2 + $0xc0] sm:$0xff] %vm253, %v3228
          %3283 = vst.msk [vmem:[#allocation2 + $0xc8] sm:$0xff] %vm253, %v3229
          %3284 = vst.msk [vmem:[#allocation2 + $0xd0] sm:$0xff] %vm253, %v3230
          %3285 = vst.msk [vmem:[#allocation2 + $0xd8] sm:$0xff] %vm253, %v3231
          %3286 = vst.msk [vmem:[#allocation2 + $0xe0] sm:$0xff] %vm253, %v3232
          %3287 = vst.msk [vmem:[#allocation2 + $0xe8] sm:$0xff] %vm253, %v3233
          %3288 = vst.msk [vmem:[#allocation2 + $0xf0] sm:$0xff] %vm253, %v3234
          %3289 = vst.msk [vmem:[#allocation2 + $0xf8] sm:$0xff] %vm253, %v3235
          %3290 = vst.msk [vmem:[#allocation2 + $0x100] sm:$0xff] %vm253, %v3236
          %3291 = vst.msk [vmem:[#allocation2 + $0x108] sm:$0xff] %vm253, %v3237
          %3292 = vst.msk [vmem:[#allocation2 + $0x110] sm:$0xff] %vm253, %v3238
          %3293 = vst.msk [vmem:[#allocation2 + $0x118] sm:$0xff] %vm253, %v3239
          %3294 = vst.msk [vmem:[#allocation2 + $0x120] sm:$0xff] %vm253, %v3240
          %3295 = vst.msk [vmem:[#allocation2 + $0x128] sm:$0xff] %vm253, %v3241
          %3296 = vst.msk [vmem:[#allocation2 + $0x130] sm:$0xff] %vm253, %v3242
          %3297 = vst.msk [vmem:[#allocation2 + $0x138] sm:$0xff] %vm253, %v3243
          %3298 = vst.msk [vmem:[#allocation2 + $0x140] sm:$0xff] %vm253, %v3244
          %3299 = vst.msk [vmem:[#allocation2 + $0x148] sm:$0xff] %vm253, %v3245
          %3300 = vst.msk [vmem:[#allocation2 + $0x150] sm:$0xff] %vm253, %v3246
          %3301 = vst.msk [vmem:[#allocation2 + $0x158] sm:$0xff] %vm253, %v3247
          %3302 = vst.msk [vmem:[#allocation2 + $0x160] sm:$0xff] %vm253, %v3248
          %3303 = vst.msk [vmem:[#allocation2 + $0x168] sm:$0xff] %vm253, %v3249
          %3304 = vst.msk [vmem:[#allocation2 + $0x170] sm:$0xff] %vm253, %v3250
          %3305 = vst.msk [vmem:[#allocation2 + $0x178] sm:$0xff] %vm253, %v3251
          %3306 = vst.msk [vmem:[#allocation2 + $0x180] sm:$0xff] %vm253, %v3252
          %3307 = vst.msk [vmem:[#allocation2 + $0x188] sm:$0xff] %vm253, %v3253
          %3308 = vst.msk [vmem:[#allocation2 + $0x190] sm:$0xff] %vm253, %v3254
          %3309 = vst.msk [vmem:[#allocation2 + $0x198] sm:$0xff] %vm253, %v3255
          %3310 = vst.msk [vmem:[#allocation2 + $0x1a0] sm:$0xff] %vm253, %v3256
          %3311 = vst.msk [vmem:[#allocation2 + $0x1a8] sm:$0xff] %vm253, %v3257
        $region51: #{edsr_forward.1} parent=40 // pred_fallthru
          _
        // Predicated region
        $region52: #{edsr_forward.1} parent=40 // pred_check
          _
        $region53: #{edsr_forward.1} parent=40 // pred_check_branch
          %3313 = sbr.rel (%p3035) target = $region55
        $region54: #{edsr_forward.1} parent=40 // pred_region
          %v3314 = vld [vmem:[#allocation3] sm:$0xff]
          %v3315 = vld [vmem:[#allocation3 + $0x8] sm:$0xff]
          %v3316 = vld [vmem:[#allocation3 + $0x10] sm:$0xff]
          %v3317 = vld [vmem:[#allocation3 + $0x18] sm:$0xff]
          %v3318 = vld [vmem:[#allocation3 + $0x20] sm:$0xff]
          %v3319 = vld [vmem:[#allocation3 + $0x28] sm:$0xff]
          %v3320 = vld [vmem:[#allocation3 + $0x30] sm:$0xff]
          %v3321 = vld [vmem:[#allocation3 + $0x38] sm:$0xff]
          %v3322 = vld [vmem:[#allocation3 + $0x40] sm:$0xff]
          %v3323 = vld [vmem:[#allocation3 + $0x48] sm:$0xff]
          %v3324 = vld [vmem:[#allocation3 + $0x50] sm:$0xff]
          %v3325 = vld [vmem:[#allocation3 + $0x58] sm:$0xff]
          %v3326 = vld [vmem:[#allocation3 + $0x60] sm:$0xff]
          %v3327 = vld [vmem:[#allocation3 + $0x68] sm:$0xff]
          %v3328 = vld [vmem:[#allocation3 + $0x70] sm:$0xff]
          %v3329 = vld [vmem:[#allocation3 + $0x78] sm:$0xff]
          %v3330 = vld [vmem:[#allocation3 + $0x80] sm:$0xff]
          %v3331 = vld [vmem:[#allocation3 + $0x88] sm:$0xff]
          %v3332 = vld [vmem:[#allocation3 + $0x90] sm:$0xff]
          %v3333 = vld [vmem:[#allocation3 + $0x98] sm:$0xff]
          %v3334 = vld [vmem:[#allocation3 + $0xa0] sm:$0xff]
          %v3335 = vld [vmem:[#allocation3 + $0xa8] sm:$0xff]
          %v3336 = vld [vmem:[#allocation3 + $0xb0] sm:$0xff]
          %v3337 = vld [vmem:[#allocation3 + $0xb8] sm:$0xff]
          %v3338 = vld [vmem:[#allocation3 + $0xc0] sm:$0xff]
          %v3339 = vld [vmem:[#allocation3 + $0xc8] sm:$0xff]
          %v3340 = vld [vmem:[#allocation3 + $0xd0] sm:$0xff]
          %v3341 = vld [vmem:[#allocation3 + $0xd8] sm:$0xff]
          %v3342 = vld [vmem:[#allocation3 + $0xe0] sm:$0xff]
          %v3343 = vld [vmem:[#allocation3 + $0xe8] sm:$0xff]
          %v3344 = vld [vmem:[#allocation3 + $0xf0] sm:$0xff]
          %v3345 = vld [vmem:[#allocation3 + $0xf8] sm:$0xff]
          %v3346 = vld [vmem:[#allocation3 + $0x100] sm:$0xff]
          %v3347 = vld [vmem:[#allocation3 + $0x108] sm:$0xff]
          %v3348 = vld [vmem:[#allocation3 + $0x110] sm:$0xff]
          %v3349 = vld [vmem:[#allocation3 + $0x118] sm:$0xff]
          %v3350 = vld [vmem:[#allocation3 + $0x120] sm:$0xff]
          %v3351 = vld [vmem:[#allocation3 + $0x128] sm:$0xff]
          %v3352 = vld [vmem:[#allocation3 + $0x130] sm:$0xff]
          %v3353 = vld [vmem:[#allocation3 + $0x138] sm:$0xff]
          %v3354 = vld [vmem:[#allocation3 + $0x140] sm:$0xff]
          %v3355 = vld [vmem:[#allocation3 + $0x148] sm:$0xff]
          %v3356 = vld [vmem:[#allocation3 + $0x150] sm:$0xff]
          %v3357 = vld [vmem:[#allocation3 + $0x158] sm:$0xff]
          %v3358 = vld [vmem:[#allocation3 + $0x160] sm:$0xff]
          %v3359 = vld [vmem:[#allocation3 + $0x168] sm:$0xff]
          %v3360 = vld [vmem:[#allocation3 + $0x170] sm:$0xff]
          %v3361 = vld [vmem:[#allocation3 + $0x178] sm:$0xff]
          %v3362 = vld [vmem:[#allocation3 + $0x180] sm:$0xff]
          %v3363 = vld [vmem:[#allocation3 + $0x188] sm:$0xff]
          %v3364 = vld [vmem:[#allocation3 + $0x190] sm:$0xff]
          %v3365 = vld [vmem:[#allocation3 + $0x198] sm:$0xff]
          %v3366 = vld [vmem:[#allocation3 + $0x1a0] sm:$0xff]
          %v3367 = vld [vmem:[#allocation3 + $0x1a8] sm:$0xff]
          %v3368 = vadd.f32 %v3314, %v2957
          %v3369 = vadd.f32 %v3315, %v2958
          %v3370 = vadd.f32 %v3316, %v2959
          %v3371 = vadd.f32 %v3317, %v2960
          %v3372 = vadd.f32 %v3318, %v2961
          %v3373 = vadd.f32 %v3319, %v2962
          %v3374 = vadd.f32 %v3320, %v2963
          %v3375 = vadd.f32 %v3321, %v2964
          %v3376 = vadd.f32 %v3322, %v2965
          %v3377 = vadd.f32 %v3323, %v2966
          %v3378 = vadd.f32 %v3324, %v2967
          %v3379 = vadd.f32 %v3325, %v2968
          %v3380 = vadd.f32 %v3326, %v2969
          %v3381 = vadd.f32 %v3327, %v2970
          %v3382 = vadd.f32 %v3328, %v2971
          %v3383 = vadd.f32 %v3329, %v2972
          %v3384 = vadd.f32 %v3330, %v2973
          %v3385 = vadd.f32 %v3331, %v2974
          %v3386 = vadd.f32 %v3332, %v2975
          %v3387 = vadd.f32 %v3333, %v2976
          %v3388 = vadd.f32 %v3334, %v2977
          %v3389 = vadd.f32 %v3335, %v2978
          %v3390 = vadd.f32 %v3336, %v2979
          %v3391 = vadd.f32 %v3337, %v2980
          %v3392 = vadd.f32 %v3338, %v2981
          %v3393 = vadd.f32 %v3339, %v2982
          %v3394 = vadd.f32 %v3340, %v2983
          %v3395 = vadd.f32 %v3341, %v2984
          %v3396 = vadd.f32 %v3342, %v2985
          %v3397 = vadd.f32 %v3343, %v2986
          %v3398 = vadd.f32 %v3344, %v2987
          %v3399 = vadd.f32 %v3345, %v2988
          %v3400 = vadd.f32 %v3346, %v2989
          %v3401 = vadd.f32 %v3347, %v2990
          %v3402 = vadd.f32 %v3348, %v2991
          %v3403 = vadd.f32 %v3349, %v2992
          %v3404 = vadd.f32 %v3350, %v2993
          %v3405 = vadd.f32 %v3351, %v2994
          %v3406 = vadd.f32 %v3352, %v2995
          %v3407 = vadd.f32 %v3353, %v2996
          %v3408 = vadd.f32 %v3354, %v2997
          %v3409 = vadd.f32 %v3355, %v2998
          %v3410 = vadd.f32 %v3356, %v2999
          %v3411 = vadd.f32 %v3357, %v3000
          %v3412 = vadd.f32 %v3358, %v3001
          %v3413 = vadd.f32 %v3359, %v3002
          %v3414 = vadd.f32 %v3360, %v3003
          %v3415 = vadd.f32 %v3361, %v3004
          %v3416 = vadd.f32 %v3362, %v3005
          %v3417 = vadd.f32 %v3363, %v3006
          %v3418 = vadd.f32 %v3364, %v3007
          %v3419 = vadd.f32 %v3365, %v3008
          %v3420 = vadd.f32 %v3366, %v3009
          %v3421 = vadd.f32 %v3367, %v3010
          %3422 = vst.msk [vmem:[#allocation3] sm:$0xff] %vm253, %v3368
          %3423 = vst.msk [vmem:[#allocation3 + $0x8] sm:$0xff] %vm253, %v3369
          %3424 = vst.msk [vmem:[#allocation3 + $0x10] sm:$0xff] %vm253, %v3370
          %3425 = vst.msk [vmem:[#allocation3 + $0x18] sm:$0xff] %vm253, %v3371
          %3426 = vst.msk [vmem:[#allocation3 + $0x20] sm:$0xff] %vm253, %v3372
          %3427 = vst.msk [vmem:[#allocation3 + $0x28] sm:$0xff] %vm253, %v3373
          %3428 = vst.msk [vmem:[#allocation3 + $0x30] sm:$0xff] %vm253, %v3374
          %3429 = vst.msk [vmem:[#allocation3 + $0x38] sm:$0xff] %vm253, %v3375
          %3430 = vst.msk [vmem:[#allocation3 + $0x40] sm:$0xff] %vm253, %v3376
          %3431 = vst.msk [vmem:[#allocation3 + $0x48] sm:$0xff] %vm253, %v3377
          %3432 = vst.msk [vmem:[#allocation3 + $0x50] sm:$0xff] %vm253, %v3378
          %3433 = vst.msk [vmem:[#allocation3 + $0x58] sm:$0xff] %vm253, %v3379
          %3434 = vst.msk [vmem:[#allocation3 + $0x60] sm:$0xff] %vm253, %v3380
          %3435 = vst.msk [vmem:[#allocation3 + $0x68] sm:$0xff] %vm253, %v3381
          %3436 = vst.msk [vmem:[#allocation3 + $0x70] sm:$0xff] %vm253, %v3382
          %3437 = vst.msk [vmem:[#allocation3 + $0x78] sm:$0xff] %vm253, %v3383
          %3438 = vst.msk [vmem:[#allocation3 + $0x80] sm:$0xff] %vm253, %v3384
          %3439 = vst.msk [vmem:[#allocation3 + $0x88] sm:$0xff] %vm253, %v3385
          %3440 = vst.msk [vmem:[#allocation3 + $0x90] sm:$0xff] %vm253, %v3386
          %3441 = vst.msk [vmem:[#allocation3 + $0x98] sm:$0xff] %vm253, %v3387
          %3442 = vst.msk [vmem:[#allocation3 + $0xa0] sm:$0xff] %vm253, %v3388
          %3443 = vst.msk [vmem:[#allocation3 + $0xa8] sm:$0xff] %vm253, %v3389
          %3444 = vst.msk [vmem:[#allocation3 + $0xb0] sm:$0xff] %vm253, %v3390
          %3445 = vst.msk [vmem:[#allocation3 + $0xb8] sm:$0xff] %vm253, %v3391
          %3446 = vst.msk [vmem:[#allocation3 + $0xc0] sm:$0xff] %vm253, %v3392
          %3447 = vst.msk [vmem:[#allocation3 + $0xc8] sm:$0xff] %vm253, %v3393
          %3448 = vst.msk [vmem:[#allocation3 + $0xd0] sm:$0xff] %vm253, %v3394
          %3449 = vst.msk [vmem:[#allocation3 + $0xd8] sm:$0xff] %vm253, %v3395
          %3450 = vst.msk [vmem:[#allocation3 + $0xe0] sm:$0xff] %vm253, %v3396
          %3451 = vst.msk [vmem:[#allocation3 + $0xe8] sm:$0xff] %vm253, %v3397
          %3452 = vst.msk [vmem:[#allocation3 + $0xf0] sm:$0xff] %vm253, %v3398
          %3453 = vst.msk [vmem:[#allocation3 + $0xf8] sm:$0xff] %vm253, %v3399
          %3454 = vst.msk [vmem:[#allocation3 + $0x100] sm:$0xff] %vm253, %v3400
          %3455 = vst.msk [vmem:[#allocation3 + $0x108] sm:$0xff] %vm253, %v3401
          %3456 = vst.msk [vmem:[#allocation3 + $0x110] sm:$0xff] %vm253, %v3402
          %3457 = vst.msk [vmem:[#allocation3 + $0x118] sm:$0xff] %vm253, %v3403
          %3458 = vst.msk [vmem:[#allocation3 + $0x120] sm:$0xff] %vm253, %v3404
          %3459 = vst.msk [vmem:[#allocation3 + $0x128] sm:$0xff] %vm253, %v3405
          %3460 = vst.msk [vmem:[#allocation3 + $0x130] sm:$0xff] %vm253, %v3406
          %3461 = vst.msk [vmem:[#allocation3 + $0x138] sm:$0xff] %vm253, %v3407
          %3462 = vst.msk [vmem:[#allocation3 + $0x140] sm:$0xff] %vm253, %v3408
          %3463 = vst.msk [vmem:[#allocation3 + $0x148] sm:$0xff] %vm253, %v3409
          %3464 = vst.msk [vmem:[#allocation3 + $0x150] sm:$0xff] %vm253, %v3410
          %3465 = vst.msk [vmem:[#allocation3 + $0x158] sm:$0xff] %vm253, %v3411
          %3466 = vst.msk [vmem:[#allocation3 + $0x160] sm:$0xff] %vm253, %v3412
          %3467 = vst.msk [vmem:[#allocation3 + $0x168] sm:$0xff] %vm253, %v3413
          %3468 = vst.msk [vmem:[#allocation3 + $0x170] sm:$0xff] %vm253, %v3414
          %3469 = vst.msk [vmem:[#allocation3 + $0x178] sm:$0xff] %vm253, %v3415
          %3470 = vst.msk [vmem:[#allocation3 + $0x180] sm:$0xff] %vm253, %v3416
          %3471 = vst.msk [vmem:[#allocation3 + $0x188] sm:$0xff] %vm253, %v3417
          %3472 = vst.msk [vmem:[#allocation3 + $0x190] sm:$0xff] %vm253, %v3418
          %3473 = vst.msk [vmem:[#allocation3 + $0x198] sm:$0xff] %vm253, %v3419
          %3474 = vst.msk [vmem:[#allocation3 + $0x1a0] sm:$0xff] %vm253, %v3420
          %3475 = vst.msk [vmem:[#allocation3 + $0x1a8] sm:$0xff] %vm253, %v3421
          %3476 = vst.msk [vmem:[#allocation2] sm:$0xff] %vm253, %v3368
          %3477 = vst.msk [vmem:[#allocation2 + $0x8] sm:$0xff] %vm253, %v3369
          %3478 = vst.msk [vmem:[#allocation2 + $0x10] sm:$0xff] %vm253, %v3370
          %3479 = vst.msk [vmem:[#allocation2 + $0x18] sm:$0xff] %vm253, %v3371
          %3480 = vst.msk [vmem:[#allocation2 + $0x20] sm:$0xff] %vm253, %v3372
          %3481 = vst.msk [vmem:[#allocation2 + $0x28] sm:$0xff] %vm253, %v3373
          %3482 = vst.msk [vmem:[#allocation2 + $0x30] sm:$0xff] %vm253, %v3374
          %3483 = vst.msk [vmem:[#allocation2 + $0x38] sm:$0xff] %vm253, %v3375
          %3484 = vst.msk [vmem:[#allocation2 + $0x40] sm:$0xff] %vm253, %v3376
          %3485 = vst.msk [vmem:[#allocation2 + $0x48] sm:$0xff] %vm253, %v3377
          %3486 = vst.msk [vmem:[#allocation2 + $0x50] sm:$0xff] %vm253, %v3378
          %3487 = vst.msk [vmem:[#allocation2 + $0x58] sm:$0xff] %vm253, %v3379
          %3488 = vst.msk [vmem:[#allocation2 + $0x60] sm:$0xff] %vm253, %v3380
          %3489 = vst.msk [vmem:[#allocation2 + $0x68] sm:$0xff] %vm253, %v3381
          %3490 = vst.msk [vmem:[#allocation2 + $0x70] sm:$0xff] %vm253, %v3382
          %3491 = vst.msk [vmem:[#allocation2 + $0x78] sm:$0xff] %vm253, %v3383
          %3492 = vst.msk [vmem:[#allocation2 + $0x80] sm:$0xff] %vm253, %v3384
          %3493 = vst.msk [vmem:[#allocation2 + $0x88] sm:$0xff] %vm253, %v3385
          %3494 = vst.msk [vmem:[#allocation2 + $0x90] sm:$0xff] %vm253, %v3386
          %3495 = vst.msk [vmem:[#allocation2 + $0x98] sm:$0xff] %vm253, %v3387
          %3496 = vst.msk [vmem:[#allocation2 + $0xa0] sm:$0xff] %vm253, %v3388
          %3497 = vst.msk [vmem:[#allocation2 + $0xa8] sm:$0xff] %vm253, %v3389
          %3498 = vst.msk [vmem:[#allocation2 + $0xb0] sm:$0xff] %vm253, %v3390
          %3499 = vst.msk [vmem:[#allocation2 + $0xb8] sm:$0xff] %vm253, %v3391
          %3500 = vst.msk [vmem:[#allocation2 + $0xc0] sm:$0xff] %vm253, %v3392
          %3501 = vst.msk [vmem:[#allocation2 + $0xc8] sm:$0xff] %vm253, %v3393
          %3502 = vst.msk [vmem:[#allocation2 + $0xd0] sm:$0xff] %vm253, %v3394
          %3503 = vst.msk [vmem:[#allocation2 + $0xd8] sm:$0xff] %vm253, %v3395
          %3504 = vst.msk [vmem:[#allocation2 + $0xe0] sm:$0xff] %vm253, %v3396
          %3505 = vst.msk [vmem:[#allocation2 + $0xe8] sm:$0xff] %vm253, %v3397
          %3506 = vst.msk [vmem:[#allocation2 + $0xf0] sm:$0xff] %vm253, %v3398
          %3507 = vst.msk [vmem:[#allocation2 + $0xf8] sm:$0xff] %vm253, %v3399
          %3508 = vst.msk [vmem:[#allocation2 + $0x100] sm:$0xff] %vm253, %v3400
          %3509 = vst.msk [vmem:[#allocation2 + $0x108] sm:$0xff] %vm253, %v3401
          %3510 = vst.msk [vmem:[#allocation2 + $0x110] sm:$0xff] %vm253, %v3402
          %3511 = vst.msk [vmem:[#allocation2 + $0x118] sm:$0xff] %vm253, %v3403
          %3512 = vst.msk [vmem:[#allocation2 + $0x120] sm:$0xff] %vm253, %v3404
          %3513 = vst.msk [vmem:[#allocation2 + $0x128] sm:$0xff] %vm253, %v3405
          %3514 = vst.msk [vmem:[#allocation2 + $0x130] sm:$0xff] %vm253, %v3406
          %3515 = vst.msk [vmem:[#allocation2 + $0x138] sm:$0xff] %vm253, %v3407
          %3516 = vst.msk [vmem:[#allocation2 + $0x140] sm:$0xff] %vm253, %v3408
          %3517 = vst.msk [vmem:[#allocation2 + $0x148] sm:$0xff] %vm253, %v3409
          %3518 = vst.msk [vmem:[#allocation2 + $0x150] sm:$0xff] %vm253, %v3410
          %3519 = vst.msk [vmem:[#allocation2 + $0x158] sm:$0xff] %vm253, %v3411
          %3520 = vst.msk [vmem:[#allocation2 + $0x160] sm:$0xff] %vm253, %v3412
          %3521 = vst.msk [vmem:[#allocation2 + $0x168] sm:$0xff] %vm253, %v3413
          %3522 = vst.msk [vmem:[#allocation2 + $0x170] sm:$0xff] %vm253, %v3414
          %3523 = vst.msk [vmem:[#allocation2 + $0x178] sm:$0xff] %vm253, %v3415
          %3524 = vst.msk [vmem:[#allocation2 + $0x180] sm:$0xff] %vm253, %v3416
          %3525 = vst.msk [vmem:[#allocation2 + $0x188] sm:$0xff] %vm253, %v3417
          %3526 = vst.msk [vmem:[#allocation2 + $0x190] sm:$0xff] %vm253, %v3418
          %3527 = vst.msk [vmem:[#allocation2 + $0x198] sm:$0xff] %vm253, %v3419
          %3528 = vst.msk [vmem:[#allocation2 + $0x1a0] sm:$0xff] %vm253, %v3420
          %3529 = vst.msk [vmem:[#allocation2 + $0x1a8] sm:$0xff] %vm253, %v3421
        $region55: #{edsr_forward.1} parent=40 // pred_fallthru
          _
        // Predicated region
        $region56: #{edsr_forward.1} parent=40 // pred_check
          %p3530 = pneg %p3013
        $region57: #{edsr_forward.1} parent=40 // pred_check_branch
          %3532 = sbr.rel (%p3530) target = $region59
        $region58: #{edsr_forward.1} parent=40 // pred_region
          %v3533 = vld [vmem:[#allocation4] sm:$0xff]
          %v3534 = vld [vmem:[#allocation4 + $0x8] sm:$0xff]
          %v3535 = vld [vmem:[#allocation4 + $0x10] sm:$0xff]
          %v3536 = vld [vmem:[#allocation4 + $0x18] sm:$0xff]
          %v3537 = vld [vmem:[#allocation4 + $0x20] sm:$0xff]
          %v3538 = vld [vmem:[#allocation4 + $0x28] sm:$0xff]
          %v3539 = vld [vmem:[#allocation4 + $0x30] sm:$0xff]
          %v3540 = vld [vmem:[#allocation4 + $0x38] sm:$0xff]
          %v3541 = vld [vmem:[#allocation4 + $0x40] sm:$0xff]
          %v3542 = vld [vmem:[#allocation4 + $0x48] sm:$0xff]
          %v3543 = vld [vmem:[#allocation4 + $0x50] sm:$0xff]
          %v3544 = vld [vmem:[#allocation4 + $0x58] sm:$0xff]
          %v3545 = vld [vmem:[#allocation4 + $0x60] sm:$0xff]
          %v3546 = vld [vmem:[#allocation4 + $0x68] sm:$0xff]
          %v3547 = vld [vmem:[#allocation4 + $0x70] sm:$0xff]
          %v3548 = vld [vmem:[#allocation4 + $0x78] sm:$0xff]
          %v3549 = vld [vmem:[#allocation4 + $0x80] sm:$0xff]
          %v3550 = vld [vmem:[#allocation4 + $0x88] sm:$0xff]
          %v3551 = vld [vmem:[#allocation4 + $0x90] sm:$0xff]
          %v3552 = vld [vmem:[#allocation4 + $0x98] sm:$0xff]
          %v3553 = vld [vmem:[#allocation4 + $0xa0] sm:$0xff]
          %v3554 = vld [vmem:[#allocation4 + $0xa8] sm:$0xff]
          %v3555 = vld [vmem:[#allocation4 + $0xb0] sm:$0xff]
          %v3556 = vld [vmem:[#allocation4 + $0xb8] sm:$0xff]
          %v3557 = vld [vmem:[#allocation4 + $0xc0] sm:$0xff]
          %v3558 = vld [vmem:[#allocation4 + $0xc8] sm:$0xff]
          %v3559 = vld [vmem:[#allocation4 + $0xd0] sm:$0xff]
          %v3560 = vld [vmem:[#allocation4 + $0xd8] sm:$0xff]
          %v3561 = vld [vmem:[#allocation4 + $0xe0] sm:$0xff]
          %v3562 = vld [vmem:[#allocation4 + $0xe8] sm:$0xff]
          %v3563 = vld [vmem:[#allocation4 + $0xf0] sm:$0xff]
          %v3564 = vld [vmem:[#allocation4 + $0xf8] sm:$0xff]
          %v3565 = vld [vmem:[#allocation4 + $0x100] sm:$0xff]
          %v3566 = vld [vmem:[#allocation4 + $0x108] sm:$0xff]
          %v3567 = vld [vmem:[#allocation4 + $0x110] sm:$0xff]
          %v3568 = vld [vmem:[#allocation4 + $0x118] sm:$0xff]
          %v3569 = vld [vmem:[#allocation4 + $0x120] sm:$0xff]
          %v3570 = vld [vmem:[#allocation4 + $0x128] sm:$0xff]
          %v3571 = vld [vmem:[#allocation4 + $0x130] sm:$0xff]
          %v3572 = vld [vmem:[#allocation4 + $0x138] sm:$0xff]
          %v3573 = vld [vmem:[#allocation4 + $0x140] sm:$0xff]
          %v3574 = vld [vmem:[#allocation4 + $0x148] sm:$0xff]
          %v3575 = vld [vmem:[#allocation4 + $0x150] sm:$0xff]
          %v3576 = vld [vmem:[#allocation4 + $0x158] sm:$0xff]
          %v3577 = vld [vmem:[#allocation4 + $0x160] sm:$0xff]
          %v3578 = vld [vmem:[#allocation4 + $0x168] sm:$0xff]
          %v3579 = vld [vmem:[#allocation4 + $0x170] sm:$0xff]
          %v3580 = vld [vmem:[#allocation4 + $0x178] sm:$0xff]
          %v3581 = vld [vmem:[#allocation4 + $0x180] sm:$0xff]
          %v3582 = vld [vmem:[#allocation4 + $0x188] sm:$0xff]
          %v3583 = vld [vmem:[#allocation4 + $0x190] sm:$0xff]
          %v3584 = vld [vmem:[#allocation4 + $0x198] sm:$0xff]
          %v3585 = vld [vmem:[#allocation4 + $0x1a0] sm:$0xff]
          %v3586 = vld [vmem:[#allocation4 + $0x1a8] sm:$0xff]
          %v3587 = vadd.f32 %v3533, %v2957
          %v3588 = vadd.f32 %v3534, %v2958
          %v3589 = vadd.f32 %v3535, %v2959
          %v3590 = vadd.f32 %v3536, %v2960
          %v3591 = vadd.f32 %v3537, %v2961
          %v3592 = vadd.f32 %v3538, %v2962
          %v3593 = vadd.f32 %v3539, %v2963
          %v3594 = vadd.f32 %v3540, %v2964
          %v3595 = vadd.f32 %v3541, %v2965
          %v3596 = vadd.f32 %v3542, %v2966
          %v3597 = vadd.f32 %v3543, %v2967
          %v3598 = vadd.f32 %v3544, %v2968
          %v3599 = vadd.f32 %v3545, %v2969
          %v3600 = vadd.f32 %v3546, %v2970
          %v3601 = vadd.f32 %v3547, %v2971
          %v3602 = vadd.f32 %v3548, %v2972
          %v3603 = vadd.f32 %v3549, %v2973
          %v3604 = vadd.f32 %v3550, %v2974
          %v3605 = vadd.f32 %v3551, %v2975
          %v3606 = vadd.f32 %v3552, %v2976
          %v3607 = vadd.f32 %v3553, %v2977
          %v3608 = vadd.f32 %v3554, %v2978
          %v3609 = vadd.f32 %v3555, %v2979
          %v3610 = vadd.f32 %v3556, %v2980
          %v3611 = vadd.f32 %v3557, %v2981
          %v3612 = vadd.f32 %v3558, %v2982
          %v3613 = vadd.f32 %v3559, %v2983
          %v3614 = vadd.f32 %v3560, %v2984
          %v3615 = vadd.f32 %v3561, %v2985
          %v3616 = vadd.f32 %v3562, %v2986
          %v3617 = vadd.f32 %v3563, %v2987
          %v3618 = vadd.f32 %v3564, %v2988
          %v3619 = vadd.f32 %v3565, %v2989
          %v3620 = vadd.f32 %v3566, %v2990
          %v3621 = vadd.f32 %v3567, %v2991
          %v3622 = vadd.f32 %v3568, %v2992
          %v3623 = vadd.f32 %v3569, %v2993
          %v3624 = vadd.f32 %v3570, %v2994
          %v3625 = vadd.f32 %v3571, %v2995
          %v3626 = vadd.f32 %v3572, %v2996
          %v3627 = vadd.f32 %v3573, %v2997
          %v3628 = vadd.f32 %v3574, %v2998
          %v3629 = vadd.f32 %v3575, %v2999
          %v3630 = vadd.f32 %v3576, %v3000
          %v3631 = vadd.f32 %v3577, %v3001
          %v3632 = vadd.f32 %v3578, %v3002
          %v3633 = vadd.f32 %v3579, %v3003
          %v3634 = vadd.f32 %v3580, %v3004
          %v3635 = vadd.f32 %v3581, %v3005
          %v3636 = vadd.f32 %v3582, %v3006
          %v3637 = vadd.f32 %v3583, %v3007
          %v3638 = vadd.f32 %v3584, %v3008
          %v3639 = vadd.f32 %v3585, %v3009
          %v3640 = vadd.f32 %v3586, %v3010
          %3641 = vst.msk [vmem:[#allocation2] sm:$0xff] %vm253, %v3587
          %3642 = vst.msk [vmem:[#allocation2 + $0x8] sm:$0xff] %vm253, %v3588
          %3643 = vst.msk [vmem:[#allocation2 + $0x10] sm:$0xff] %vm253, %v3589
          %3644 = vst.msk [vmem:[#allocation2 + $0x18] sm:$0xff] %vm253, %v3590
          %3645 = vst.msk [vmem:[#allocation2 + $0x20] sm:$0xff] %vm253, %v3591
          %3646 = vst.msk [vmem:[#allocation2 + $0x28] sm:$0xff] %vm253, %v3592
          %3647 = vst.msk [vmem:[#allocation2 + $0x30] sm:$0xff] %vm253, %v3593
          %3648 = vst.msk [vmem:[#allocation2 + $0x38] sm:$0xff] %vm253, %v3594
          %3649 = vst.msk [vmem:[#allocation2 + $0x40] sm:$0xff] %vm253, %v3595
          %3650 = vst.msk [vmem:[#allocation2 + $0x48] sm:$0xff] %vm253, %v3596
          %3651 = vst.msk [vmem:[#allocation2 + $0x50] sm:$0xff] %vm253, %v3597
          %3652 = vst.msk [vmem:[#allocation2 + $0x58] sm:$0xff] %vm253, %v3598
          %3653 = vst.msk [vmem:[#allocation2 + $0x60] sm:$0xff] %vm253, %v3599
          %3654 = vst.msk [vmem:[#allocation2 + $0x68] sm:$0xff] %vm253, %v3600
          %3655 = vst.msk [vmem:[#allocation2 + $0x70] sm:$0xff] %vm253, %v3601
          %3656 = vst.msk [vmem:[#allocation2 + $0x78] sm:$0xff] %vm253, %v3602
          %3657 = vst.msk [vmem:[#allocation2 + $0x80] sm:$0xff] %vm253, %v3603
          %3658 = vst.msk [vmem:[#allocation2 + $0x88] sm:$0xff] %vm253, %v3604
          %3659 = vst.msk [vmem:[#allocation2 + $0x90] sm:$0xff] %vm253, %v3605
          %3660 = vst.msk [vmem:[#allocation2 + $0x98] sm:$0xff] %vm253, %v3606
          %3661 = vst.msk [vmem:[#allocation2 + $0xa0] sm:$0xff] %vm253, %v3607
          %3662 = vst.msk [vmem:[#allocation2 + $0xa8] sm:$0xff] %vm253, %v3608
          %3663 = vst.msk [vmem:[#allocation2 + $0xb0] sm:$0xff] %vm253, %v3609
          %3664 = vst.msk [vmem:[#allocation2 + $0xb8] sm:$0xff] %vm253, %v3610
          %3665 = vst.msk [vmem:[#allocation2 + $0xc0] sm:$0xff] %vm253, %v3611
          %3666 = vst.msk [vmem:[#allocation2 + $0xc8] sm:$0xff] %vm253, %v3612
          %3667 = vst.msk [vmem:[#allocation2 + $0xd0] sm:$0xff] %vm253, %v3613
          %3668 = vst.msk [vmem:[#allocation2 + $0xd8] sm:$0xff] %vm253, %v3614
          %3669 = vst.msk [vmem:[#allocation2 + $0xe0] sm:$0xff] %vm253, %v3615
          %3670 = vst.msk [vmem:[#allocation2 + $0xe8] sm:$0xff] %vm253, %v3616
          %3671 = vst.msk [vmem:[#allocation2 + $0xf0] sm:$0xff] %vm253, %v3617
          %3672 = vst.msk [vmem:[#allocation2 + $0xf8] sm:$0xff] %vm253, %v3618
          %3673 = vst.msk [vmem:[#allocation2 + $0x100] sm:$0xff] %vm253, %v3619
          %3674 = vst.msk [vmem:[#allocation2 + $0x108] sm:$0xff] %vm253, %v3620
          %3675 = vst.msk [vmem:[#allocation2 + $0x110] sm:$0xff] %vm253, %v3621
          %3676 = vst.msk [vmem:[#allocation2 + $0x118] sm:$0xff] %vm253, %v3622
          %3677 = vst.msk [vmem:[#allocation2 + $0x120] sm:$0xff] %vm253, %v3623
          %3678 = vst.msk [vmem:[#allocation2 + $0x128] sm:$0xff] %vm253, %v3624
          %3679 = vst.msk [vmem:[#allocation2 + $0x130] sm:$0xff] %vm253, %v3625
          %3680 = vst.msk [vmem:[#allocation2 + $0x138] sm:$0xff] %vm253, %v3626
          %3681 = vst.msk [vmem:[#allocation2 + $0x140] sm:$0xff] %vm253, %v3627
          %3682 = vst.msk [vmem:[#allocation2 + $0x148] sm:$0xff] %vm253, %v3628
          %3683 = vst.msk [vmem:[#allocation2 + $0x150] sm:$0xff] %vm253, %v3629
          %3684 = vst.msk [vmem:[#allocation2 + $0x158] sm:$0xff] %vm253, %v3630
          %3685 = vst.msk [vmem:[#allocation2 + $0x160] sm:$0xff] %vm253, %v3631
          %3686 = vst.msk [vmem:[#allocation2 + $0x168] sm:$0xff] %vm253, %v3632
          %3687 = vst.msk [vmem:[#allocation2 + $0x170] sm:$0xff] %vm253, %v3633
          %3688 = vst.msk [vmem:[#allocation2 + $0x178] sm:$0xff] %vm253, %v3634
          %3689 = vst.msk [vmem:[#allocation2 + $0x180] sm:$0xff] %vm253, %v3635
          %3690 = vst.msk [vmem:[#allocation2 + $0x188] sm:$0xff] %vm253, %v3636
          %3691 = vst.msk [vmem:[#allocation2 + $0x190] sm:$0xff] %vm253, %v3637
          %3692 = vst.msk [vmem:[#allocation2 + $0x198] sm:$0xff] %vm253, %v3638
          %3693 = vst.msk [vmem:[#allocation2 + $0x1a0] sm:$0xff] %vm253, %v3639
          %3694 = vst.msk [vmem:[#allocation2 + $0x1a8] sm:$0xff] %vm253, %v3640
        $region59: #{edsr_forward.1} parent=40 // pred_fallthru
          _
        // Predicated region
        $region60: #{edsr_forward.1} parent=40 // pred_check
          %p3695 = pneg %p3012
        $region61: #{edsr_forward.1} parent=40 // pred_check_branch
          %3697 = sbr.rel (%p3695) target = $region63
        $region62: #{edsr_forward.1} parent=40 // pred_region
          %vm3698 = vcmask 64512
          %3699 = vst.msk [vmem:[%s197] sm:$0xff] %vm3698, %v2957
          %3700 = vst.msk [vmem:[%s197 + $0x8] sm:$0xff] %vm3698, %v2958
          %3701 = vst.msk [vmem:[%s197 + $0x10] sm:$0xff] %vm3698, %v2959
          %3702 = vst.msk [vmem:[%s197 + $0x18] sm:$0xff] %vm3698, %v2960
          %3703 = vst.msk [vmem:[%s197 + $0x20] sm:$0xff] %vm3698, %v2961
          %3704 = vst.msk [vmem:[%s197 + $0x28] sm:$0xff] %vm3698, %v2962
          %3705 = vst.msk [vmem:[%s197 + $0x30] sm:$0xff] %vm3698, %v2963
          %3706 = vst.msk [vmem:[%s197 + $0x38] sm:$0xff] %vm3698, %v2964
          %3707 = vst.msk [vmem:[%s197 + $0x40] sm:$0xff] %vm3698, %v2965
          %3708 = vst.msk [vmem:[%s197 + $0x48] sm:$0xff] %vm3698, %v2966
          %3709 = vst.msk [vmem:[%s197 + $0x50] sm:$0xff] %vm3698, %v2967
          %3710 = vst.msk [vmem:[%s197 + $0x58] sm:$0xff] %vm3698, %v2968
          %3711 = vst.msk [vmem:[%s197 + $0x60] sm:$0xff] %vm3698, %v2969
          %3712 = vst.msk [vmem:[%s197 + $0x68] sm:$0xff] %vm3698, %v2970
          %3713 = vst.msk [vmem:[%s197 + $0x70] sm:$0xff] %vm3698, %v2971
          %3714 = vst.msk [vmem:[%s197 + $0x78] sm:$0xff] %vm3698, %v2972
          %3715 = vst.msk [vmem:[%s197 + $0x80] sm:$0xff] %vm3698, %v2973
          %3716 = vst.msk [vmem:[%s197 + $0x88] sm:$0xff] %vm3698, %v2974
          %3717 = vst.msk [vmem:[%s197 + $0x90] sm:$0xff] %vm3698, %v2975
          %3718 = vst.msk [vmem:[%s197 + $0x98] sm:$0xff] %vm3698, %v2976
          %3719 = vst.msk [vmem:[%s197 + $0xa0] sm:$0xff] %vm3698, %v2977
          %3720 = vst.msk [vmem:[%s197 + $0xa8] sm:$0xff] %vm3698, %v2978
          %3721 = vst.msk [vmem:[%s197 + $0xb0] sm:$0xff] %vm3698, %v2979
          %3722 = vst.msk [vmem:[%s197 + $0xb8] sm:$0xff] %vm3698, %v2980
          %3723 = vst.msk [vmem:[%s197 + $0xc0] sm:$0xff] %vm3698, %v2981
          %3724 = vst.msk [vmem:[%s197 + $0xc8] sm:$0xff] %vm3698, %v2982
          %3725 = vst.msk [vmem:[%s197 + $0xd0] sm:$0xff] %vm3698, %v2983
          %3726 = vst.msk [vmem:[%s197 + $0xd8] sm:$0xff] %vm3698, %v2984
          %3727 = vst.msk [vmem:[%s197 + $0xe0] sm:$0xff] %vm3698, %v2985
          %3728 = vst.msk [vmem:[%s197 + $0xe8] sm:$0xff] %vm3698, %v2986
          %3729 = vst.msk [vmem:[%s197 + $0xf0] sm:$0xff] %vm3698, %v2987
          %3730 = vst.msk [vmem:[%s197 + $0xf8] sm:$0xff] %vm3698, %v2988
          %3731 = vst.msk [vmem:[%s197 + $0x100] sm:$0xff] %vm3698, %v2989
          %3732 = vst.msk [vmem:[%s197 + $0x108] sm:$0xff] %vm3698, %v2990
          %3733 = vst.msk [vmem:[%s197 + $0x110] sm:$0xff] %vm3698, %v2991
          %3734 = vst.msk [vmem:[%s197 + $0x118] sm:$0xff] %vm3698, %v2992
          %3735 = vst.msk [vmem:[%s197 + $0x120] sm:$0xff] %vm3698, %v2993
          %3736 = vst.msk [vmem:[%s197 + $0x128] sm:$0xff] %vm3698, %v2994
          %3737 = vst.msk [vmem:[%s197 + $0x130] sm:$0xff] %vm3698, %v2995
          %3738 = vst.msk [vmem:[%s197 + $0x138] sm:$0xff] %vm3698, %v2996
          %3739 = vst.msk [vmem:[%s197 + $0x140] sm:$0xff] %vm3698, %v2997
          %3740 = vst.msk [vmem:[%s197 + $0x148] sm:$0xff] %vm3698, %v2998
          %3741 = vst.msk [vmem:[%s197 + $0x150] sm:$0xff] %vm3698, %v2999
          %3742 = vst.msk [vmem:[%s197 + $0x158] sm:$0xff] %vm3698, %v3000
          %3743 = vst.msk [vmem:[%s197 + $0x160] sm:$0xff] %vm3698, %v3001
          %3744 = vst.msk [vmem:[%s197 + $0x168] sm:$0xff] %vm3698, %v3002
          %3745 = vst.msk [vmem:[%s197 + $0x170] sm:$0xff] %vm3698, %v3003
          %3746 = vst.msk [vmem:[%s197 + $0x178] sm:$0xff] %vm3698, %v3004
          %3747 = vst.msk [vmem:[%s197 + $0x180] sm:$0xff] %vm3698, %v3005
          %3748 = vst.msk [vmem:[%s197 + $0x188] sm:$0xff] %vm3698, %v3006
          %3749 = vst.msk [vmem:[%s197 + $0x190] sm:$0xff] %vm3698, %v3007
          %3750 = vst.msk [vmem:[%s197 + $0x198] sm:$0xff] %vm3698, %v3008
          %3751 = vst.msk [vmem:[%s197 + $0x1a0] sm:$0xff] %vm3698, %v3009
          %3752 = vst.msk [vmem:[%s197 + $0x1a8] sm:$0xff] %vm3698, %v3010
        $region63: #{edsr_forward.1} parent=40 // pred_fallthru
          _
      $region41: #{edsr_forward.1} parent=35 // loop_footer
        %s313 = sadd.s32 1, %s309
      $region42: #{edsr_forward.1} parent=35 // loop_footer_branch
        %308 = sbr.rel target = $region38
      $region43: #{edsr_forward.1} parent=35 // loop_exit
        _
      %p3753 = scmp.lt.s32.totalorder %s15, 1
      %s3754 = scalar_select %p3753, %s15, 1
      %s3755 = smul.addr %s3754, 54
      %s3756 = smul.addr %s3755, 8
      %s3757 = scalar_lea.vmem %s4, %s3756
      // Predicated region
      $region64: #{edsr_forward.1} parent=35 // pred_check
        %p3758 = pneg %p122
      $region65: #{edsr_forward.1} parent=35 // pred_check_branch
        %3760 = sbr.rel (%p3758) target = $region67
      $region66: #{edsr_forward.1} parent=35 // pred_region
        _
      $region67: #{edsr_forward.1} parent=35 // pred_fallthru
        _
    $region36: #{edsr_forward.1} parent=5 // pred_fallthru
      _
    %p3761 = scmp.le.s32.totalorder 2, %s10
    // Predicated region
    $region68: #{edsr_forward.1} parent=5 // pred_check
      %p3762 = pneg %p3761
    $region69: #{edsr_forward.1} parent=5 // pred_check_branch
      %3764 = sbr.rel (%p3762) target = $region71
    $region70: #{edsr_forward.1} parent=5 // pred_region
      %s3765 = ssub.s32 %s10, 2
      // Predicated region
      $region72: #{edsr_forward.1} parent=70 // pred_check
        %p3766 = pneg %p128
      $region73: #{edsr_forward.1} parent=70 // pred_check_branch
        %3768 = sbr.rel (%p3766) target = $region75
      $region74: #{edsr_forward.1} parent=70 // pred_region
        %p3769 = scmp.lt.s32.totalorder %s16, 1
        %s3770 = scalar_select %p3769, %s16, 1
        %s3771 = smul.addr %s3770, 54
        %s3772 = smul.addr %s3771, 8
        %s3773 = scalar_lea.vmem %s4, %s3772
      $region75: #{edsr_forward.1} parent=70 // pred_fallthru
        _
    $region71: #{edsr_forward.1} parent=5 // pred_fallthru
      _
  $region6: #{edsr_forward.1} parent=0 // loop_footer
    %s14 = sadd.s32 1, %s10
  $region7: #{edsr_forward.1} parent=0 // loop_footer_branch
    %9 = sbr.rel target = $region3
  $region8: #{edsr_forward.1} parent=0 // loop_exit
    _

</llo_original>
